<compile_context>
chip_gen: v7x
topology: tpu7x:2x2x1
jax: 0.10.0
libtpu: 0.0.40
codegen_flags: <defaults>
</compile_context>

<pallas_src>
import functools

import jax
import jax.numpy as jnp
from jax import lax
from jax.experimental import pallas as pl
from jax.experimental.pallas import tpu as pltpu


def _vmem_limit_bytes():
    """~3/4 of physical VMEM, capped at 100MB (v5e/v6e: 96MB, v7x: 48MB)."""
    cap = 64 * 1024 * 1024
    try:
        cap = int(getattr(pltpu.get_tpu_info(), "vmem_capacity_bytes", cap))
    except Exception:
        pass
    return max(32 * 1024 * 1024, min((cap * 3) // 4, 100 * 1024 * 1024))


_VMEM_LIMIT = _vmem_limit_bytes()


# ------------------------------- helpers ----------------------------------- #

def _pick_tile(dim, target, align):
    """Largest tile <= target that divides `dim` and is `align`-aligned, else full dim."""
    if dim <= target:
        return dim
    t = (target // align) * align
    while t >= align:
        if dim % t == 0:
            return t
        t -= align
    return dim


def _num_head_groups(n_head, d_model):
    """Head-group count for the attention grid: largest divisor of n_head whose
    per-group width is a multiple of 128 lanes (prefer >=256 for DMA row size)."""
    def largest(min_dg):
        for g in range(n_head, 0, -1):
            if n_head % g == 0 and d_model % g == 0:
                dg = d_model // g
                if dg % 128 == 0 and dg >= min_dg:
                    return g
        return 1
    g256 = largest(256)
    return g256 if g256 > 1 else largest(128)


def _gelu(x):
    # exact (erf) GELU, matching torch.nn.GELU() default
    return 0.5 * x * (1.0 + lax.erf(x * (2.0 ** -0.5)))


def _layernorm_f32(x, g, b, eps):
    # single-pass statistics: var = E[x^2] - E[x]^2 (one XLU pass less)
    mu = jnp.mean(x, axis=-1, keepdims=True)
    ms = jnp.mean(x * x, axis=-1, keepdims=True)
    var = ms - mu * mu
    return (x - mu) * lax.rsqrt(var + eps) * g + b


# ----------------------------- Pallas kernels ------------------------------ #

def _ln_matmul_kernel(x_ref, g_ref, b_ref, w_ref, bias_ref, o_ref, xn_ref, *,
                      eps, activation):
    """o = act(LN(x) @ w + bias).  LN hoisted: computed once per row tile into
    the bf16 `xn_ref` scratch (j == 0) and reused for every column tile."""
    @pl.when(pl.program_id(1) == 0)
    def _():
        xn = _layernorm_f32(x_ref[...].astype(jnp.float32),
                            g_ref[...], b_ref[...], eps)
        xn_ref[...] = xn.astype(xn_ref.dtype)

    acc = jnp.dot(xn_ref[...], w_ref[...], preferred_element_type=jnp.float32)
    acc = acc + bias_ref[...]
    if activation == "gelu":
        acc = _gelu(acc)
    o_ref[...] = acc.astype(o_ref.dtype)


def _ln_matmul_tied_kernel(x_ref, g_ref, b_ref, emb_ref, o_ref, xn_ref, *, eps):
    """logits tile = LN(x) @ emb.T without materializing the transpose.
    LN hoisted exactly as above (vocab axis revisits the same row tile ~V/tv times)."""
    @pl.when(pl.program_id(1) == 0)
    def _():
        xn = _layernorm_f32(x_ref[...].astype(jnp.float32),
                            g_ref[...], b_ref[...], eps)
        xn_ref[...] = xn.astype(xn_ref.dtype)

    acc = lax.dot_general(
        xn_ref[...], emb_ref[...],
        dimension_numbers=(((1,), (1,)), ((), ())),
        preferred_element_type=jnp.float32)
    o_ref[...] = acc.astype(o_ref.dtype)


def _matmul_kernel(x_ref, w_ref, bias_ref, *rest, activation, has_residual):
    """Whole-K matmul (K always <= 4*dim here): o = act(x @ w + bias) [+ residual].
    No K grid axis, no accumulator scratch round-trip."""
    if has_residual:
        res_ref, o_ref = rest
    else:
        (o_ref,) = rest
    acc = jnp.dot(x_ref[...], w_ref[...], preferred_element_type=jnp.float32)
    acc = acc + bias_ref[...]
    if activation == "gelu":
        acc = _gelu(acc)
    if has_residual:
        acc = acc + res_ref[...].astype(jnp.float32)
    o_ref[...] = acc.astype(o_ref.dtype)


def _self_attn_kernel(qkv_ref, o_ref, *, heads_per_blk, head_dim):
    """Causal multi-head self-attention for one (batch, head-group) grid step.
    qkv:(T, 3, Dg) bf16 (scale pre-folded into Q), o:(T, Dg).
    Each head's output is stored straight into its output slice (no concat)."""
    T = qkv_ref.shape[0]
    Dh = head_dim

    row = lax.broadcasted_iota(jnp.int32, (T, T), 0)
    col = lax.broadcasted_iota(jnp.int32, (T, T), 1)
    neg = jnp.where(col <= row, jnp.float32(0.0), jnp.float32(-1e30))

    for h in range(heads_per_blk):
        q = qkv_ref[:, 0, h * Dh:(h + 1) * Dh]
        k = qkv_ref[:, 1, h * Dh:(h + 1) * Dh]
        v = qkv_ref[:, 2, h * Dh:(h + 1) * Dh]
        s = lax.dot_general(q, k, (((1,), (1,)), ((), ())),
                            preferred_element_type=jnp.float32) + neg
        m = jnp.max(s, axis=-1, keepdims=True)
        p = jnp.exp(s - m)
        l = jnp.sum(p, axis=-1, keepdims=True)
        o = jnp.dot(p.astype(v.dtype), v, preferred_element_type=jnp.float32)
        o_ref[:, h * Dh:(h + 1) * Dh] = (
            o * pl.reciprocal(l, approx=True)).astype(o_ref.dtype)


def _cross_attn_kernel(q_ref, kv_ref, o_ref, *, heads_per_blk, head_dim):
    """Multi-head cross-attention for one (batch, head-group) grid step (no mask).
    q:(T, Dg) bf16 (scale pre-folded), kv:(S, 2, Dg) bf16, o:(T, Dg)."""
    Dh = head_dim
    for h in range(heads_per_blk):
        q = q_ref[:, h * Dh:(h + 1) * Dh]
        k = kv_ref[:, 0, h * Dh:(h + 1) * Dh]
        v = kv_ref[:, 1, h * Dh:(h + 1) * Dh]
        s = lax.dot_general(q, k, (((1,), (1,)), ((), ())),
                            preferred_element_type=jnp.float32)
        m = jnp.max(s, axis=-1, keepdims=True)
        p = jnp.exp(s - m)
        l = jnp.sum(p, axis=-1, keepdims=True)
        o = jnp.dot(p.astype(v.dtype), v, preferred_element_type=jnp.float32)
        o_ref[:, h * Dh:(h + 1) * Dh] = (
            o * pl.reciprocal(l, approx=True)).astype(o_ref.dtype)


# ----------------------------- kernel wrappers ------------------------------ #

def ln_matmul(x, gamma, beta, w, bias, *, activation=None, out_dtype=jnp.bfloat16,
              eps=1e-5, tm=256, tn=256):
    """act(LayerNorm(x) @ w + bias), K kept whole (LN needs full rows)."""
    M, K = x.shape
    N = w.shape[1]
    tm = _pick_tile(M, tm, 16)    # 16-row alignment: bf16 scratch packs (16,128)
    tn = _pick_tile(N, tn, 128)
    return pl.pallas_call(
        functools.partial(_ln_matmul_kernel, eps=eps, activation=activation),
        out_shape=jax.ShapeDtypeStruct((M, N), out_dtype),
        grid=(M // tm, N // tn),
        in_specs=[
            pl.BlockSpec((tm, K), lambda i, j: (i, 0)),
            pl.BlockSpec((1, K), lambda i, j: (0, 0)),
            pl.BlockSpec((1, K), lambda i, j: (0, 0)),
            pl.BlockSpec((K, tn), lambda i, j: (0, j)),
            pl.BlockSpec((1, tn), lambda i, j: (0, j)),
        ],
        out_specs=pl.BlockSpec((tm, tn), lambda i, j: (i, j)),
        scratch_shapes=[pltpu.VMEM((tm, K), jnp.bfloat16)],
        compiler_params=pltpu.CompilerParams(
            # j must be sequential per core so the LN scratch hoist is valid
            dimension_semantics=("parallel", "arbitrary"),
            vmem_limit_bytes=_VMEM_LIMIT),
    )(x, gamma, beta, w, bias)


def ln_matmul_tied(x, gamma, beta, emb, *, eps=1e-5, tm=256, tv=1024):
    """LayerNorm(x) @ emb.T (tied vocab projection; emb stays (V_pad, D))."""
    M, K = x.shape
    V = emb.shape[0]
    tm = _pick_tile(M, tm, 16)
    tv = _pick_tile(V, tv, 128)   # V is pre-padded to a multiple of 128
    return pl.pallas_call(
        functools.partial(_ln_matmul_tied_kernel, eps=eps),
        out_shape=jax.ShapeDtypeStruct((M, V), jnp.float32),
        grid=(M // tm, V // tv),
        in_specs=[
            pl.BlockSpec((tm, K), lambda i, j: (i, 0)),
            pl.BlockSpec((1, K), lambda i, j: (0, 0)),
            pl.BlockSpec((1, K), lambda i, j: (0, 0)),
            pl.BlockSpec((tv, K), lambda i, j: (j, 0)),
        ],
        out_specs=pl.BlockSpec((tm, tv), lambda i, j: (i, j)),
        scratch_shapes=[pltpu.VMEM((tm, K), jnp.bfloat16)],
        compiler_params=pltpu.CompilerParams(
            dimension_semantics=("parallel", "arbitrary"),
            vmem_limit_bytes=_VMEM_LIMIT),
    )(x, gamma, beta, emb)


def matmul(x, w, bias, *, residual=None, activation=None, out_dtype=jnp.bfloat16,
           tm=256, tn=256):
    """Whole-K matmul; optional fused residual / activation (no K grid axis)."""
    M, K = x.shape
    N = w.shape[1]
    tm = _pick_tile(M, tm, 16)
    tn = _pick_tile(N, tn, 128)
    in_specs = [
        pl.BlockSpec((tm, K), lambda i, j: (i, 0)),
        pl.BlockSpec((K, tn), lambda i, j: (0, j)),
        pl.BlockSpec((1, tn), lambda i, j: (0, j)),
    ]
    args = [x, w, bias]
    if residual is not None:
        in_specs.append(pl.BlockSpec((tm, tn), lambda i, j: (i, j)))
        args.append(residual)
    return pl.pallas_call(
        functools.partial(_matmul_kernel, activation=activation,
                          has_residual=residual is not None),
        out_shape=jax.ShapeDtypeStruct((M, N), out_dtype),
        grid=(M // tm, N // tn),
        in_specs=in_specs,
        out_specs=pl.BlockSpec((tm, tn), lambda i, j: (i, j)),
        compiler_params=pltpu.CompilerParams(
            dimension_semantics=("parallel", "parallel"),
            vmem_limit_bytes=_VMEM_LIMIT),
    )(*args)


def self_attention(qkv, n_head):
    """qkv:(B, T, 3, D) bf16 -> (B, T, D) bf16; grid over (batch, head groups)."""
    B, T, _, D = qkv.shape
    Dh = D // n_head
    G = _num_head_groups(n_head, D)
    Dg = D // G
    return pl.pallas_call(
        functools.partial(_self_attn_kernel, heads_per_blk=n_head // G,
                          head_dim=Dh),
        out_shape=jax.ShapeDtypeStruct((B, T, D), qkv.dtype),
        grid=(B, G),
        in_specs=[pl.BlockSpec((None, T, 3, Dg), lambda b, g: (b, 0, 0, g))],
        out_specs=pl.BlockSpec((None, T, Dg), lambda b, g: (b, 0, g)),
        compiler_params=pltpu.CompilerParams(
            dimension_semantics=("parallel", "parallel"),
            vmem_limit_bytes=_VMEM_LIMIT),
    )(qkv)


def cross_attention(q, kv, n_head):
    """q:(B, T, D) bf16, kv:(B, S, 2, D) bf16 -> (B, T, D) bf16."""
    B, T, D = q.shape
    S = kv.shape[1]
    Dh = D // n_head
    G = _num_head_groups(n_head, D)
    Dg = D // G
    # TODO(synk): flash-style S tiling (online softmax) for long encoder contexts.
    return pl.pallas_call(
        functools.partial(_cross_attn_kernel, heads_per_blk=n_head // G,
                          head_dim=Dh),
        out_shape=jax.ShapeDtypeStruct((B, T, D), q.dtype),
        grid=(B, G),
        in_specs=[
            pl.BlockSpec((None, T, Dg), lambda b, g: (b, 0, g)),
            pl.BlockSpec((None, S, 2, Dg), lambda b, g: (b, 0, 0, g)),
        ],
        out_specs=pl.BlockSpec((None, T, Dg), lambda b, g: (b, 0, g)),
        compiler_params=pltpu.CompilerParams(
            dimension_semantics=("parallel", "parallel"),
            vmem_limit_bytes=_VMEM_LIMIT),
    )(q, kv)


# --------------------------- model forward (glue) --------------------------- #

def decoder_forward(params, input_ids, encoder_outputs, *, n_head, vocab_size):
    B, T = input_ids.shape
    emb = params["token_embedding"]                # (V_pad, D) bf16, padded to 128
    D = emb.shape[1]
    S = encoder_outputs.shape[1]

    # fp32 residual stream (single bf16 embedding copy; upcast the gathered rows)
    x = emb[input_ids].astype(jnp.float32) + params["positional_embedding"][:T][None]
    x = x.reshape(B * T, D)
    enc = encoder_outputs.astype(jnp.bfloat16).reshape(B * S, D)

    for blk in params["blocks"]:
        # ---- self-attention: fused LN+QKV -> attention -> fused out-proj+residual
        qkv = ln_matmul(x, blk["attn_ln_g"], blk["attn_ln_b"],
                        blk["attn_wqkv"], blk["attn_bqkv"], out_dtype=jnp.bfloat16)
        a = self_attention(qkv.reshape(B, T, 3, D), n_head)
        x = matmul(a.reshape(B * T, D), blk["attn_wo"], blk["attn_bo"],
                   residual=x, out_dtype=jnp.float32)

        # ---- cross-attention (K/V recomputed from encoder outputs each layer)
        # TODO(synk): cache the per-layer encoder K/V (use_encoder_cache path).
        q = ln_matmul(x, blk["xattn_ln_g"], blk["xattn_ln_b"],
                      blk["xattn_wq"], blk["xattn_bq"], out_dtype=jnp.bfloat16)
        kv = matmul(enc, blk["xattn_wkv"], blk["xattn_bkv"], out_dtype=jnp.bfloat16)
        c = cross_attention(q.reshape(B, T, D), kv.reshape(B, S, 2, D), n_head)
        x = matmul(c.reshape(B * T, D), blk["xattn_wo"], blk["xattn_bo"],
                   residual=x, out_dtype=jnp.float32)

        # ---- MLP: fused LN+W1+GELU -> fused W2+residual
        h = ln_matmul(x, blk["mlp_ln_g"], blk["mlp_ln_b"],
                      blk["mlp_w1"], blk["mlp_b1"], activation="gelu",
                      out_dtype=jnp.bfloat16)
        x = matmul(h, blk["mlp_w2"], blk["mlp_b2"], residual=x, out_dtype=jnp.float32)

    logits = ln_matmul_tied(x, params["ln_g"], params["ln_b"], emb)  # (B*T, V_pad)
    return logits[:, :vocab_size].reshape(B, T, vocab_size)


# ------------------------------ parameter prep ------------------------------ #

def init_params(key, vocab, n_ctx, dim, n_head, n_layer):
    """Raw (torch-like) fp32 parameters."""
    keys = iter(jax.random.split(key, 16 + 16 * n_layer))

    def nrm(shape, scale=0.02):
        return scale * jax.random.normal(next(keys), shape, jnp.float32)

    def attn_params():
        return {
            "wq": nrm((dim, dim)), "bq": jnp.zeros((dim,), jnp.float32),
            "wk": nrm((dim, dim)),                                   # K has no bias
            "wv": nrm((dim, dim)), "bv": jnp.zeros((dim,), jnp.float32),
            "wo": nrm((dim, dim)), "bo": jnp.zeros((dim,), jnp.float32),
        }

    blocks = []
    for _ in range(n_layer):
        blocks.append({
            "attn_ln_g": jnp.ones((dim,), jnp.float32), "attn_ln_b": jnp.zeros((dim,), jnp.float32),
            "attn": attn_params(),
            "xattn_ln_g": jnp.ones((dim,), jnp.float32), "xattn_ln_b": jnp.zeros((dim,), jnp.float32),
            "xattn": attn_params(),
            "mlp_ln_g": jnp.ones((dim,), jnp.float32), "mlp_ln_b": jnp.zeros((dim,), jnp.float32),
            "mlp_w1": nrm((dim, 4 * dim)), "mlp_b1": jnp.zeros((4 * dim,), jnp.float32),
            "mlp_w2": nrm((4 * dim, dim)), "mlp_b2": jnp.zeros((dim,), jnp.float32),
        })

    return {
        "token_embedding": nrm((vocab, dim)),
        "positional_embedding": nrm((n_ctx, dim)),
        "blocks": blocks,
        "ln_g": jnp.ones((dim,), jnp.float32),
        "ln_b": jnp.zeros((dim,), jnp.float32),
    }


def prepare_params(p, n_head):
    """Kernel-ready layout: bf16 weights (QKV / KV fused), attention scale folded
    into the Q columns, fp32 biases/LN params as (1, N) rows, and a single bf16
    token embedding padded to a 128-multiple of rows."""
    def w16(a):
        return a.astype(jnp.bfloat16)

    def row(a):
        return jnp.reshape(a, (1, -1)).astype(jnp.float32)

    blocks = []
    for blk in p["blocks"]:
        a, xa = blk["attn"], blk["xattn"]
        D = a["wq"].shape[0]
        scale = jnp.float32((D // n_head) ** -0.5)   # fold 1/sqrt(Dh) into Q
        zeros = jnp.zeros((D,), jnp.float32)
        blocks.append({
            "attn_ln_g": row(blk["attn_ln_g"]), "attn_ln_b": row(blk["attn_ln_b"]),
            "attn_wqkv": w16(jnp.concatenate([a["wq"] * scale, a["wk"], a["wv"]], axis=1)),
            "attn_bqkv": row(jnp.concatenate([a["bq"] * scale, zeros, a["bv"]])),
            "attn_wo": w16(a["wo"]), "attn_bo": row(a["bo"]),
            "xattn_ln_g": row(blk["xattn_ln_g"]), "xattn_ln_b": row(blk["xattn_ln_b"]),
            "xattn_wq": w16(xa["wq"] * scale), "xattn_bq": row(xa["bq"] * scale),
            "xattn_wkv": w16(jnp.concatenate([xa["wk"], xa["wv"]], axis=1)),
            "xattn_bkv": row(jnp.concatenate([zeros, xa["bv"]])),
            "xattn_wo": w16(xa["wo"]), "xattn_bo": row(xa["bo"]),
            "mlp_ln_g": row(blk["mlp_ln_g"]), "mlp_ln_b": row(blk["mlp_ln_b"]),
            "mlp_w1": w16(blk["mlp_w1"]), "mlp_b1": row(blk["mlp_b1"]),
            "mlp_w2": w16(blk["mlp_w2"]), "mlp_b2": row(blk["mlp_b2"]),
        })

    emb = w16(p["token_embedding"])
    V = emb.shape[0]
    V_pad = ((V + 127) // 128) * 128
    if V_pad != V:
        emb = jnp.pad(emb, ((0, V_pad - V), (0, 0)))

    return {
        "token_embedding": emb,                      # (V_pad, D) bf16, single copy
        "positional_embedding": p["positional_embedding"].astype(jnp.float32),
        "blocks": blocks,
        "ln_g": row(p["ln_g"]), "ln_b": row(p["ln_b"]),
    }


# ------------------------------------ main ----------------------------------- #

if __name__ == "__main__":
    # DecoderArgs (synthetic, small): vocab_size=256, max_seq_len=16, layers=2, heads=4
    B, T_DEC, T_ENC, DIM, VOCAB, HEADS, LAYERS, MAX_SEQ = 2, 8, 8, 32, 256, 4, 2, 16

    root = jax.random.PRNGKey(0)
    k_param, k_ids, k_enc = jax.random.split(root, 3)

    raw_params = init_params(k_param, VOCAB, MAX_SEQ, DIM, HEADS, LAYERS)
    params = prepare_params(raw_params, HEADS)
    input_ids = jax.random.randint(k_ids, (B, T_DEC), 0, VOCAB)
    encoder_outputs = jax.random.normal(k_enc, (B, T_ENC, DIM), jnp.float32)

    fwd = jax.jit(functools.partial(decoder_forward, n_head=HEADS, vocab_size=VOCAB))
    logits = fwd(params, input_ids, encoder_outputs)
    jax.block_until_ready(logits)

    assert logits.shape == (B, T_DEC, VOCAB), logits.shape
    assert logits.dtype == jnp.float32
    assert bool(jnp.all(jnp.isfinite(logits)))
    print("KERNEL_OK")
</pallas_src>

<mosaic_0001>
module attributes {stable_mosaic.version = 11 : i64} {
  func.func @_ln_matmul_kernel(%arg0: i32, %arg1: i32, %arg2: memref<16x32xf32, #tpu.memory_space<vmem>>, %arg3: memref<1x32xf32, #tpu.memory_space<vmem>>, %arg4: memref<1x32xf32, #tpu.memory_space<vmem>>, %arg5: memref<32x96xbf16, #tpu.memory_space<vmem>>, %arg6: memref<1x96xf32, #tpu.memory_space<vmem>>, %arg7: memref<16x96xbf16, #tpu.memory_space<vmem>>, %arg8: memref<16x32xbf16, #tpu.memory_space<vmem>>) attributes {dimension_semantics = [#tpu.dimension_semantics<parallel>, #tpu.dimension_semantics<arbitrary>], iteration_bounds = array<i64: 1, 1>, scalar_prefetch = 0 : i64, scratch_operands = 1 : i64, tpu.core_type = #tpu.core_type<tc>, window_params = [{transform_indices = @transform_0, window_bounds = array<i64: 16, 32>}, {pipeline_mode = #tpu.pipeline_mode<synchronous>, transform_indices = @transform_1, window_bounds = array<i64: 1, 32>}, {pipeline_mode = #tpu.pipeline_mode<synchronous>, transform_indices = @transform_2, window_bounds = array<i64: 1, 32>}, {transform_indices = @transform_3, window_bounds = array<i64: 32, 96>}, {transform_indices = @transform_4, window_bounds = array<i64: 1, 96>}, {transform_indices = @transform_5, window_bounds = array<i64: 16, 96>}]} {
    %c0_i32 = arith.constant 0 : i32
    %0 = arith.cmpi eq, %arg1, %c0_i32 : i32
    %1 = arith.extui %0 : i1 to i32
    %c0_i32_0 = arith.constant 0 : i32
    %2 = arith.cmpi ne, %1, %c0_i32_0 : i32
    scf.if %2 {
      %c0_8 = arith.constant 0 : index
      %c0_9 = arith.constant 0 : index
      %11 = vector.load %arg2[%c0_8, %c0_9] : memref<16x32xf32, #tpu.memory_space<vmem>>, vector<16x32xf32>
      %c0_10 = arith.constant 0 : index
      %c0_11 = arith.constant 0 : index
      %12 = vector.load %arg3[%c0_10, %c0_11] : memref<1x32xf32, #tpu.memory_space<vmem>>, vector<1x32xf32>
      %c0_12 = arith.constant 0 : index
      %c0_13 = arith.constant 0 : index
      %13 = vector.load %arg4[%c0_12, %c0_13] : memref<1x32xf32, #tpu.memory_space<vmem>>, vector<1x32xf32>
      %cst_14 = arith.constant dense<0.000000e+00> : vector<16xf32>
      %14 = vector.multi_reduction <add>, %11, %cst_14 [1] : vector<16x32xf32> to vector<16xf32>
      %15 = vector.shape_cast %14 : vector<16xf32> to vector<16x1xf32>
      %cst_15 = arith.constant 3.200000e+01 : f32
      %16 = vector.broadcast %cst_15 : f32 to vector<16x1xf32>
      %17 = arith.divf %15, %16 : vector<16x1xf32>
      %18 = arith.mulf %11, %11 : vector<16x32xf32>
      %cst_16 = arith.constant dense<0.000000e+00> : vector<16xf32>
      %19 = vector.multi_reduction <add>, %18, %cst_16 [1] : vector<16x32xf32> to vector<16xf32>
      %20 = vector.shape_cast %19 : vector<16xf32> to vector<16x1xf32>
      %cst_17 = arith.constant 3.200000e+01 : f32
      %21 = vector.broadcast %cst_17 : f32 to vector<16x1xf32>
      %22 = arith.divf %20, %21 : vector<16x1xf32>
      %23 = arith.mulf %17, %17 : vector<16x1xf32>
      %24 = arith.subf %22, %23 : vector<16x1xf32>
      %25 = vector.broadcast %17 : vector<16x1xf32> to vector<16x32xf32>
      %26 = arith.subf %11, %25 : vector<16x32xf32>
      %cst_18 = arith.constant 9.99999974E-6 : f32
      %27 = vector.broadcast %cst_18 : f32 to vector<16x1xf32>
      %28 = arith.addf %24, %27 : vector<16x1xf32>
      %29 = math.rsqrt %28 : vector<16x1xf32>
      %30 = vector.broadcast %29 : vector<16x1xf32> to vector<16x32xf32>
      %31 = arith.mulf %26, %30 : vector<16x32xf32>
      %32 = vector.broadcast %12 : vector<1x32xf32> to vector<16x32xf32>
      %33 = arith.mulf %31, %32 : vector<16x32xf32>
      %34 = vector.broadcast %13 : vector<1x32xf32> to vector<16x32xf32>
      %35 = arith.addf %33, %34 : vector<16x32xf32>
      %36 = arith.truncf %35 : vector<16x32xf32> to vector<16x32xbf16>
      %c0_19 = arith.constant 0 : index
      %c0_20 = arith.constant 0 : index
      %37 = vector.load %arg8[%c0_19, %c0_20] : memref<16x32xbf16, #tpu.memory_space<vmem>>, vector<16x32xbf16>
      tpu.vector_store %arg8[%c0_19, %c0_20], %36 {strides = array<i32>} : memref<16x32xbf16, #tpu.memory_space<vmem>>, vector<16x32xbf16>,
    } else {
    }
    %c0 = arith.constant 0 : index
    %c0_1 = arith.constant 0 : index
    %3 = vector.load %arg8[%c0, %c0_1] : memref<16x32xbf16, #tpu.memory_space<vmem>>, vector<16x32xbf16>
    %c0_2 = arith.constant 0 : index
    %c0_3 = arith.constant 0 : index
    %4 = vector.load %arg5[%c0_2, %c0_3] : memref<32x96xbf16, #tpu.memory_space<vmem>>, vector<32x96xbf16>
    %cst = arith.constant dense<0.000000e+00> : vector<16x96xf32>
    %5 = tpu.matmul %3, %4, %cst {dimension_numbers = #tpu.dot_dimension_numbers<[1], [0], [0], [1], [0, 0, 1, 1], [], []>} : vector<16x32xbf16>, vector<32x96xbf16>, vector<16x96xf32> -> vector<16x96xf32>
    %c0_4 = arith.constant 0 : index
    %c0_5 = arith.constant 0 : index
    %6 = vector.load %arg6[%c0_4, %c0_5] : memref<1x96xf32, #tpu.memory_space<vmem>>, vector<1x96xf32>
    %7 = vector.broadcast %6 : vector<1x96xf32> to vector<16x96xf32>
    %8 = arith.addf %5, %7 : vector<16x96xf32>
    %9 = arith.truncf %8 : vector<16x96xf32> to vector<16x96xbf16>
    %c0_6 = arith.constant 0 : index
    %c0_7 = arith.constant 0 : index
    %10 = vector.load %arg7[%c0_6, %c0_7] : memref<16x96xbf16, #tpu.memory_space<vmem>>, vector<16x96xbf16>
    tpu.vector_store %arg7[%c0_6, %c0_7], %9 {strides = array<i32>} : memref<16x96xbf16, #tpu.memory_space<vmem>>, vector<16x96xbf16>,
    return
  }
  func.func @transform_0(%arg0: i32, %arg1: i32) -> (i32, i32) {
    %c0_i32 = arith.constant 0 : i32
    %c0_i32_0 = arith.constant 0 : i32
    return %arg0, %c0_i32 : i32, i32
  }
  func.func @transform_1(%arg0: i32, %arg1: i32) -> (i32, i32) {
    %c0_i32 = arith.constant 0 : i32
    %c0_i32_0 = arith.constant 0 : i32
    %c0_i32_1 = arith.constant 0 : i32
    return %c0_i32, %c0_i32_0 : i32, i32
  }
  func.func @transform_2(%arg0: i32, %arg1: i32) -> (i32, i32) {
    %c0_i32 = arith.constant 0 : i32
    %c0_i32_0 = arith.constant 0 : i32
    %c0_i32_1 = arith.constant 0 : i32
    return %c0_i32, %c0_i32_0 : i32, i32
  }
  func.func @transform_3(%arg0: i32, %arg1: i32) -> (i32, i32) {
    %c0_i32 = arith.constant 0 : i32
    %c0_i32_0 = arith.constant 0 : i32
    return %c0_i32, %arg1 : i32, i32
  }
  func.func @transform_4(%arg0: i32, %arg1: i32) -> (i32, i32) {
    %c0_i32 = arith.constant 0 : i32
    %c0_i32_0 = arith.constant 0 : i32
    return %c0_i32, %arg1 : i32, i32
  }
  func.func @transform_5(%arg0: i32, %arg1: i32) -> (i32, i32) {
    %c0_i32 = arith.constant 0 : i32
    return %arg0, %arg1 : i32, i32
  }
}

module attributes {stable_mosaic.version = 11 : i64} {
  func.func @_self_attn_kernel(%arg0: i32, %arg1: i32, %arg2: memref<1x8x3x32xbf16, #tpu.memory_space<vmem>>, %arg3: memref<1x8x32xbf16, #tpu.memory_space<vmem>>) attributes {dimension_semantics = [#tpu.dimension_semantics<parallel>, #tpu.dimension_semantics<parallel>], iteration_bounds = array<i64: 2, 1>, scalar_prefetch = 0 : i64, scratch_operands = 0 : i64, tpu.core_type = #tpu.core_type<tc>, window_params = [{transform_indices = @transform_0, window_bounds = array<i64: 1, 8, 3, 32>}, {transform_indices = @transform_1, window_bounds = array<i64: 1, 8, 32>}]} {
    %0 = tpu.iota {dimensions = array<i32: 0>} : vector<8x8xi32>
    %1 = tpu.iota {dimensions = array<i32: 1>} : vector<8x8xi32>
    %2 = arith.cmpi sle, %1, %0 : vector<8x8xi32>
    %cst = arith.constant 0.000000e+00 : f32
    %cst_0 = arith.constant -1.000000e+30 : f32
    %3 = vector.broadcast %cst : f32 to vector<8x8xf32>
    %4 = vector.broadcast %cst_0 : f32 to vector<8x8xf32>
    %5 = arith.select %2, %3, %4 : vector<8x8xi1>, vector<8x8xf32>
    %c0 = arith.constant 0 : index
    %c0_1 = arith.constant 0 : index
    %c0_2 = arith.constant 0 : index
    %c0_3 = arith.constant 0 : index
    %6 = vector.load %arg2[%c0, %c0_1, %c0_2, %c0_3] : memref<1x8x3x32xbf16, #tpu.memory_space<vmem>>, vector<1x8x1x8xbf16>
    %7 = vector.shape_cast %6 : vector<1x8x1x8xbf16> to vector<8x8xbf16>
    %c0_4 = arith.constant 0 : index
    %c0_5 = arith.constant 0 : index
    %c1 = arith.constant 1 : index
    %c0_6 = arith.constant 0 : index
    %8 = vector.load %arg2[%c0_4, %c0_5, %c1, %c0_6] : memref<1x8x3x32xbf16, #tpu.memory_space<vmem>>, vector<1x8x1x8xbf16>
    %9 = vector.shape_cast %8 : vector<1x8x1x8xbf16> to vector<8x8xbf16>
    %c0_7 = arith.constant 0 : index
    %c0_8 = arith.constant 0 : index
    %c2 = arith.constant 2 : index
    %c0_9 = arith.constant 0 : index
    %10 = vector.load %arg2[%c0_7, %c0_8, %c2, %c0_9] : memref<1x8x3x32xbf16, #tpu.memory_space<vmem>>, vector<1x8x1x8xbf16>
    %11 = vector.shape_cast %10 : vector<1x8x1x8xbf16> to vector<8x8xbf16>
    %cst_10 = arith.constant dense<0.000000e+00> : vector<8x8xf32>
    %12 = tpu.matmul %7, %9, %cst_10 {dimension_numbers = #tpu.dot_dimension_numbers<[1], [1], [0], [0], [0, 0, 1, 0], [], []>} : vector<8x8xbf16>, vector<8x8xbf16>, vector<8x8xf32> -> vector<8x8xf32>
    %13 = arith.addf %12, %5 : vector<8x8xf32>
    %cst_11 = arith.constant dense<0xFF800000> : vector<8xf32>
    %14 = vector.multi_reduction <maximumf>, %13, %cst_11 [1] : vector<8x8xf32> to vector<8xf32>
    %15 = vector.shape_cast %14 : vector<8xf32> to vector<8x1xf32>
    %16 = vector.broadcast %15 : vector<8x1xf32> to vector<8x8xf32>
    %17 = arith.subf %13, %16 : vector<8x8xf32>
    %18 = math.exp %17 : vector<8x8xf32>
    %cst_12 = arith.constant dense<0.000000e+00> : vector<8xf32>
    %19 = vector.multi_reduction <add>, %18, %cst_12 [1] : vector<8x8xf32> to vector<8xf32>
    %20 = vector.shape_cast %19 : vector<8xf32> to vector<8x1xf32>
    %21 = arith.truncf %18 : vector<8x8xf32> to vector<8x8xbf16>
    %cst_13 = arith.constant dense<0.000000e+00> : vector<8x8xf32>
    %22 = tpu.matmul %21, %11, %cst_13 {dimension_numbers = #tpu.dot_dimension_numbers<[1], [0], [0], [1], [0, 0, 1, 1], [], []>} : vector<8x8xbf16>, vector<8x8xbf16>, vector<8x8xf32> -> vector<8x8xf32>
    %23 = tpu.reciprocal %20 {approx = true} : vector<8x1xf32> -> vector<8x1xf32>
    %24 = vector.broadcast %23 : vector<8x1xf32> to vector<8x8xf32>
    %25 = arith.mulf %22, %24 : vector<8x8xf32>
    %26 = arith.truncf %25 : vector<8x8xf32> to vector<8x8xbf16>
    %c0_14 = arith.constant 0 : index
    %c0_15 = arith.constant 0 : index
    %c0_16 = arith.constant 0 : index
    %27 = vector.load %arg3[%c0_14, %c0_15, %c0_16] : memref<1x8x32xbf16, #tpu.memory_space<vmem>>, vector<1x8x8xbf16>
    %28 = vector.shape_cast %27 : vector<1x8x8xbf16> to vector<8x8xbf16>
    %29 = vector.shape_cast %26 : vector<8x8xbf16> to vector<1x8x8xbf16>
    tpu.vector_store %arg3[%c0_14, %c0_15, %c0_16], %29 {strides = array<i32>} : memref<1x8x32xbf16, #tpu.memory_space<vmem>>, vector<1x8x8xbf16>,
    %c0_17 = arith.constant 0 : index
    %c0_18 = arith.constant 0 : index
    %c0_19 = arith.constant 0 : index
    %c8 = arith.constant 8 : index
    %30 = vector.load %arg2[%c0_17, %c0_18, %c0_19, %c8] : memref<1x8x3x32xbf16, #tpu.memory_space<vmem>>, vector<1x8x1x8xbf16>
    %31 = vector.shape_cast %30 : vector<1x8x1x8xbf16> to vector<8x8xbf16>
    %c0_20 = arith.constant 0 : index
    %c0_21 = arith.constant 0 : index
    %c1_22 = arith.constant 1 : index
    %c8_23 = arith.constant 8 : index
    %32 = vector.load %arg2[%c0_20, %c0_21, %c1_22, %c8_23] : memref<1x8x3x32xbf16, #tpu.memory_space<vmem>>, vector<1x8x1x8xbf16>
    %33 = vector.shape_cast %32 : vector<1x8x1x8xbf16> to vector<8x8xbf16>
    %c0_24 = arith.constant 0 : index
    %c0_25 = arith.constant 0 : index
    %c2_26 = arith.constant 2 : index
    %c8_27 = arith.constant 8 : index
    %34 = vector.load %arg2[%c0_24, %c0_25, %c2_26, %c8_27] : memref<1x8x3x32xbf16, #tpu.memory_space<vmem>>, vector<1x8x1x8xbf16>
    %35 = vector.shape_cast %34 : vector<1x8x1x8xbf16> to vector<8x8xbf16>
    %cst_28 = arith.constant dense<0.000000e+00> : vector<8x8xf32>
    %36 = tpu.matmul %31, %33, %cst_28 {dimension_numbers = #tpu.dot_dimension_numbers<[1], [1], [0], [0], [0, 0, 1, 0], [], []>} : vector<8x8xbf16>, vector<8x8xbf16>, vector<8x8xf32> -> vector<8x8xf32>
    %37 = arith.addf %36, %5 : vector<8x8xf32>
    %cst_29 = arith.constant dense<0xFF800000> : vector<8xf32>
    %38 = vector.multi_reduction <maximumf>, %37, %cst_29 [1] : vector<8x8xf32> to vector<8xf32>
    %39 = vector.shape_cast %38 : vector<8xf32> to vector<8x1xf32>
    %40 = vector.broadcast %39 : vector<8x1xf32> to vector<8x8xf32>
    %41 = arith.subf %37, %40 : vector<8x8xf32>
    %42 = math.exp %41 : vector<8x8xf32>
    %cst_30 = arith.constant dense<0.000000e+00> : vector<8xf32>
    %43 = vector.multi_reduction <add>, %42, %cst_30 [1] : vector<8x8xf32> to vector<8xf32>
    %44 = vector.shape_cast %43 : vector<8xf32> to vector<8x1xf32>
    %45 = arith.truncf %42 : vector<8x8xf32> to vector<8x8xbf16>
    %cst_31 = arith.constant dense<0.000000e+00> : vector<8x8xf32>
    %46 = tpu.matmul %45, %35, %cst_31 {dimension_numbers = #tpu.dot_dimension_numbers<[1], [0], [0], [1], [0, 0, 1, 1], [], []>} : vector<8x8xbf16>, vector<8x8xbf16>, vector<8x8xf32> -> vector<8x8xf32>
    %47 = tpu.reciprocal %44 {approx = true} : vector<8x1xf32> -> vector<8x1xf32>
    %48 = vector.broadcast %47 : vector<8x1xf32> to vector<8x8xf32>
    %49 = arith.mulf %46, %48 : vector<8x8xf32>
    %50 = arith.truncf %49 : vector<8x8xf32> to vector<8x8xbf16>
    %c0_32 = arith.constant 0 : index
    %c0_33 = arith.constant 0 : index
    %c8_34 = arith.constant 8 : index
    %51 = vector.load %arg3[%c0_32, %c0_33, %c8_34] : memref<1x8x32xbf16, #tpu.memory_space<vmem>>, vector<1x8x8xbf16>
    %52 = vector.shape_cast %51 : vector<1x8x8xbf16> to vector<8x8xbf16>
    %53 = vector.shape_cast %50 : vector<8x8xbf16> to vector<1x8x8xbf16>
    tpu.vector_store %arg3[%c0_32, %c0_33, %c8_34], %53 {strides = array<i32>} : memref<1x8x32xbf16, #tpu.memory_space<vmem>>, vector<1x8x8xbf16>,
    %c0_35 = arith.constant 0 : index
    %c0_36 = arith.constant 0 : index
    %c0_37 = arith.constant 0 : index
    %c16 = arith.constant 16 : index
    %54 = vector.load %arg2[%c0_35, %c0_36, %c0_37, %c16] : memref<1x8x3x32xbf16, #tpu.memory_space<vmem>>, vector<1x8x1x8xbf16>
    %55 = vector.shape_cast %54 : vector<1x8x1x8xbf16> to vector<8x8xbf16>
    %c0_38 = arith.constant 0 : index
    %c0_39 = arith.constant 0 : index
    %c1_40 = arith.constant 1 : index
    %c16_41 = arith.constant 16 : index
    %56 = vector.load %arg2[%c0_38, %c0_39, %c1_40, %c16_41] : memref<1x8x3x32xbf16, #tpu.memory_space<vmem>>, vector<1x8x1x8xbf16>
    %57 = vector.shape_cast %56 : vector<1x8x1x8xbf16> to vector<8x8xbf16>
    %c0_42 = arith.constant 0 : index
    %c0_43 = arith.constant 0 : index
    %c2_44 = arith.constant 2 : index
    %c16_45 = arith.constant 16 : index
    %58 = vector.load %arg2[%c0_42, %c0_43, %c2_44, %c16_45] : memref<1x8x3x32xbf16, #tpu.memory_space<vmem>>, vector<1x8x1x8xbf16>
    %59 = vector.shape_cast %58 : vector<1x8x1x8xbf16> to vector<8x8xbf16>
    %cst_46 = arith.constant dense<0.000000e+00> : vector<8x8xf32>
    %60 = tpu.matmul %55, %57, %cst_46 {dimension_numbers = #tpu.dot_dimension_numbers<[1], [1], [0], [0], [0, 0, 1, 0], [], []>} : vector<8x8xbf16>, vector<8x8xbf16>, vector<8x8xf32> -> vector<8x8xf32>
    %61 = arith.addf %60, %5 : vector<8x8xf32>
    %cst_47 = arith.constant dense<0xFF800000> : vector<8xf32>
    %62 = vector.multi_reduction <maximumf>, %61, %cst_47 [1] : vector<8x8xf32> to vector<8xf32>
    %63 = vector.shape_cast %62 : vector<8xf32> to vector<8x1xf32>
    %64 = vector.broadcast %63 : vector<8x1xf32> to vector<8x8xf32>
    %65 = arith.subf %61, %64 : vector<8x8xf32>
    %66 = math.exp %65 : vector<8x8xf32>
    %cst_48 = arith.constant dense<0.000000e+00> : vector<8xf32>
    %67 = vector.multi_reduction <add>, %66, %cst_48 [1] : vector<8x8xf32> to vector<8xf32>
    %68 = vector.shape_cast %67 : vector<8xf32> to vector<8x1xf32>
    %69 = arith.truncf %66 : vector<8x8xf32> to vector<8x8xbf16>
    %cst_49 = arith.constant dense<0.000000e+00> : vector<8x8xf32>
    %70 = tpu.matmul %69, %59, %cst_49 {dimension_numbers = #tpu.dot_dimension_numbers<[1], [0], [0], [1], [0, 0, 1, 1], [], []>} : vector<8x8xbf16>, vector<8x8xbf16>, vector<8x8xf32> -> vector<8x8xf32>
    %71 = tpu.reciprocal %68 {approx = true} : vector<8x1xf32> -> vector<8x1xf32>
    %72 = vector.broadcast %71 : vector<8x1xf32> to vector<8x8xf32>
    %73 = arith.mulf %70, %72 : vector<8x8xf32>
    %74 = arith.truncf %73 : vector<8x8xf32> to vector<8x8xbf16>
    %c0_50 = arith.constant 0 : index
    %c0_51 = arith.constant 0 : index
    %c16_52 = arith.constant 16 : index
    %75 = vector.load %arg3[%c0_50, %c0_51, %c16_52] : memref<1x8x32xbf16, #tpu.memory_space<vmem>>, vector<1x8x8xbf16>
    %76 = vector.shape_cast %75 : vector<1x8x8xbf16> to vector<8x8xbf16>
    %77 = vector.shape_cast %74 : vector<8x8xbf16> to vector<1x8x8xbf16>
    tpu.vector_store %arg3[%c0_50, %c0_51, %c16_52], %77 {strides = array<i32>} : memref<1x8x32xbf16, #tpu.memory_space<vmem>>, vector<1x8x8xbf16>,
    %c0_53 = arith.constant 0 : index
    %c0_54 = arith.constant 0 : index
    %c0_55 = arith.constant 0 : index
    %c24 = arith.constant 24 : index
    %78 = vector.load %arg2[%c0_53, %c0_54, %c0_55, %c24] : memref<1x8x3x32xbf16, #tpu.memory_space<vmem>>, vector<1x8x1x8xbf16>
    %79 = vector.shape_cast %78 : vector<1x8x1x8xbf16> to vector<8x8xbf16>
    %c0_56 = arith.constant 0 : index
    %c0_57 = arith.constant 0 : index
    %c1_58 = arith.constant 1 : index
    %c24_59 = arith.constant 24 : index
    %80 = vector.load %arg2[%c0_56, %c0_57, %c1_58, %c24_59] : memref<1x8x3x32xbf16, #tpu.memory_space<vmem>>, vector<1x8x1x8xbf16>
    %81 = vector.shape_cast %80 : vector<1x8x1x8xbf16> to vector<8x8xbf16>
    %c0_60 = arith.constant 0 : index
    %c0_61 = arith.constant 0 : index
    %c2_62 = arith.constant 2 : index
    %c24_63 = arith.constant 24 : index
    %82 = vector.load %arg2[%c0_60, %c0_61, %c2_62, %c24_63] : memref<1x8x3x32xbf16, #tpu.memory_space<vmem>>, vector<1x8x1x8xbf16>
    %83 = vector.shape_cast %82 : vector<1x8x1x8xbf16> to vector<8x8xbf16>
    %cst_64 = arith.constant dense<0.000000e+00> : vector<8x8xf32>
    %84 = tpu.matmul %79, %81, %cst_64 {dimension_numbers = #tpu.dot_dimension_numbers<[1], [1], [0], [0], [0, 0, 1, 0], [], []>} : vector<8x8xbf16>, vector<8x8xbf16>, vector<8x8xf32> -> vector<8x8xf32>
    %85 = arith.addf %84, %5 : vector<8x8xf32>
    %cst_65 = arith.constant dense<0xFF800000> : vector<8xf32>
    %86 = vector.multi_reduction <maximumf>, %85, %cst_65 [1] : vector<8x8xf32> to vector<8xf32>
    %87 = vector.shape_cast %86 : vector<8xf32> to vector<8x1xf32>
    %88 = vector.broadcast %87 : vector<8x1xf32> to vector<8x8xf32>
    %89 = arith.subf %85, %88 : vector<8x8xf32>
    %90 = math.exp %89 : vector<8x8xf32>
    %cst_66 = arith.constant dense<0.000000e+00> : vector<8xf32>
    %91 = vector.multi_reduction <add>, %90, %cst_66 [1] : vector<8x8xf32> to vector<8xf32>
    %92 = vector.shape_cast %91 : vector<8xf32> to vector<8x1xf32>
    %93 = arith.truncf %90 : vector<8x8xf32> to vector<8x8xbf16>
    %cst_67 = arith.constant dense<0.000000e+00> : vector<8x8xf32>
    %94 = tpu.matmul %93, %83, %cst_67 {dimension_numbers = #tpu.dot_dimension_numbers<[1], [0], [0], [1], [0, 0, 1, 1], [], []>} : vector<8x8xbf16>, vector<8x8xbf16>, vector<8x8xf32> -> vector<8x8xf32>
    %95 = tpu.reciprocal %92 {approx = true} : vector<8x1xf32> -> vector<8x1xf32>
    %96 = vector.broadcast %95 : vector<8x1xf32> to vector<8x8xf32>
    %97 = arith.mulf %94, %96 : vector<8x8xf32>
    %98 = arith.truncf %97 : vector<8x8xf32> to vector<8x8xbf16>
    %c0_68 = arith.constant 0 : index
    %c0_69 = arith.constant 0 : index
    %c24_70 = arith.constant 24 : index
    %99 = vector.load %arg3[%c0_68, %c0_69, %c24_70] : memref<1x8x32xbf16, #tpu.memory_space<vmem>>, vector<1x8x8xbf16>
    %100 = vector.shape_cast %99 : vector<1x8x8xbf16> to vector<8x8xbf16>
    %101 = vector.shape_cast %98 : vector<8x8xbf16> to vector<1x8x8xbf16>
    tpu.vector_store %arg3[%c0_68, %c0_69, %c24_70], %101 {strides = array<i32>} : memref<1x8x32xbf16, #tpu.memory_space<vmem>>, vector<1x8x8xbf16>,
    return
  }
  func.func @transform_0(%arg0: i32, %arg1: i32) -> (i32, i32, i32, i32) {
    %c0_i32 = arith.constant 0 : i32
    %c0_i32_0 = arith.constant 0 : i32
    %c0_i32_1 = arith.constant 0 : i32
    return %arg0, %c0_i32, %c0_i32_0, %arg1 : i32, i32, i32, i32
  }
  func.func @transform_1(%arg0: i32, %arg1: i32) -> (i32, i32, i32) {
    %c0_i32 = arith.constant 0 : i32
    %c0_i32_0 = arith.constant 0 : i32
    return %arg0, %c0_i32, %arg1 : i32, i32, i32
  }
}

module attributes {stable_mosaic.version = 11 : i64} {
  func.func @_matmul_kernel(%arg0: i32, %arg1: i32, %arg2: memref<16x32xbf16, #tpu.memory_space<vmem>>, %arg3: memref<32x32xbf16, #tpu.memory_space<vmem>>, %arg4: memref<1x32xf32, #tpu.memory_space<vmem>>, %arg5: memref<16x32xf32, #tpu.memory_space<vmem>>, %arg6: memref<16x32xf32, #tpu.memory_space<vmem>>) attributes {dimension_semantics = [#tpu.dimension_semantics<parallel>, #tpu.dimension_semantics<parallel>], iteration_bounds = array<i64: 1, 1>, scalar_prefetch = 0 : i64, scratch_operands = 0 : i64, tpu.core_type = #tpu.core_type<tc>, window_params = [{transform_indices = @transform_0, window_bounds = array<i64: 16, 32>}, {transform_indices = @transform_1, window_bounds = array<i64: 32, 32>}, {transform_indices = @transform_2, window_bounds = array<i64: 1, 32>}, {transform_indices = @transform_3, window_bounds = array<i64: 16, 32>}, {transform_indices = @transform_4, window_bounds = array<i64: 16, 32>}]} {
    %c0 = arith.constant 0 : index
    %c0_0 = arith.constant 0 : index
    %0 = vector.load %arg2[%c0, %c0_0] : memref<16x32xbf16, #tpu.memory_space<vmem>>, vector<16x32xbf16>
    %c0_1 = arith.constant 0 : index
    %c0_2 = arith.constant 0 : index
    %1 = vector.load %arg3[%c0_1, %c0_2] : memref<32x32xbf16, #tpu.memory_space<vmem>>, vector<32x32xbf16>
    %cst = arith.constant dense<0.000000e+00> : vector<16x32xf32>
    %2 = tpu.matmul %0, %1, %cst {dimension_numbers = #tpu.dot_dimension_numbers<[1], [0], [0], [1], [0, 0, 1, 1], [], []>} : vector<16x32xbf16>, vector<32x32xbf16>, vector<16x32xf32> -> vector<16x32xf32>
    %c0_3 = arith.constant 0 : index
    %c0_4 = arith.constant 0 : index
    %3 = vector.load %arg4[%c0_3, %c0_4] : memref<1x32xf32, #tpu.memory_space<vmem>>, vector<1x32xf32>
    %4 = vector.broadcast %3 : vector<1x32xf32> to vector<16x32xf32>
    %5 = arith.addf %2, %4 : vector<16x32xf32>
    %c0_5 = arith.constant 0 : index
    %c0_6 = arith.constant 0 : index
    %6 = vector.load %arg5[%c0_5, %c0_6] : memref<16x32xf32, #tpu.memory_space<vmem>>, vector<16x32xf32>
    %7 = arith.addf %5, %6 : vector<16x32xf32>
    %c0_7 = arith.constant 0 : index
    %c0_8 = arith.constant 0 : index
    %8 = vector.load %arg6[%c0_7, %c0_8] : memref<16x32xf32, #tpu.memory_space<vmem>>, vector<16x32xf32>
    tpu.vector_store %arg6[%c0_7, %c0_8], %7 {strides = array<i32>} : memref<16x32xf32, #tpu.memory_space<vmem>>, vector<16x32xf32>,
    return
  }
  func.func @transform_0(%arg0: i32, %arg1: i32) -> (i32, i32) {
    %c0_i32 = arith.constant 0 : i32
    %c0_i32_0 = arith.constant 0 : i32
    return %arg0, %c0_i32 : i32, i32
  }
  func.func @transform_1(%arg0: i32, %arg1: i32) -> (i32, i32) {
    %c0_i32 = arith.constant 0 : i32
    %c0_i32_0 = arith.constant 0 : i32
    return %c0_i32, %arg1 : i32, i32
  }
  func.func @transform_2(%arg0: i32, %arg1: i32) -> (i32, i32) {
    %c0_i32 = arith.constant 0 : i32
    %c0_i32_0 = arith.constant 0 : i32
    return %c0_i32, %arg1 : i32, i32
  }
  func.func @transform_3(%arg0: i32, %arg1: i32) -> (i32, i32) {
    %c0_i32 = arith.constant 0 : i32
    return %arg0, %arg1 : i32, i32
  }
  func.func @transform_4(%arg0: i32, %arg1: i32) -> (i32, i32) {
    %c0_i32 = arith.constant 0 : i32
    return %arg0, %arg1 : i32, i32
  }
}

module attributes {stable_mosaic.version = 11 : i64} {
  func.func @_ln_matmul_kernel(%arg0: i32, %arg1: i32, %arg2: memref<16x32xf32, #tpu.memory_space<vmem>>, %arg3: memref<1x32xf32, #tpu.memory_space<vmem>>, %arg4: memref<1x32xf32, #tpu.memory_space<vmem>>, %arg5: memref<32x32xbf16, #tpu.memory_space<vmem>>, %arg6: memref<1x32xf32, #tpu.memory_space<vmem>>, %arg7: memref<16x32xbf16, #tpu.memory_space<vmem>>, %arg8: memref<16x32xbf16, #tpu.memory_space<vmem>>) attributes {dimension_semantics = [#tpu.dimension_semantics<parallel>, #tpu.dimension_semantics<arbitrary>], iteration_bounds = array<i64: 1, 1>, scalar_prefetch = 0 : i64, scratch_operands = 1 : i64, tpu.core_type = #tpu.core_type<tc>, window_params = [{transform_indices = @transform_0, window_bounds = array<i64: 16, 32>}, {pipeline_mode = #tpu.pipeline_mode<synchronous>, transform_indices = @transform_1, window_bounds = array<i64: 1, 32>}, {pipeline_mode = #tpu.pipeline_mode<synchronous>, transform_indices = @transform_2, window_bounds = array<i64: 1, 32>}, {transform_indices = @transform_3, window_bounds = array<i64: 32, 32>}, {transform_indices = @transform_4, window_bounds = array<i64: 1, 32>}, {transform_indices = @transform_5, window_bounds = array<i64: 16, 32>}]} {
    %c0_i32 = arith.constant 0 : i32
    %0 = arith.cmpi eq, %arg1, %c0_i32 : i32
    %1 = arith.extui %0 : i1 to i32
    %c0_i32_0 = arith.constant 0 : i32
    %2 = arith.cmpi ne, %1, %c0_i32_0 : i32
    scf.if %2 {
      %c0_8 = arith.constant 0 : index
      %c0_9 = arith.constant 0 : index
      %11 = vector.load %arg2[%c0_8, %c0_9] : memref<16x32xf32, #tpu.memory_space<vmem>>, vector<16x32xf32>
      %c0_10 = arith.constant 0 : index
      %c0_11 = arith.constant 0 : index
      %12 = vector.load %arg3[%c0_10, %c0_11] : memref<1x32xf32, #tpu.memory_space<vmem>>, vector<1x32xf32>
      %c0_12 = arith.constant 0 : index
      %c0_13 = arith.constant 0 : index
      %13 = vector.load %arg4[%c0_12, %c0_13] : memref<1x32xf32, #tpu.memory_space<vmem>>, vector<1x32xf32>
      %cst_14 = arith.constant dense<0.000000e+00> : vector<16xf32>
      %14 = vector.multi_reduction <add>, %11, %cst_14 [1] : vector<16x32xf32> to vector<16xf32>
      %15 = vector.shape_cast %14 : vector<16xf32> to vector<16x1xf32>
      %cst_15 = arith.constant 3.200000e+01 : f32
      %16 = vector.broadcast %cst_15 : f32 to vector<16x1xf32>
      %17 = arith.divf %15, %16 : vector<16x1xf32>
      %18 = arith.mulf %11, %11 : vector<16x32xf32>
      %cst_16 = arith.constant dense<0.000000e+00> : vector<16xf32>
      %19 = vector.multi_reduction <add>, %18, %cst_16 [1] : vector<16x32xf32> to vector<16xf32>
      %20 = vector.shape_cast %19 : vector<16xf32> to vector<16x1xf32>
      %cst_17 = arith.constant 3.200000e+01 : f32
      %21 = vector.broadcast %cst_17 : f32 to vector<16x1xf32>
      %22 = arith.divf %20, %21 : vector<16x1xf32>
      %23 = arith.mulf %17, %17 : vector<16x1xf32>
      %24 = arith.subf %22, %23 : vector<16x1xf32>
      %25 = vector.broadcast %17 : vector<16x1xf32> to vector<16x32xf32>
      %26 = arith.subf %11, %25 : vector<16x32xf32>
      %cst_18 = arith.constant 9.99999974E-6 : f32
      %27 = vector.broadcast %cst_18 : f32 to vector<16x1xf32>
      %28 = arith.addf %24, %27 : vector<16x1xf32>
      %29 = math.rsqrt %28 : vector<16x1xf32>
      %30 = vector.broadcast %29 : vector<16x1xf32> to vector<16x32xf32>
      %31 = arith.mulf %26, %30 : vector<16x32xf32>
      %32 = vector.broadcast %12 : vector<1x32xf32> to vector<16x32xf32>
      %33 = arith.mulf %31, %32 : vector<16x32xf32>
      %34 = vector.broadcast %13 : vector<1x32xf32> to vector<16x32xf32>
      %35 = arith.addf %33, %34 : vector<16x32xf32>
      %36 = arith.truncf %35 : vector<16x32xf32> to vector<16x32xbf16>
      %c0_19 = arith.constant 0 : index
      %c0_20 = arith.constant 0 : index
      %37 = vector.load %arg8[%c0_19, %c0_20] : memref<16x32xbf16, #tpu.memory_space<vmem>>, vector<16x32xbf16>
      tpu.vector_store %arg8[%c0_19, %c0_20], %36 {strides = array<i32>} : memref<16x32xbf16, #tpu.memory_space<vmem>>, vector<16x32xbf16>,
    } else {
    }
    %c0 = arith.constant 0 : index
    %c0_1 = arith.constant 0 : index
    %3 = vector.load %arg8[%c0, %c0_1] : memref<16x32xbf16, #tpu.memory_space<vmem>>, vector<16x32xbf16>
    %c0_2 = arith.constant 0 : index
    %c0_3 = arith.constant 0 : index
    %4 = vector.load %arg5[%c0_2, %c0_3] : memref<32x32xbf16, #tpu.memory_space<vmem>>, vector<32x32xbf16>
    %cst = arith.constant dense<0.000000e+00> : vector<16x32xf32>
    %5 = tpu.matmul %3, %4, %cst {dimension_numbers = #tpu.dot_dimension_numbers<[1], [0], [0], [1], [0, 0, 1, 1], [], []>} : vector<16x32xbf16>, vector<32x32xbf16>, vector<16x32xf32> -> vector<16x32xf32>
    %c0_4 = arith.constant 0 : index
    %c0_5 = arith.constant 0 : index
    %6 = vector.load %arg6[%c0_4, %c0_5] : memref<1x32xf32, #tpu.memory_space<vmem>>, vector<1x32xf32>
    %7 = vector.broadcast %6 : vector<1x32xf32> to vector<16x32xf32>
    %8 = arith.addf %5, %7 : vector<16x32xf32>
    %9 = arith.truncf %8 : vector<16x32xf32> to vector<16x32xbf16>
    %c0_6 = arith.constant 0 : index
    %c0_7 = arith.constant 0 : index
    %10 = vector.load %arg7[%c0_6, %c0_7] : memref<16x32xbf16, #tpu.memory_space<vmem>>, vector<16x32xbf16>
    tpu.vector_store %arg7[%c0_6, %c0_7], %9 {strides = array<i32>} : memref<16x32xbf16, #tpu.memory_space<vmem>>, vector<16x32xbf16>,
    return
  }
  func.func @transform_0(%arg0: i32, %arg1: i32) -> (i32, i32) {
    %c0_i32 = arith.constant 0 : i32
    %c0_i32_0 = arith.constant 0 : i32
    return %arg0, %c0_i32 : i32, i32
  }
  func.func @transform_1(%arg0: i32, %arg1: i32) -> (i32, i32) {
    %c0_i32 = arith.constant 0 : i32
    %c0_i32_0 = arith.constant 0 : i32
    %c0_i32_1 = arith.constant 0 : i32
    return %c0_i32, %c0_i32_0 : i32, i32
  }
  func.func @transform_2(%arg0: i32, %arg1: i32) -> (i32, i32) {
    %c0_i32 = arith.constant 0 : i32
    %c0_i32_0 = arith.constant 0 : i32
    %c0_i32_1 = arith.constant 0 : i32
    return %c0_i32, %c0_i32_0 : i32, i32
  }
  func.func @transform_3(%arg0: i32, %arg1: i32) -> (i32, i32) {
    %c0_i32 = arith.constant 0 : i32
    %c0_i32_0 = arith.constant 0 : i32
    return %c0_i32, %arg1 : i32, i32
  }
  func.func @transform_4(%arg0: i32, %arg1: i32) -> (i32, i32) {
    %c0_i32 = arith.constant 0 : i32
    %c0_i32_0 = arith.constant 0 : i32
    return %c0_i32, %arg1 : i32, i32
  }
  func.func @transform_5(%arg0: i32, %arg1: i32) -> (i32, i32) {
    %c0_i32 = arith.constant 0 : i32
    return %arg0, %arg1 : i32, i32
  }
}

module attributes {stable_mosaic.version = 11 : i64} {
  func.func @_matmul_kernel(%arg0: i32, %arg1: i32, %arg2: memref<16x32xbf16, #tpu.memory_space<vmem>>, %arg3: memref<32x64xbf16, #tpu.memory_space<vmem>>, %arg4: memref<1x64xf32, #tpu.memory_space<vmem>>, %arg5: memref<16x64xbf16, #tpu.memory_space<vmem>>) attributes {dimension_semantics = [#tpu.dimension_semantics<parallel>, #tpu.dimension_semantics<parallel>], iteration_bounds = array<i64: 1, 1>, scalar_prefetch = 0 : i64, scratch_operands = 0 : i64, tpu.core_type = #tpu.core_type<tc>, window_params = [{transform_indices = @transform_0, window_bounds = array<i64: 16, 32>}, {transform_indices = @transform_1, window_bounds = array<i64: 32, 64>}, {transform_indices = @transform_2, window_bounds = array<i64: 1, 64>}, {transform_indices = @transform_3, window_bounds = array<i64: 16, 64>}]} {
    %c0 = arith.constant 0 : index
    %c0_0 = arith.constant 0 : index
    %0 = vector.load %arg2[%c0, %c0_0] : memref<16x32xbf16, #tpu.memory_space<vmem>>, vector<16x32xbf16>
    %c0_1 = arith.constant 0 : index
    %c0_2 = arith.constant 0 : index
    %1 = vector.load %arg3[%c0_1, %c0_2] : memref<32x64xbf16, #tpu.memory_space<vmem>>, vector<32x64xbf16>
    %cst = arith.constant dense<0.000000e+00> : vector<16x64xf32>
    %2 = tpu.matmul %0, %1, %cst {dimension_numbers = #tpu.dot_dimension_numbers<[1], [0], [0], [1], [0, 0, 1, 1], [], []>} : vector<16x32xbf16>, vector<32x64xbf16>, vector<16x64xf32> -> vector<16x64xf32>
    %c0_3 = arith.constant 0 : index
    %c0_4 = arith.constant 0 : index
    %3 = vector.load %arg4[%c0_3, %c0_4] : memref<1x64xf32, #tpu.memory_space<vmem>>, vector<1x64xf32>
    %4 = vector.broadcast %3 : vector<1x64xf32> to vector<16x64xf32>
    %5 = arith.addf %2, %4 : vector<16x64xf32>
    %6 = arith.truncf %5 : vector<16x64xf32> to vector<16x64xbf16>
    %c0_5 = arith.constant 0 : index
    %c0_6 = arith.constant 0 : index
    %7 = vector.load %arg5[%c0_5, %c0_6] : memref<16x64xbf16, #tpu.memory_space<vmem>>, vector<16x64xbf16>
    tpu.vector_store %arg5[%c0_5, %c0_6], %6 {strides = array<i32>} : memref<16x64xbf16, #tpu.memory_space<vmem>>, vector<16x64xbf16>,
    return
  }
  func.func @transform_0(%arg0: i32, %arg1: i32) -> (i32, i32) {
    %c0_i32 = arith.constant 0 : i32
    %c0_i32_0 = arith.constant 0 : i32
    return %arg0, %c0_i32 : i32, i32
  }
  func.func @transform_1(%arg0: i32, %arg1: i32) -> (i32, i32) {
    %c0_i32 = arith.constant 0 : i32
    %c0_i32_0 = arith.constant 0 : i32
    return %c0_i32, %arg1 : i32, i32
  }
  func.func @transform_2(%arg0: i32, %arg1: i32) -> (i32, i32) {
    %c0_i32 = arith.constant 0 : i32
    %c0_i32_0 = arith.constant 0 : i32
    return %c0_i32, %arg1 : i32, i32
  }
  func.func @transform_3(%arg0: i32, %arg1: i32) -> (i32, i32) {
    %c0_i32 = arith.constant 0 : i32
    return %arg0, %arg1 : i32, i32
  }
}

module attributes {stable_mosaic.version = 11 : i64} {
  func.func @_ln_matmul_kernel(%arg0: i32, %arg1: i32, %arg2: memref<16x32xf32, #tpu.memory_space<vmem>>, %arg3: memref<1x32xf32, #tpu.memory_space<vmem>>, %arg4: memref<1x32xf32, #tpu.memory_space<vmem>>, %arg5: memref<32x128xbf16, #tpu.memory_space<vmem>>, %arg6: memref<1x128xf32, #tpu.memory_space<vmem>>, %arg7: memref<16x128xbf16, #tpu.memory_space<vmem>>, %arg8: memref<16x32xbf16, #tpu.memory_space<vmem>>) attributes {dimension_semantics = [#tpu.dimension_semantics<parallel>, #tpu.dimension_semantics<arbitrary>], iteration_bounds = array<i64: 1, 1>, scalar_prefetch = 0 : i64, scratch_operands = 1 : i64, tpu.core_type = #tpu.core_type<tc>, window_params = [{transform_indices = @transform_0, window_bounds = array<i64: 16, 32>}, {pipeline_mode = #tpu.pipeline_mode<synchronous>, transform_indices = @transform_1, window_bounds = array<i64: 1, 32>}, {pipeline_mode = #tpu.pipeline_mode<synchronous>, transform_indices = @transform_2, window_bounds = array<i64: 1, 32>}, {transform_indices = @transform_3, window_bounds = array<i64: 32, 128>}, {transform_indices = @transform_4, window_bounds = array<i64: 1, 128>}, {transform_indices = @transform_5, window_bounds = array<i64: 16, 128>}]} {
    %c0_i32 = arith.constant 0 : i32
    %0 = arith.cmpi eq, %arg1, %c0_i32 : i32
    %1 = arith.extui %0 : i1 to i32
    %c0_i32_0 = arith.constant 0 : i32
    %2 = arith.cmpi ne, %1, %c0_i32_0 : i32
    scf.if %2 {
      %c0_11 = arith.constant 0 : index
      %c0_12 = arith.constant 0 : index
      %19 = vector.load %arg2[%c0_11, %c0_12] : memref<16x32xf32, #tpu.memory_space<vmem>>, vector<16x32xf32>
      %c0_13 = arith.constant 0 : index
      %c0_14 = arith.constant 0 : index
      %20 = vector.load %arg3[%c0_13, %c0_14] : memref<1x32xf32, #tpu.memory_space<vmem>>, vector<1x32xf32>
      %c0_15 = arith.constant 0 : index
      %c0_16 = arith.constant 0 : index
      %21 = vector.load %arg4[%c0_15, %c0_16] : memref<1x32xf32, #tpu.memory_space<vmem>>, vector<1x32xf32>
      %cst_17 = arith.constant dense<0.000000e+00> : vector<16xf32>
      %22 = vector.multi_reduction <add>, %19, %cst_17 [1] : vector<16x32xf32> to vector<16xf32>
      %23 = vector.shape_cast %22 : vector<16xf32> to vector<16x1xf32>
      %cst_18 = arith.constant 3.200000e+01 : f32
      %24 = vector.broadcast %cst_18 : f32 to vector<16x1xf32>
      %25 = arith.divf %23, %24 : vector<16x1xf32>
      %26 = arith.mulf %19, %19 : vector<16x32xf32>
      %cst_19 = arith.constant dense<0.000000e+00> : vector<16xf32>
      %27 = vector.multi_reduction <add>, %26, %cst_19 [1] : vector<16x32xf32> to vector<16xf32>
      %28 = vector.shape_cast %27 : vector<16xf32> to vector<16x1xf32>
      %cst_20 = arith.constant 3.200000e+01 : f32
      %29 = vector.broadcast %cst_20 : f32 to vector<16x1xf32>
      %30 = arith.divf %28, %29 : vector<16x1xf32>
      %31 = arith.mulf %25, %25 : vector<16x1xf32>
      %32 = arith.subf %30, %31 : vector<16x1xf32>
      %33 = vector.broadcast %25 : vector<16x1xf32> to vector<16x32xf32>
      %34 = arith.subf %19, %33 : vector<16x32xf32>
      %cst_21 = arith.constant 9.99999974E-6 : f32
      %35 = vector.broadcast %cst_21 : f32 to vector<16x1xf32>
      %36 = arith.addf %32, %35 : vector<16x1xf32>
      %37 = math.rsqrt %36 : vector<16x1xf32>
      %38 = vector.broadcast %37 : vector<16x1xf32> to vector<16x32xf32>
      %39 = arith.mulf %34, %38 : vector<16x32xf32>
      %40 = vector.broadcast %20 : vector<1x32xf32> to vector<16x32xf32>
      %41 = arith.mulf %39, %40 : vector<16x32xf32>
      %42 = vector.broadcast %21 : vector<1x32xf32> to vector<16x32xf32>
      %43 = arith.addf %41, %42 : vector<16x32xf32>
      %44 = arith.truncf %43 : vector<16x32xf32> to vector<16x32xbf16>
      %c0_22 = arith.constant 0 : index
      %c0_23 = arith.constant 0 : index
      %45 = vector.load %arg8[%c0_22, %c0_23] : memref<16x32xbf16, #tpu.memory_space<vmem>>, vector<16x32xbf16>
      tpu.vector_store %arg8[%c0_22, %c0_23], %44 {strides = array<i32>} : memref<16x32xbf16, #tpu.memory_space<vmem>>, vector<16x32xbf16>,
    } else {
    }
    %c0 = arith.constant 0 : index
    %c0_1 = arith.constant 0 : index
    %3 = vector.load %arg8[%c0, %c0_1] : memref<16x32xbf16, #tpu.memory_space<vmem>>, vector<16x32xbf16>
    %c0_2 = arith.constant 0 : index
    %c0_3 = arith.constant 0 : index
    %4 = vector.load %arg5[%c0_2, %c0_3] : memref<32x128xbf16, #tpu.memory_space<vmem>>, vector<32x128xbf16>
    %cst = arith.constant dense<0.000000e+00> : vector<16x128xf32>
    %5 = tpu.matmul %3, %4, %cst {dimension_numbers = #tpu.dot_dimension_numbers<[1], [0], [0], [1], [0, 0, 1, 1], [], []>} : vector<16x32xbf16>, vector<32x128xbf16>, vector<16x128xf32> -> vector<16x128xf32>
    %c0_4 = arith.constant 0 : index
    %c0_5 = arith.constant 0 : index
    %6 = vector.load %arg6[%c0_4, %c0_5] : memref<1x128xf32, #tpu.memory_space<vmem>>, vector<1x128xf32>
    %7 = vector.broadcast %6 : vector<1x128xf32> to vector<16x128xf32>
    %8 = arith.addf %5, %7 : vector<16x128xf32>
    %cst_6 = arith.constant 5.000000e-01 : f32
    %9 = vector.broadcast %cst_6 : f32 to vector<16x128xf32>
    %10 = arith.mulf %9, %8 : vector<16x128xf32>
    %cst_7 = arith.constant 0.707106769 : f32
    %11 = vector.broadcast %cst_7 : f32 to vector<16x128xf32>
    %12 = arith.mulf %8, %11 : vector<16x128xf32>
    %13 = math.erf %12 : vector<16x128xf32>
    %cst_8 = arith.constant 1.000000e+00 : f32
    %14 = vector.broadcast %cst_8 : f32 to vector<16x128xf32>
    %15 = arith.addf %14, %13 : vector<16x128xf32>
    %16 = arith.mulf %10, %15 : vector<16x128xf32>
    %17 = arith.truncf %16 : vector<16x128xf32> to vector<16x128xbf16>
    %c0_9 = arith.constant 0 : index
    %c0_10 = arith.constant 0 : index
    %18 = vector.load %arg7[%c0_9, %c0_10] : memref<16x128xbf16, #tpu.memory_space<vmem>>, vector<16x128xbf16>
    tpu.vector_store %arg7[%c0_9, %c0_10], %17 {strides = array<i32>} : memref<16x128xbf16, #tpu.memory_space<vmem>>, vector<16x128xbf16>,
    return
  }
  func.func @transform_0(%arg0: i32, %arg1: i32) -> (i32, i32) {
    %c0_i32 = arith.constant 0 : i32
    %c0_i32_0 = arith.constant 0 : i32
    return %arg0, %c0_i32 : i32, i32
  }
  func.func @transform_1(%arg0: i32, %arg1: i32) -> (i32, i32) {
    %c0_i32 = arith.constant 0 : i32
    %c0_i32_0 = arith.constant 0 : i32
    %c0_i32_1 = arith.constant 0 : i32
    return %c0_i32, %c0_i32_0 : i32, i32
  }
  func.func @transform_2(%arg0: i32, %arg1: i32) -> (i32, i32) {
    %c0_i32 = arith.constant 0 : i32
    %c0_i32_0 = arith.constant 0 : i32
    %c0_i32_1 = arith.constant 0 : i32
    return %c0_i32, %c0_i32_0 : i32, i32
  }
  func.func @transform_3(%arg0: i32, %arg1: i32) -> (i32, i32) {
    %c0_i32 = arith.constant 0 : i32
    %c0_i32_0 = arith.constant 0 : i32
    return %c0_i32, %arg1 : i32, i32
  }
  func.func @transform_4(%arg0: i32, %arg1: i32) -> (i32, i32) {
    %c0_i32 = arith.constant 0 : i32
    %c0_i32_0 = arith.constant 0 : i32
    return %c0_i32, %arg1 : i32, i32
  }
  func.func @transform_5(%arg0: i32, %arg1: i32) -> (i32, i32) {
    %c0_i32 = arith.constant 0 : i32
    return %arg0, %arg1 : i32, i32
  }
}

module attributes {stable_mosaic.version = 11 : i64} {
  func.func @_cross_attn_kernel(%arg0: i32, %arg1: i32, %arg2: memref<1x8x32xbf16, #tpu.memory_space<vmem>>, %arg3: memref<1x8x2x32xbf16, #tpu.memory_space<vmem>>, %arg4: memref<1x8x32xbf16, #tpu.memory_space<vmem>>) attributes {dimension_semantics = [#tpu.dimension_semantics<parallel>, #tpu.dimension_semantics<parallel>], iteration_bounds = array<i64: 2, 1>, scalar_prefetch = 0 : i64, scratch_operands = 0 : i64, tpu.core_type = #tpu.core_type<tc>, window_params = [{transform_indices = @transform_0, window_bounds = array<i64: 1, 8, 32>}, {transform_indices = @transform_1, window_bounds = array<i64: 1, 8, 2, 32>}, {transform_indices = @transform_2, window_bounds = array<i64: 1, 8, 32>}]} {
    %c0 = arith.constant 0 : index
    %c0_0 = arith.constant 0 : index
    %c0_1 = arith.constant 0 : index
    %0 = vector.load %arg2[%c0, %c0_0, %c0_1] : memref<1x8x32xbf16, #tpu.memory_space<vmem>>, vector<1x8x8xbf16>
    %1 = vector.shape_cast %0 : vector<1x8x8xbf16> to vector<8x8xbf16>
    %c0_2 = arith.constant 0 : index
    %c0_3 = arith.constant 0 : index
    %c0_4 = arith.constant 0 : index
    %c0_5 = arith.constant 0 : index
    %2 = vector.load %arg3[%c0_2, %c0_3, %c0_4, %c0_5] : memref<1x8x2x32xbf16, #tpu.memory_space<vmem>>, vector<1x8x1x8xbf16>
    %3 = vector.shape_cast %2 : vector<1x8x1x8xbf16> to vector<8x8xbf16>
    %c0_6 = arith.constant 0 : index
    %c0_7 = arith.constant 0 : index
    %c1 = arith.constant 1 : index
    %c0_8 = arith.constant 0 : index
    %4 = vector.load %arg3[%c0_6, %c0_7, %c1, %c0_8] : memref<1x8x2x32xbf16, #tpu.memory_space<vmem>>, vector<1x8x1x8xbf16>
    %5 = vector.shape_cast %4 : vector<1x8x1x8xbf16> to vector<8x8xbf16>
    %cst = arith.constant dense<0.000000e+00> : vector<8x8xf32>
    %6 = tpu.matmul %1, %3, %cst {dimension_numbers = #tpu.dot_dimension_numbers<[1], [1], [0], [0], [0, 0, 1, 0], [], []>} : vector<8x8xbf16>, vector<8x8xbf16>, vector<8x8xf32> -> vector<8x8xf32>
    %cst_9 = arith.constant dense<0xFF800000> : vector<8xf32>
    %7 = vector.multi_reduction <maximumf>, %6, %cst_9 [1] : vector<8x8xf32> to vector<8xf32>
    %8 = vector.shape_cast %7 : vector<8xf32> to vector<8x1xf32>
    %9 = vector.broadcast %8 : vector<8x1xf32> to vector<8x8xf32>
    %10 = arith.subf %6, %9 : vector<8x8xf32>
    %11 = math.exp %10 : vector<8x8xf32>
    %cst_10 = arith.constant dense<0.000000e+00> : vector<8xf32>
    %12 = vector.multi_reduction <add>, %11, %cst_10 [1] : vector<8x8xf32> to vector<8xf32>
    %13 = vector.shape_cast %12 : vector<8xf32> to vector<8x1xf32>
    %14 = arith.truncf %11 : vector<8x8xf32> to vector<8x8xbf16>
    %cst_11 = arith.constant dense<0.000000e+00> : vector<8x8xf32>
    %15 = tpu.matmul %14, %5, %cst_11 {dimension_numbers = #tpu.dot_dimension_numbers<[1], [0], [0], [1], [0, 0, 1, 1], [], []>} : vector<8x8xbf16>, vector<8x8xbf16>, vector<8x8xf32> -> vector<8x8xf32>
    %16 = tpu.reciprocal %13 {approx = true} : vector<8x1xf32> -> vector<8x1xf32>
    %17 = vector.broadcast %16 : vector<8x1xf32> to vector<8x8xf32>
    %18 = arith.mulf %15, %17 : vector<8x8xf32>
    %19 = arith.truncf %18 : vector<8x8xf32> to vector<8x8xbf16>
    %c0_12 = arith.constant 0 : index
    %c0_13 = arith.constant 0 : index
    %c0_14 = arith.constant 0 : index
    %20 = vector.load %arg4[%c0_12, %c0_13, %c0_14] : memref<1x8x32xbf16, #tpu.memory_space<vmem>>, vector<1x8x8xbf16>
    %21 = vector.shape_cast %20 : vector<1x8x8xbf16> to vector<8x8xbf16>
    %22 = vector.shape_cast %19 : vector<8x8xbf16> to vector<1x8x8xbf16>
    tpu.vector_store %arg4[%c0_12, %c0_13, %c0_14], %22 {strides = array<i32>} : memref<1x8x32xbf16, #tpu.memory_space<vmem>>, vector<1x8x8xbf16>,
    %c0_15 = arith.constant 0 : index
    %c0_16 = arith.constant 0 : index
    %c8 = arith.constant 8 : index
    %23 = vector.load %arg2[%c0_15, %c0_16, %c8] : memref<1x8x32xbf16, #tpu.memory_space<vmem>>, vector<1x8x8xbf16>
    %24 = vector.shape_cast %23 : vector<1x8x8xbf16> to vector<8x8xbf16>
    %c0_17 = arith.constant 0 : index
    %c0_18 = arith.constant 0 : index
    %c0_19 = arith.constant 0 : index
    %c8_20 = arith.constant 8 : index
    %25 = vector.load %arg3[%c0_17, %c0_18, %c0_19, %c8_20] : memref<1x8x2x32xbf16, #tpu.memory_space<vmem>>, vector<1x8x1x8xbf16>
    %26 = vector.shape_cast %25 : vector<1x8x1x8xbf16> to vector<8x8xbf16>
    %c0_21 = arith.constant 0 : index
    %c0_22 = arith.constant 0 : index
    %c1_23 = arith.constant 1 : index
    %c8_24 = arith.constant 8 : index
    %27 = vector.load %arg3[%c0_21, %c0_22, %c1_23, %c8_24] : memref<1x8x2x32xbf16, #tpu.memory_space<vmem>>, vector<1x8x1x8xbf16>
    %28 = vector.shape_cast %27 : vector<1x8x1x8xbf16> to vector<8x8xbf16>
    %cst_25 = arith.constant dense<0.000000e+00> : vector<8x8xf32>
    %29 = tpu.matmul %24, %26, %cst_25 {dimension_numbers = #tpu.dot_dimension_numbers<[1], [1], [0], [0], [0, 0, 1, 0], [], []>} : vector<8x8xbf16>, vector<8x8xbf16>, vector<8x8xf32> -> vector<8x8xf32>
    %cst_26 = arith.constant dense<0xFF800000> : vector<8xf32>
    %30 = vector.multi_reduction <maximumf>, %29, %cst_26 [1] : vector<8x8xf32> to vector<8xf32>
    %31 = vector.shape_cast %30 : vector<8xf32> to vector<8x1xf32>
    %32 = vector.broadcast %31 : vector<8x1xf32> to vector<8x8xf32>
    %33 = arith.subf %29, %32 : vector<8x8xf32>
    %34 = math.exp %33 : vector<8x8xf32>
    %cst_27 = arith.constant dense<0.000000e+00> : vector<8xf32>
    %35 = vector.multi_reduction <add>, %34, %cst_27 [1] : vector<8x8xf32> to vector<8xf32>
    %36 = vector.shape_cast %35 : vector<8xf32> to vector<8x1xf32>
    %37 = arith.truncf %34 : vector<8x8xf32> to vector<8x8xbf16>
    %cst_28 = arith.constant dense<0.000000e+00> : vector<8x8xf32>
    %38 = tpu.matmul %37, %28, %cst_28 {dimension_numbers = #tpu.dot_dimension_numbers<[1], [0], [0], [1], [0, 0, 1, 1], [], []>} : vector<8x8xbf16>, vector<8x8xbf16>, vector<8x8xf32> -> vector<8x8xf32>
    %39 = tpu.reciprocal %36 {approx = true} : vector<8x1xf32> -> vector<8x1xf32>
    %40 = vector.broadcast %39 : vector<8x1xf32> to vector<8x8xf32>
    %41 = arith.mulf %38, %40 : vector<8x8xf32>
    %42 = arith.truncf %41 : vector<8x8xf32> to vector<8x8xbf16>
    %c0_29 = arith.constant 0 : index
    %c0_30 = arith.constant 0 : index
    %c8_31 = arith.constant 8 : index
    %43 = vector.load %arg4[%c0_29, %c0_30, %c8_31] : memref<1x8x32xbf16, #tpu.memory_space<vmem>>, vector<1x8x8xbf16>
    %44 = vector.shape_cast %43 : vector<1x8x8xbf16> to vector<8x8xbf16>
    %45 = vector.shape_cast %42 : vector<8x8xbf16> to vector<1x8x8xbf16>
    tpu.vector_store %arg4[%c0_29, %c0_30, %c8_31], %45 {strides = array<i32>} : memref<1x8x32xbf16, #tpu.memory_space<vmem>>, vector<1x8x8xbf16>,
    %c0_32 = arith.constant 0 : index
    %c0_33 = arith.constant 0 : index
    %c16 = arith.constant 16 : index
    %46 = vector.load %arg2[%c0_32, %c0_33, %c16] : memref<1x8x32xbf16, #tpu.memory_space<vmem>>, vector<1x8x8xbf16>
    %47 = vector.shape_cast %46 : vector<1x8x8xbf16> to vector<8x8xbf16>
    %c0_34 = arith.constant 0 : index
    %c0_35 = arith.constant 0 : index
    %c0_36 = arith.constant 0 : index
    %c16_37 = arith.constant 16 : index
    %48 = vector.load %arg3[%c0_34, %c0_35, %c0_36, %c16_37] : memref<1x8x2x32xbf16, #tpu.memory_space<vmem>>, vector<1x8x1x8xbf16>
    %49 = vector.shape_cast %48 : vector<1x8x1x8xbf16> to vector<8x8xbf16>
    %c0_38 = arith.constant 0 : index
    %c0_39 = arith.constant 0 : index
    %c1_40 = arith.constant 1 : index
    %c16_41 = arith.constant 16 : index
    %50 = vector.load %arg3[%c0_38, %c0_39, %c1_40, %c16_41] : memref<1x8x2x32xbf16, #tpu.memory_space<vmem>>, vector<1x8x1x8xbf16>
    %51 = vector.shape_cast %50 : vector<1x8x1x8xbf16> to vector<8x8xbf16>
    %cst_42 = arith.constant dense<0.000000e+00> : vector<8x8xf32>
    %52 = tpu.matmul %47, %49, %cst_42 {dimension_numbers = #tpu.dot_dimension_numbers<[1], [1], [0], [0], [0, 0, 1, 0], [], []>} : vector<8x8xbf16>, vector<8x8xbf16>, vector<8x8xf32> -> vector<8x8xf32>
    %cst_43 = arith.constant dense<0xFF800000> : vector<8xf32>
    %53 = vector.multi_reduction <maximumf>, %52, %cst_43 [1] : vector<8x8xf32> to vector<8xf32>
    %54 = vector.shape_cast %53 : vector<8xf32> to vector<8x1xf32>
    %55 = vector.broadcast %54 : vector<8x1xf32> to vector<8x8xf32>
    %56 = arith.subf %52, %55 : vector<8x8xf32>
    %57 = math.exp %56 : vector<8x8xf32>
    %cst_44 = arith.constant dense<0.000000e+00> : vector<8xf32>
    %58 = vector.multi_reduction <add>, %57, %cst_44 [1] : vector<8x8xf32> to vector<8xf32>
    %59 = vector.shape_cast %58 : vector<8xf32> to vector<8x1xf32>
    %60 = arith.truncf %57 : vector<8x8xf32> to vector<8x8xbf16>
    %cst_45 = arith.constant dense<0.000000e+00> : vector<8x8xf32>
    %61 = tpu.matmul %60, %51, %cst_45 {dimension_numbers = #tpu.dot_dimension_numbers<[1], [0], [0], [1], [0, 0, 1, 1], [], []>} : vector<8x8xbf16>, vector<8x8xbf16>, vector<8x8xf32> -> vector<8x8xf32>
    %62 = tpu.reciprocal %59 {approx = true} : vector<8x1xf32> -> vector<8x1xf32>
    %63 = vector.broadcast %62 : vector<8x1xf32> to vector<8x8xf32>
    %64 = arith.mulf %61, %63 : vector<8x8xf32>
    %65 = arith.truncf %64 : vector<8x8xf32> to vector<8x8xbf16>
    %c0_46 = arith.constant 0 : index
    %c0_47 = arith.constant 0 : index
    %c16_48 = arith.constant 16 : index
    %66 = vector.load %arg4[%c0_46, %c0_47, %c16_48] : memref<1x8x32xbf16, #tpu.memory_space<vmem>>, vector<1x8x8xbf16>
    %67 = vector.shape_cast %66 : vector<1x8x8xbf16> to vector<8x8xbf16>
    %68 = vector.shape_cast %65 : vector<8x8xbf16> to vector<1x8x8xbf16>
    tpu.vector_store %arg4[%c0_46, %c0_47, %c16_48], %68 {strides = array<i32>} : memref<1x8x32xbf16, #tpu.memory_space<vmem>>, vector<1x8x8xbf16>,
    %c0_49 = arith.constant 0 : index
    %c0_50 = arith.constant 0 : index
    %c24 = arith.constant 24 : index
    %69 = vector.load %arg2[%c0_49, %c0_50, %c24] : memref<1x8x32xbf16, #tpu.memory_space<vmem>>, vector<1x8x8xbf16>
    %70 = vector.shape_cast %69 : vector<1x8x8xbf16> to vector<8x8xbf16>
    %c0_51 = arith.constant 0 : index
    %c0_52 = arith.constant 0 : index
    %c0_53 = arith.constant 0 : index
    %c24_54 = arith.constant 24 : index
    %71 = vector.load %arg3[%c0_51, %c0_52, %c0_53, %c24_54] : memref<1x8x2x32xbf16, #tpu.memory_space<vmem>>, vector<1x8x1x8xbf16>
    %72 = vector.shape_cast %71 : vector<1x8x1x8xbf16> to vector<8x8xbf16>
    %c0_55 = arith.constant 0 : index
    %c0_56 = arith.constant 0 : index
    %c1_57 = arith.constant 1 : index
    %c24_58 = arith.constant 24 : index
    %73 = vector.load %arg3[%c0_55, %c0_56, %c1_57, %c24_58] : memref<1x8x2x32xbf16, #tpu.memory_space<vmem>>, vector<1x8x1x8xbf16>
    %74 = vector.shape_cast %73 : vector<1x8x1x8xbf16> to vector<8x8xbf16>
    %cst_59 = arith.constant dense<0.000000e+00> : vector<8x8xf32>
    %75 = tpu.matmul %70, %72, %cst_59 {dimension_numbers = #tpu.dot_dimension_numbers<[1], [1], [0], [0], [0, 0, 1, 0], [], []>} : vector<8x8xbf16>, vector<8x8xbf16>, vector<8x8xf32> -> vector<8x8xf32>
    %cst_60 = arith.constant dense<0xFF800000> : vector<8xf32>
    %76 = vector.multi_reduction <maximumf>, %75, %cst_60 [1] : vector<8x8xf32> to vector<8xf32>
    %77 = vector.shape_cast %76 : vector<8xf32> to vector<8x1xf32>
    %78 = vector.broadcast %77 : vector<8x1xf32> to vector<8x8xf32>
    %79 = arith.subf %75, %78 : vector<8x8xf32>
    %80 = math.exp %79 : vector<8x8xf32>
    %cst_61 = arith.constant dense<0.000000e+00> : vector<8xf32>
    %81 = vector.multi_reduction <add>, %80, %cst_61 [1] : vector<8x8xf32> to vector<8xf32>
    %82 = vector.shape_cast %81 : vector<8xf32> to vector<8x1xf32>
    %83 = arith.truncf %80 : vector<8x8xf32> to vector<8x8xbf16>
    %cst_62 = arith.constant dense<0.000000e+00> : vector<8x8xf32>
    %84 = tpu.matmul %83, %74, %cst_62 {dimension_numbers = #tpu.dot_dimension_numbers<[1], [0], [0], [1], [0, 0, 1, 1], [], []>} : vector<8x8xbf16>, vector<8x8xbf16>, vector<8x8xf32> -> vector<8x8xf32>
    %85 = tpu.reciprocal %82 {approx = true} : vector<8x1xf32> -> vector<8x1xf32>
    %86 = vector.broadcast %85 : vector<8x1xf32> to vector<8x8xf32>
    %87 = arith.mulf %84, %86 : vector<8x8xf32>
    %88 = arith.truncf %87 : vector<8x8xf32> to vector<8x8xbf16>
    %c0_63 = arith.constant 0 : index
    %c0_64 = arith.constant 0 : index
    %c24_65 = arith.constant 24 : index
    %89 = vector.load %arg4[%c0_63, %c0_64, %c24_65] : memref<1x8x32xbf16, #tpu.memory_space<vmem>>, vector<1x8x8xbf16>
    %90 = vector.shape_cast %89 : vector<1x8x8xbf16> to vector<8x8xbf16>
    %91 = vector.shape_cast %88 : vector<8x8xbf16> to vector<1x8x8xbf16>
    tpu.vector_store %arg4[%c0_63, %c0_64, %c24_65], %91 {strides = array<i32>} : memref<1x8x32xbf16, #tpu.memory_space<vmem>>, vector<1x8x8xbf16>,
    return
  }
  func.func @transform_0(%arg0: i32, %arg1: i32) -> (i32, i32, i32) {
    %c0_i32 = arith.constant 0 : i32
    %c0_i32_0 = arith.constant 0 : i32
    return %arg0, %c0_i32, %arg1 : i32, i32, i32
  }
  func.func @transform_1(%arg0: i32, %arg1: i32) -> (i32, i32, i32, i32) {
    %c0_i32 = arith.constant 0 : i32
    %c0_i32_0 = arith.constant 0 : i32
    %c0_i32_1 = arith.constant 0 : i32
    return %arg0, %c0_i32, %c0_i32_0, %arg1 : i32, i32, i32, i32
  }
  func.func @transform_2(%arg0: i32, %arg1: i32) -> (i32, i32, i32) {
    %c0_i32 = arith.constant 0 : i32
    %c0_i32_0 = arith.constant 0 : i32
    return %arg0, %c0_i32, %arg1 : i32, i32, i32
  }
}

module attributes {stable_mosaic.version = 11 : i64} {
  func.func @_matmul_kernel(%arg0: i32, %arg1: i32, %arg2: memref<16x128xbf16, #tpu.memory_space<vmem>>, %arg3: memref<128x32xbf16, #tpu.memory_space<vmem>>, %arg4: memref<1x32xf32, #tpu.memory_space<vmem>>, %arg5: memref<16x32xf32, #tpu.memory_space<vmem>>, %arg6: memref<16x32xf32, #tpu.memory_space<vmem>>) attributes {dimension_semantics = [#tpu.dimension_semantics<parallel>, #tpu.dimension_semantics<parallel>], iteration_bounds = array<i64: 1, 1>, scalar_prefetch = 0 : i64, scratch_operands = 0 : i64, tpu.core_type = #tpu.core_type<tc>, window_params = [{transform_indices = @transform_0, window_bounds = array<i64: 16, 128>}, {transform_indices = @transform_1, window_bounds = array<i64: 128, 32>}, {transform_indices = @transform_2, window_bounds = array<i64: 1, 32>}, {transform_indices = @transform_3, window_bounds = array<i64: 16, 32>}, {transform_indices = @transform_4, window_bounds = array<i64: 16, 32>}]} {
    %c0 = arith.constant 0 : index
    %c0_0 = arith.constant 0 : index
    %0 = vector.load %arg2[%c0, %c0_0] : memref<16x128xbf16, #tpu.memory_space<vmem>>, vector<16x128xbf16>
    %c0_1 = arith.constant 0 : index
    %c0_2 = arith.constant 0 : index
    %1 = vector.load %arg3[%c0_1, %c0_2] : memref<128x32xbf16, #tpu.memory_space<vmem>>, vector<128x32xbf16>
    %cst = arith.constant dense<0.000000e+00> : vector<16x32xf32>
    %2 = tpu.matmul %0, %1, %cst {dimension_numbers = #tpu.dot_dimension_numbers<[1], [0], [0], [1], [0, 0, 1, 1], [], []>} : vector<16x128xbf16>, vector<128x32xbf16>, vector<16x32xf32> -> vector<16x32xf32>
    %c0_3 = arith.constant 0 : index
    %c0_4 = arith.constant 0 : index
    %3 = vector.load %arg4[%c0_3, %c0_4] : memref<1x32xf32, #tpu.memory_space<vmem>>, vector<1x32xf32>
    %4 = vector.broadcast %3 : vector<1x32xf32> to vector<16x32xf32>
    %5 = arith.addf %2, %4 : vector<16x32xf32>
    %c0_5 = arith.constant 0 : index
    %c0_6 = arith.constant 0 : index
    %6 = vector.load %arg5[%c0_5, %c0_6] : memref<16x32xf32, #tpu.memory_space<vmem>>, vector<16x32xf32>
    %7 = arith.addf %5, %6 : vector<16x32xf32>
    %c0_7 = arith.constant 0 : index
    %c0_8 = arith.constant 0 : index
    %8 = vector.load %arg6[%c0_7, %c0_8] : memref<16x32xf32, #tpu.memory_space<vmem>>, vector<16x32xf32>
    tpu.vector_store %arg6[%c0_7, %c0_8], %7 {strides = array<i32>} : memref<16x32xf32, #tpu.memory_space<vmem>>, vector<16x32xf32>,
    return
  }
  func.func @transform_0(%arg0: i32, %arg1: i32) -> (i32, i32) {
    %c0_i32 = arith.constant 0 : i32
    %c0_i32_0 = arith.constant 0 : i32
    return %arg0, %c0_i32 : i32, i32
  }
  func.func @transform_1(%arg0: i32, %arg1: i32) -> (i32, i32) {
    %c0_i32 = arith.constant 0 : i32
    %c0_i32_0 = arith.constant 0 : i32
    return %c0_i32, %arg1 : i32, i32
  }
  func.func @transform_2(%arg0: i32, %arg1: i32) -> (i32, i32) {
    %c0_i32 = arith.constant 0 : i32
    %c0_i32_0 = arith.constant 0 : i32
    return %c0_i32, %arg1 : i32, i32
  }
  func.func @transform_3(%arg0: i32, %arg1: i32) -> (i32, i32) {
    %c0_i32 = arith.constant 0 : i32
    return %arg0, %arg1 : i32, i32
  }
  func.func @transform_4(%arg0: i32, %arg1: i32) -> (i32, i32) {
    %c0_i32 = arith.constant 0 : i32
    return %arg0, %arg1 : i32, i32
  }
}

module attributes {stable_mosaic.version = 11 : i64} {
  func.func @_ln_matmul_tied_kernel(%arg0: i32, %arg1: i32, %arg2: memref<16x32xf32, #tpu.memory_space<vmem>>, %arg3: memref<1x32xf32, #tpu.memory_space<vmem>>, %arg4: memref<1x32xf32, #tpu.memory_space<vmem>>, %arg5: memref<256x32xbf16, #tpu.memory_space<vmem>>, %arg6: memref<16x256xf32, #tpu.memory_space<vmem>>, %arg7: memref<16x32xbf16, #tpu.memory_space<vmem>>) attributes {dimension_semantics = [#tpu.dimension_semantics<parallel>, #tpu.dimension_semantics<arbitrary>], iteration_bounds = array<i64: 1, 1>, scalar_prefetch = 0 : i64, scratch_operands = 1 : i64, tpu.core_type = #tpu.core_type<tc>, window_params = [{transform_indices = @transform_0, window_bounds = array<i64: 16, 32>}, {pipeline_mode = #tpu.pipeline_mode<synchronous>, transform_indices = @transform_1, window_bounds = array<i64: 1, 32>}, {pipeline_mode = #tpu.pipeline_mode<synchronous>, transform_indices = @transform_2, window_bounds = array<i64: 1, 32>}, {transform_indices = @transform_3, window_bounds = array<i64: 256, 32>}, {transform_indices = @transform_4, window_bounds = array<i64: 16, 256>}]} {
    %c0_i32 = arith.constant 0 : i32
    %0 = arith.cmpi eq, %arg1, %c0_i32 : i32
    %1 = arith.extui %0 : i1 to i32
    %c0_i32_0 = arith.constant 0 : i32
    %2 = arith.cmpi ne, %1, %c0_i32_0 : i32
    scf.if %2 {
      %c0_6 = arith.constant 0 : index
      %c0_7 = arith.constant 0 : index
      %7 = vector.load %arg2[%c0_6, %c0_7] : memref<16x32xf32, #tpu.memory_space<vmem>>, vector<16x32xf32>
      %c0_8 = arith.constant 0 : index
      %c0_9 = arith.constant 0 : index
      %8 = vector.load %arg3[%c0_8, %c0_9] : memref<1x32xf32, #tpu.memory_space<vmem>>, vector<1x32xf32>
      %c0_10 = arith.constant 0 : index
      %c0_11 = arith.constant 0 : index
      %9 = vector.load %arg4[%c0_10, %c0_11] : memref<1x32xf32, #tpu.memory_space<vmem>>, vector<1x32xf32>
      %cst_12 = arith.constant dense<0.000000e+00> : vector<16xf32>
      %10 = vector.multi_reduction <add>, %7, %cst_12 [1] : vector<16x32xf32> to vector<16xf32>
      %11 = vector.shape_cast %10 : vector<16xf32> to vector<16x1xf32>
      %cst_13 = arith.constant 3.200000e+01 : f32
      %12 = vector.broadcast %cst_13 : f32 to vector<16x1xf32>
      %13 = arith.divf %11, %12 : vector<16x1xf32>
      %14 = arith.mulf %7, %7 : vector<16x32xf32>
      %cst_14 = arith.constant dense<0.000000e+00> : vector<16xf32>
      %15 = vector.multi_reduction <add>, %14, %cst_14 [1] : vector<16x32xf32> to vector<16xf32>
      %16 = vector.shape_cast %15 : vector<16xf32> to vector<16x1xf32>
      %cst_15 = arith.constant 3.200000e+01 : f32
      %17 = vector.broadcast %cst_15 : f32 to vector<16x1xf32>
      %18 = arith.divf %16, %17 : vector<16x1xf32>
      %19 = arith.mulf %13, %13 : vector<16x1xf32>
      %20 = arith.subf %18, %19 : vector<16x1xf32>
      %21 = vector.broadcast %13 : vector<16x1xf32> to vector<16x32xf32>
      %22 = arith.subf %7, %21 : vector<16x32xf32>
      %cst_16 = arith.constant 9.99999974E-6 : f32
      %23 = vector.broadcast %cst_16 : f32 to vector<16x1xf32>
      %24 = arith.addf %20, %23 : vector<16x1xf32>
      %25 = math.rsqrt %24 : vector<16x1xf32>
      %26 = vector.broadcast %25 : vector<16x1xf32> to vector<16x32xf32>
      %27 = arith.mulf %22, %26 : vector<16x32xf32>
      %28 = vector.broadcast %8 : vector<1x32xf32> to vector<16x32xf32>
      %29 = arith.mulf %27, %28 : vector<16x32xf32>
      %30 = vector.broadcast %9 : vector<1x32xf32> to vector<16x32xf32>
      %31 = arith.addf %29, %30 : vector<16x32xf32>
      %32 = arith.truncf %31 : vector<16x32xf32> to vector<16x32xbf16>
      %c0_17 = arith.constant 0 : index
      %c0_18 = arith.constant 0 : index
      %33 = vector.load %arg7[%c0_17, %c0_18] : memref<16x32xbf16, #tpu.memory_space<vmem>>, vector<16x32xbf16>
      tpu.vector_store %arg7[%c0_17, %c0_18], %32 {strides = array<i32>} : memref<16x32xbf16, #tpu.memory_space<vmem>>, vector<16x32xbf16>,
    } else {
    }
    %c0 = arith.constant 0 : index
    %c0_1 = arith.constant 0 : index
    %3 = vector.load %arg7[%c0, %c0_1] : memref<16x32xbf16, #tpu.memory_space<vmem>>, vector<16x32xbf16>
    %c0_2 = arith.constant 0 : index
    %c0_3 = arith.constant 0 : index
    %4 = vector.load %arg5[%c0_2, %c0_3] : memref<256x32xbf16, #tpu.memory_space<vmem>>, vector<256x32xbf16>
    %cst = arith.constant dense<0.000000e+00> : vector<16x256xf32>
    %5 = tpu.matmul %3, %4, %cst {dimension_numbers = #tpu.dot_dimension_numbers<[1], [1], [0], [0], [0, 0, 1, 0], [], []>} : vector<16x32xbf16>, vector<256x32xbf16>, vector<16x256xf32> -> vector<16x256xf32>
    %c0_4 = arith.constant 0 : index
    %c0_5 = arith.constant 0 : index
    %6 = vector.load %arg6[%c0_4, %c0_5] : memref<16x256xf32, #tpu.memory_space<vmem>>, vector<16x256xf32>
    tpu.vector_store %arg6[%c0_4, %c0_5], %5 {strides = array<i32>} : memref<16x256xf32, #tpu.memory_space<vmem>>, vector<16x256xf32>,
    return
  }
  func.func @transform_0(%arg0: i32, %arg1: i32) -> (i32, i32) {
    %c0_i32 = arith.constant 0 : i32
    %c0_i32_0 = arith.constant 0 : i32
    return %arg0, %c0_i32 : i32, i32
  }
  func.func @transform_1(%arg0: i32, %arg1: i32) -> (i32, i32) {
    %c0_i32 = arith.constant 0 : i32
    %c0_i32_0 = arith.constant 0 : i32
    %c0_i32_1 = arith.constant 0 : i32
    return %c0_i32, %c0_i32_0 : i32, i32
  }
  func.func @transform_2(%arg0: i32, %arg1: i32) -> (i32, i32) {
    %c0_i32 = arith.constant 0 : i32
    %c0_i32_0 = arith.constant 0 : i32
    %c0_i32_1 = arith.constant 0 : i32
    return %c0_i32, %c0_i32_0 : i32, i32
  }
  func.func @transform_3(%arg0: i32, %arg1: i32) -> (i32, i32) {
    %c0_i32 = arith.constant 0 : i32
    %c0_i32_0 = arith.constant 0 : i32
    return %arg1, %c0_i32 : i32, i32
  }
  func.func @transform_4(%arg0: i32, %arg1: i32) -> (i32, i32) {
    %c0_i32 = arith.constant 0 : i32
    return %arg0, %arg1 : i32, i32
  }
}

</mosaic_0001>

<llo_original>
// kernel: decoder_forward.19
$region0: #{decoder_forward.19}
  #allocation0 [shape = 'u32[]', space=smem, size = 0x4, offset = 0x4, fixed_abs, tag = 'smem constant byte address 0x4 - core index']
  #allocation1 [shape = 'u32[144,128]{1,0:T(1,128)}', space=vmem, size = 0x12000, scoped, tag = 'internal scratch']
  #allocation2 [shape = 'bf16[16,32]{1,0:T(16,128)(2,1)}', space=vmem, size = 0x1000, scoped, tag = 'scratch operand']
  %s0 = inlined_call_operand.vmem [shape: f32[16,32], index: 0, kind: input, shape index: {}]
  %s1 = inlined_call_operand.vmem [shape: f32[1,32], index: 1, kind: input, shape index: {}]
  %s2 = inlined_call_operand.vmem [shape: f32[1,32], index: 2, kind: input, shape index: {}]
  %s3 = inlined_call_operand.vmem [shape: bf16[32,96], index: 3, kind: input, shape index: {}]
  %s4 = inlined_call_operand.vmem [shape: f32[1,96], index: 4, kind: input, shape index: {}]
  %s5 = inlined_call_operand.vmem [shape: bf16[16,96], index: 5, kind: output, shape index: {}]
  %s6 = sld [smem:[#allocation0]]
  $region34: #{decoder_forward.19} parent=0
    _
  %s8 = ssub.s32 1, %s6
  %s9 = scalar_select 0, %s8, %s6
  // Predicated region
  $region2: #{decoder_forward.19} parent=0 // pred_check
    _
  $region3: #{decoder_forward.19} parent=0 // pred_check_branch
    %11 = sbr.rel (0) target = $region5
  $region4: #{decoder_forward.19} parent=0 // pred_region
    _
  $region5: #{decoder_forward.19} parent=0 // pred_fallthru
    _
  // Predicated region
  $region6: #{decoder_forward.19} parent=0 // pred_check
    _
  $region7: #{decoder_forward.19} parent=0 // pred_check_branch
    %13 = sbr.rel (0) target = $region9
  $region8: #{decoder_forward.19} parent=0 // pred_region
    _
  $region9: #{decoder_forward.19} parent=0 // pred_fallthru
    _
  // Predicated region
  $region10: #{decoder_forward.19} parent=0 // pred_check
    _
  $region11: #{decoder_forward.19} parent=0 // pred_check_branch
    %15 = sbr.rel (0) target = $region13
  $region12: #{decoder_forward.19} parent=0 // pred_region
    _
  $region13: #{decoder_forward.19} parent=0 // pred_fallthru
    _
  // Predicated region
  $region14: #{decoder_forward.19} parent=0 // pred_check
    _
  $region15: #{decoder_forward.19} parent=0 // pred_check_branch
    %17 = sbr.rel (0) target = $region17
  $region16: #{decoder_forward.19} parent=0 // pred_region
    _
  $region17: #{decoder_forward.19} parent=0 // pred_fallthru
    _
  // Predicated region
  $region18: #{decoder_forward.19} parent=0 // pred_check
    _
  $region19: #{decoder_forward.19} parent=0 // pred_check_branch
    %19 = sbr.rel (0) target = $region21
  $region20: #{decoder_forward.19} parent=0 // pred_region
    _
  $region21: #{decoder_forward.19} parent=0 // pred_fallthru
    _
  %p21 = scmp.eq.s32.totalorder 0, 0
  // Predicated region
  $region22: #{decoder_forward.19} parent=0 // pred_check
    %p22 = pneg %p21
  $region23: #{decoder_forward.19} parent=0 // pred_check_branch
    %24 = sbr.rel (%p22) target = $region25
  $region24: #{decoder_forward.19} parent=0 // pred_region
    %v25 = vld [vmem:[%s0] sm:$0xff]
    %v26 = vld [vmem:[%s0 + $0x8] sm:$0xff]
    %v27 = vld [vmem:[%s1] sm:$0x1]
    %v28 = vld [vmem:[%s2] sm:$0x1]
    %vm29 = vcmask 261120
    %v30 = vsel %vm29, %v25, 0.0
    %31 = vadd.xlane.f32.xlu0 %v30
    %v32 = vpop.xlane.xlu0 %31
    %v33 = vsel %vm29, %v26, 0.0
    %34 = vadd.xlane.f32.xlu0 %v33
    %v35 = vpop.xlane.xlu0 %34
    %v36 = vrcp.pop 32.0
    %v37 = vmul.f32 %v32, %v36
    %v38 = vmul.f32 %v35, %v36
    %v39 = vmul.f32 %v25, %v25
    %v40 = vmul.f32 %v26, %v26
    %v41 = vsel %vm29, %v39, 0.0
    %42 = vadd.xlane.f32.xlu0 %v41
    %v43 = vpop.xlane.xlu0 %42
    %v44 = vsel %vm29, %v40, 0.0
    %45 = vadd.xlane.f32.xlu0 %v44
    %v46 = vpop.xlane.xlu0 %45
    %v47 = vmul.f32 %v43, %v36
    %v48 = vmul.f32 %v46, %v36
    %v49 = vmul.f32 %v37, %v37
    %v50 = vmul.f32 %v38, %v38
    %v51 = vsub.f32 %v47, %v49
    %v52 = vsub.f32 %v48, %v50
    %v53 = vsub.f32 %v25, %v37
    %v54 = vsub.f32 %v26, %v38
    %v55 = vadd.f32 %v51, 1e-05
    %v56 = vadd.f32 %v52, 1e-05
    %v57 = vrsqrt.pop %v55
    %v58 = vrsqrt.pop %v56
    %v59 = vmul.f32 %v53, %v57
    %v60 = vmul.f32 %v54, %v58
    %v62 = vlaneseq
    %v63 = vshrl.u32 %v62, 7
    %v64 = vsub.s32 0, %v63
    %v65 = vrot.slane %v27, %v64
    %v67 = vmul.f32 %v59, %v65
    %v68 = vmul.f32 %v60, %v65
    %v70 = vlaneseq
    %v71 = vshrl.u32 %v70, 7
    %v72 = vsub.s32 0, %v71
    %v73 = vrot.slane %v28, %v72
    %v75 = vadd.f32 %v67, %v73
    %v76 = vadd.f32 %v68, %v73
    %v77 = vpack.c.bf16 %v76, %v75
    %78 = vst.msk [vmem:[#allocation2] sm:$0xff] %vm29, %v77
  $region25: #{decoder_forward.19} parent=0 // pred_fallthru
    _
  %v79 = vld [vmem:[#allocation2] sm:$0xff]
  %v80 = vld [vmem:[%s3] sm:$0xf]
  %v81 = vld [vmem:[%s3 + $0x4] sm:$0xf]
  %v82 = vld [vmem:[%s3 + $0x8] sm:$0xf]
  %v83 = vld [vmem:[%s3 + $0xc] sm:$0xf]
  %v84 = vld [vmem:[%s4] sm:$0x1]
  %v86 = vlaneseq
  %v87 = vshrl.u32 %v86, 7
  %v88 = vsub.s32 0, %v87
  %v89 = vrot.slane %v84, %v88
  %v95 = vunpack.c.l.b16 %v80
  %v96 = vunpack.c.l.b16 %v81
  %v97 = vunpack.c.l.b16 %v82
  %v98 = vunpack.c.l.b16 %v83
  %v99 = vpack.c.b16 %v96, %v95
  %v100 = vpack.c.b16 %v98, %v97
  %vm103 = vcmask 261120
  %v105 = vsel %vm103, %v79, 0
  %107 = vmatprep.subr.bf16.mxu0 0
  %108 = vmatpush1.bf16.msra.mxu0 %v99
  %109 = vmatprep.subr.bf16.mxu0 0
  %110 = vmatpush1.bf16.msra.mxu0 %v100
  %111 = vmatprep.subr.bf16.mxu0 0
  %112 = vmatpush1.bf16.msra.mxu0 0
  %113 = vmatprep.subr.bf16.mxu0 0
  %114 = vmatpush1.bf16.msra.mxu0 0
  %115 = vmatprep.subr.bf16.mxu0 0
  %116 = vmatpush1.bf16.msra.mxu0 0
  %117 = vmatprep.subr.bf16.mxu0 0
  %118 = vmatpush1.bf16.msra.mxu0 0
  %119 = vmatprep.subr.bf16.mxu0 0
  %120 = vmatpush1.bf16.msra.mxu0 0
  %121 = vmatprep.subr.bf16.mxu0 0
  %122 = vmatpush1.bf16.msra.mxu0 0
  %123 = vmatprep.subr.bf16.mxu0 0
  %124 = vmatpush1.bf16.msra.mxu0 0
  %125 = vmatprep.subr.bf16.mxu0 0
  %126 = vmatpush1.bf16.msra.mxu0 0
  %127 = vmatprep.subr.bf16.mxu0 0
  %128 = vmatpush1.bf16.msra.mxu0 0
  %129 = vmatprep.subr.bf16.mxu0 0
  %130 = vmatpush1.bf16.msra.mxu0 0
  %131 = vmatprep.subr.bf16.mxu0 0
  %132 = vmatpush1.bf16.msra.mxu0 0
  %133 = vmatprep.subr.bf16.mxu0 0
  %134 = vmatpush1.bf16.msra.mxu0 0
  %135 = vmatprep.subr.bf16.mxu0 0
  %136 = vmatpush1.bf16.msra.mxu0 0
  %137 = vmatprep.subr.bf16.mxu0 0
  %138 = vmatpush1.bf16.msra.mxu0 0
  %139 = vmatprep.mubr.bf16.mxu0 0
  %140 = vmatmul.mubr.bf16.gmra.mrb[0].mxu0 %v105
  %v141 = vpop.f32.mrb[0].mxu0
  %v142 = vadd.f32 %v89, %v141
  %v143 = vpop.f32.mrb[0].mxu0
  %v144 = vpop.f32.mrb[0].mxu0
  %v145 = vadd.f32 %v89, %v144
  %v146 = vpop.f32.mrb[0].mxu0
  %147 = vdwg.mxu0
  %v148 = vpack.c.bf16 %v145, %v142
  %v150 = vunpack.c.l.b16 %v148
  %v151 = vunpack.c.h.b16 %v148
  %v152 = vpack.c.b16 %v150, %v150
  %v153 = vpack.c.b16 %v151, %v151
  %vm156 = vcmask 781312
  %157 = vst.msk [vmem:[%s5] sm:$0xf] %vm156, %v152
  %158 = vst.msk [vmem:[%s5 + $0x4] sm:$0xf] %vm156, %v153
  // Predicated region
  $region26: #{decoder_forward.19} parent=0 // pred_check
    _
  $region27: #{decoder_forward.19} parent=0 // pred_check_branch
    %160 = sbr.rel (0) target = $region29
  $region28: #{decoder_forward.19} parent=0 // pred_region
    _
  $region29: #{decoder_forward.19} parent=0 // pred_fallthru
    _
  // Predicated region
  $region30: #{decoder_forward.19} parent=0 // pred_check
    _
  $region31: #{decoder_forward.19} parent=0 // pred_check_branch
    %162 = sbr.rel (0) target = $region33
  $region32: #{decoder_forward.19} parent=0 // pred_region
    _
  $region33: #{decoder_forward.19} parent=0 // pred_fallthru
    _

// kernel: decoder_forward.21
$region0: #{decoder_forward.21}
  #allocation0 [shape = 'u32[]', space=smem, size = 0x4, offset = 0x4, fixed_abs, tag = 'smem constant byte address 0x4 - core index']
  #allocation1 [shape = 'u32[144,128]{1,0:T(1,128)}', space=vmem, size = 0x12000, scoped, tag = 'internal scratch']
  %s0 = inlined_call_operand.vmem [shape: bf16[16,32], index: 0, kind: input, shape index: {}]
  %s1 = inlined_call_operand.vmem [shape: bf16[32,32], index: 1, kind: input, shape index: {}]
  %s2 = inlined_call_operand.vmem [shape: f32[1,32], index: 2, kind: input, shape index: {}]
  %s3 = inlined_call_operand.vmem [shape: f32[16,32], index: 3, kind: input, shape index: {}]
  %s4 = inlined_call_operand.vmem [shape: f32[16,32], index: 4, kind: output, shape index: {}]
  %s5 = sld [smem:[#allocation0]]
  $region26: #{decoder_forward.21} parent=0
    _
  %s7 = ssub.s32 1, %s5
  %s8 = scalar_select 0, %s7, %s5
  // Predicated region
  $region2: #{decoder_forward.21} parent=0 // pred_check
    _
  $region3: #{decoder_forward.21} parent=0 // pred_check_branch
    %10 = sbr.rel (0) target = $region5
  $region4: #{decoder_forward.21} parent=0 // pred_region
    _
  $region5: #{decoder_forward.21} parent=0 // pred_fallthru
    _
  // Predicated region
  $region6: #{decoder_forward.21} parent=0 // pred_check
    _
  $region7: #{decoder_forward.21} parent=0 // pred_check_branch
    %12 = sbr.rel (0) target = $region9
  $region8: #{decoder_forward.21} parent=0 // pred_region
    _
  $region9: #{decoder_forward.21} parent=0 // pred_fallthru
    _
  // Predicated region
  $region10: #{decoder_forward.21} parent=0 // pred_check
    _
  $region11: #{decoder_forward.21} parent=0 // pred_check_branch
    %14 = sbr.rel (0) target = $region13
  $region12: #{decoder_forward.21} parent=0 // pred_region
    _
  $region13: #{decoder_forward.21} parent=0 // pred_fallthru
    _
  // Predicated region
  $region14: #{decoder_forward.21} parent=0 // pred_check
    _
  $region15: #{decoder_forward.21} parent=0 // pred_check_branch
    %16 = sbr.rel (0) target = $region17
  $region16: #{decoder_forward.21} parent=0 // pred_region
    _
  $region17: #{decoder_forward.21} parent=0 // pred_fallthru
    _
  %v18 = vld [vmem:[%s0] sm:$0xf]
  %v19 = vld [vmem:[%s0 + $0x4] sm:$0xf]
  %v20 = vld [vmem:[%s1] sm:$0xf]
  %v21 = vld [vmem:[%s1 + $0x4] sm:$0xf]
  %v22 = vld [vmem:[%s1 + $0x8] sm:$0xf]
  %v23 = vld [vmem:[%s1 + $0xc] sm:$0xf]
  %v24 = vld [vmem:[%s2] sm:$0x1]
  %v26 = vlaneseq
  %v27 = vshrl.u32 %v26, 7
  %v28 = vsub.s32 0, %v27
  %v29 = vrot.slane %v24, %v28
  %v33 = vunpack.c.l.b16 %v18
  %v34 = vunpack.c.l.b16 %v19
  %v35 = vpack.c.b16 %v34, %v33
  %v40 = vunpack.c.l.b16 %v20
  %v41 = vunpack.c.l.b16 %v21
  %v42 = vunpack.c.l.b16 %v22
  %v43 = vunpack.c.l.b16 %v23
  %v44 = vpack.c.b16 %v41, %v40
  %v45 = vpack.c.b16 %v43, %v42
  %vm48 = vcmask 261120
  %v50 = vsel %vm48, %v35, 0
  %52 = vmatprep.subr.bf16.mxu0 0
  %53 = vmatpush1.bf16.msra.mxu0 %v44
  %54 = vmatprep.subr.bf16.mxu0 0
  %55 = vmatpush1.bf16.msra.mxu0 %v45
  %56 = vmatprep.subr.bf16.mxu0 0
  %57 = vmatpush1.bf16.msra.mxu0 0
  %58 = vmatprep.subr.bf16.mxu0 0
  %59 = vmatpush1.bf16.msra.mxu0 0
  %60 = vmatprep.subr.bf16.mxu0 0
  %61 = vmatpush1.bf16.msra.mxu0 0
  %62 = vmatprep.subr.bf16.mxu0 0
  %63 = vmatpush1.bf16.msra.mxu0 0
  %64 = vmatprep.subr.bf16.mxu0 0
  %65 = vmatpush1.bf16.msra.mxu0 0
  %66 = vmatprep.subr.bf16.mxu0 0
  %67 = vmatpush1.bf16.msra.mxu0 0
  %68 = vmatprep.subr.bf16.mxu0 0
  %69 = vmatpush1.bf16.msra.mxu0 0
  %70 = vmatprep.subr.bf16.mxu0 0
  %71 = vmatpush1.bf16.msra.mxu0 0
  %72 = vmatprep.subr.bf16.mxu0 0
  %73 = vmatpush1.bf16.msra.mxu0 0
  %74 = vmatprep.subr.bf16.mxu0 0
  %75 = vmatpush1.bf16.msra.mxu0 0
  %76 = vmatprep.subr.bf16.mxu0 0
  %77 = vmatpush1.bf16.msra.mxu0 0
  %78 = vmatprep.subr.bf16.mxu0 0
  %79 = vmatpush1.bf16.msra.mxu0 0
  %80 = vmatprep.subr.bf16.mxu0 0
  %81 = vmatpush1.bf16.msra.mxu0 0
  %82 = vmatprep.subr.bf16.mxu0 0
  %83 = vmatpush1.bf16.msra.mxu0 0
  %84 = vmatprep.mubr.bf16.mxu0 0
  %85 = vmatmul.mubr.bf16.gmra.mrb[0].mxu0 %v50
  %v86 = vpop.f32.mrb[0].mxu0
  %v87 = vadd.f32 %v29, %v86
  %v88 = vpop.f32.mrb[0].mxu0
  %v89 = vpop.f32.mrb[0].mxu0
  %v90 = vadd.f32 %v29, %v89
  %v91 = vpop.f32.mrb[0].mxu0
  %92 = vdwg.mxu0
  %v93 = vld [vmem:[%s3] sm:$0xff]
  %v94 = vld [vmem:[%s3 + $0x8] sm:$0xff]
  %v95 = vadd.f32 %v87, %v93
  %v96 = vadd.f32 %v90, %v94
  %97 = vst.msk [vmem:[%s4] sm:$0xff] %vm48, %v95
  %98 = vst.msk [vmem:[%s4 + $0x8] sm:$0xff] %vm48, %v96
  // Predicated region
  $region18: #{decoder_forward.21} parent=0 // pred_check
    _
  $region19: #{decoder_forward.21} parent=0 // pred_check_branch
    %100 = sbr.rel (0) target = $region21
  $region20: #{decoder_forward.21} parent=0 // pred_region
    _
  $region21: #{decoder_forward.21} parent=0 // pred_fallthru
    _
  // Predicated region
  $region22: #{decoder_forward.21} parent=0 // pred_check
    _
  $region23: #{decoder_forward.21} parent=0 // pred_check_branch
    %102 = sbr.rel (0) target = $region25
  $region24: #{decoder_forward.21} parent=0 // pred_region
    _
  $region25: #{decoder_forward.21} parent=0 // pred_fallthru
    _

// kernel: decoder_forward.22
$region0: #{decoder_forward.22}
  #allocation0 [shape = 'u32[]', space=smem, size = 0x4, offset = 0x4, fixed_abs, tag = 'smem constant byte address 0x4 - core index']
  #allocation1 [shape = 'u32[144,128]{1,0:T(1,128)}', space=vmem, size = 0x12000, scoped, tag = 'internal scratch']
  #allocation2 [shape = 'bf16[16,32]{1,0:T(16,128)(2,1)}', space=vmem, size = 0x1000, scoped, tag = 'scratch operand']
  %s0 = inlined_call_operand.vmem [shape: f32[16,32], index: 0, kind: input, shape index: {}]
  %s1 = inlined_call_operand.vmem [shape: f32[1,32], index: 1, kind: input, shape index: {}]
  %s2 = inlined_call_operand.vmem [shape: f32[1,32], index: 2, kind: input, shape index: {}]
  %s3 = inlined_call_operand.vmem [shape: bf16[32,32], index: 3, kind: input, shape index: {}]
  %s4 = inlined_call_operand.vmem [shape: f32[1,32], index: 4, kind: input, shape index: {}]
  %s5 = inlined_call_operand.vmem [shape: bf16[16,32], index: 5, kind: output, shape index: {}]
  %s6 = sld [smem:[#allocation0]]
  $region34: #{decoder_forward.22} parent=0
    _
  %s8 = ssub.s32 1, %s6
  %s9 = scalar_select 0, %s8, %s6
  // Predicated region
  $region2: #{decoder_forward.22} parent=0 // pred_check
    _
  $region3: #{decoder_forward.22} parent=0 // pred_check_branch
    %11 = sbr.rel (0) target = $region5
  $region4: #{decoder_forward.22} parent=0 // pred_region
    _
  $region5: #{decoder_forward.22} parent=0 // pred_fallthru
    _
  // Predicated region
  $region6: #{decoder_forward.22} parent=0 // pred_check
    _
  $region7: #{decoder_forward.22} parent=0 // pred_check_branch
    %13 = sbr.rel (0) target = $region9
  $region8: #{decoder_forward.22} parent=0 // pred_region
    _
  $region9: #{decoder_forward.22} parent=0 // pred_fallthru
    _
  // Predicated region
  $region10: #{decoder_forward.22} parent=0 // pred_check
    _
  $region11: #{decoder_forward.22} parent=0 // pred_check_branch
    %15 = sbr.rel (0) target = $region13
  $region12: #{decoder_forward.22} parent=0 // pred_region
    _
  $region13: #{decoder_forward.22} parent=0 // pred_fallthru
    _
  // Predicated region
  $region14: #{decoder_forward.22} parent=0 // pred_check
    _
  $region15: #{decoder_forward.22} parent=0 // pred_check_branch
    %17 = sbr.rel (0) target = $region17
  $region16: #{decoder_forward.22} parent=0 // pred_region
    _
  $region17: #{decoder_forward.22} parent=0 // pred_fallthru
    _
  // Predicated region
  $region18: #{decoder_forward.22} parent=0 // pred_check
    _
  $region19: #{decoder_forward.22} parent=0 // pred_check_branch
    %19 = sbr.rel (0) target = $region21
  $region20: #{decoder_forward.22} parent=0 // pred_region
    _
  $region21: #{decoder_forward.22} parent=0 // pred_fallthru
    _
  %p21 = scmp.eq.s32.totalorder 0, 0
  // Predicated region
  $region22: #{decoder_forward.22} parent=0 // pred_check
    %p22 = pneg %p21
  $region23: #{decoder_forward.22} parent=0 // pred_check_branch
    %24 = sbr.rel (%p22) target = $region25
  $region24: #{decoder_forward.22} parent=0 // pred_region
    %v25 = vld [vmem:[%s0] sm:$0xff]
    %v26 = vld [vmem:[%s0 + $0x8] sm:$0xff]
    %v27 = vld [vmem:[%s1] sm:$0x1]
    %v28 = vld [vmem:[%s2] sm:$0x1]
    %vm29 = vcmask 261120
    %v30 = vsel %vm29, %v25, 0.0
    %31 = vadd.xlane.f32.xlu0 %v30
    %v32 = vpop.xlane.xlu0 %31
    %v33 = vsel %vm29, %v26, 0.0
    %34 = vadd.xlane.f32.xlu0 %v33
    %v35 = vpop.xlane.xlu0 %34
    %v36 = vrcp.pop 32.0
    %v37 = vmul.f32 %v32, %v36
    %v38 = vmul.f32 %v35, %v36
    %v39 = vmul.f32 %v25, %v25
    %v40 = vmul.f32 %v26, %v26
    %v41 = vsel %vm29, %v39, 0.0
    %42 = vadd.xlane.f32.xlu0 %v41
    %v43 = vpop.xlane.xlu0 %42
    %v44 = vsel %vm29, %v40, 0.0
    %45 = vadd.xlane.f32.xlu0 %v44
    %v46 = vpop.xlane.xlu0 %45
    %v47 = vmul.f32 %v43, %v36
    %v48 = vmul.f32 %v46, %v36
    %v49 = vmul.f32 %v37, %v37
    %v50 = vmul.f32 %v38, %v38
    %v51 = vsub.f32 %v47, %v49
    %v52 = vsub.f32 %v48, %v50
    %v53 = vsub.f32 %v25, %v37
    %v54 = vsub.f32 %v26, %v38
    %v55 = vadd.f32 %v51, 1e-05
    %v56 = vadd.f32 %v52, 1e-05
    %v57 = vrsqrt.pop %v55
    %v58 = vrsqrt.pop %v56
    %v59 = vmul.f32 %v53, %v57
    %v60 = vmul.f32 %v54, %v58
    %v62 = vlaneseq
    %v63 = vshrl.u32 %v62, 7
    %v64 = vsub.s32 0, %v63
    %v65 = vrot.slane %v27, %v64
    %v67 = vmul.f32 %v59, %v65
    %v68 = vmul.f32 %v60, %v65
    %v70 = vlaneseq
    %v71 = vshrl.u32 %v70, 7
    %v72 = vsub.s32 0, %v71
    %v73 = vrot.slane %v28, %v72
    %v75 = vadd.f32 %v67, %v73
    %v76 = vadd.f32 %v68, %v73
    %v77 = vpack.c.bf16 %v76, %v75
    %78 = vst.msk [vmem:[#allocation2] sm:$0xff] %vm29, %v77
  $region25: #{decoder_forward.22} parent=0 // pred_fallthru
    _
  %v79 = vld [vmem:[#allocation2] sm:$0xff]
  %v80 = vld [vmem:[%s3] sm:$0xf]
  %v81 = vld [vmem:[%s3 + $0x4] sm:$0xf]
  %v82 = vld [vmem:[%s3 + $0x8] sm:$0xf]
  %v83 = vld [vmem:[%s3 + $0xc] sm:$0xf]
  %v84 = vld [vmem:[%s4] sm:$0x1]
  %v86 = vlaneseq
  %v87 = vshrl.u32 %v86, 7
  %v88 = vsub.s32 0, %v87
  %v89 = vrot.slane %v84, %v88
  %v95 = vunpack.c.l.b16 %v80
  %v96 = vunpack.c.l.b16 %v81
  %v97 = vunpack.c.l.b16 %v82
  %v98 = vunpack.c.l.b16 %v83
  %v99 = vpack.c.b16 %v96, %v95
  %v100 = vpack.c.b16 %v98, %v97
  %vm103 = vcmask 261120
  %v105 = vsel %vm103, %v79, 0
  %107 = vmatprep.subr.bf16.mxu0 0
  %108 = vmatpush1.bf16.msra.mxu0 %v99
  %109 = vmatprep.subr.bf16.mxu0 0
  %110 = vmatpush1.bf16.msra.mxu0 %v100
  %111 = vmatprep.subr.bf16.mxu0 0
  %112 = vmatpush1.bf16.msra.mxu0 0
  %113 = vmatprep.subr.bf16.mxu0 0
  %114 = vmatpush1.bf16.msra.mxu0 0
  %115 = vmatprep.subr.bf16.mxu0 0
  %116 = vmatpush1.bf16.msra.mxu0 0
  %117 = vmatprep.subr.bf16.mxu0 0
  %118 = vmatpush1.bf16.msra.mxu0 0
  %119 = vmatprep.subr.bf16.mxu0 0
  %120 = vmatpush1.bf16.msra.mxu0 0
  %121 = vmatprep.subr.bf16.mxu0 0
  %122 = vmatpush1.bf16.msra.mxu0 0
  %123 = vmatprep.subr.bf16.mxu0 0
  %124 = vmatpush1.bf16.msra.mxu0 0
  %125 = vmatprep.subr.bf16.mxu0 0
  %126 = vmatpush1.bf16.msra.mxu0 0
  %127 = vmatprep.subr.bf16.mxu0 0
  %128 = vmatpush1.bf16.msra.mxu0 0
  %129 = vmatprep.subr.bf16.mxu0 0
  %130 = vmatpush1.bf16.msra.mxu0 0
  %131 = vmatprep.subr.bf16.mxu0 0
  %132 = vmatpush1.bf16.msra.mxu0 0
  %133 = vmatprep.subr.bf16.mxu0 0
  %134 = vmatpush1.bf16.msra.mxu0 0
  %135 = vmatprep.subr.bf16.mxu0 0
  %136 = vmatpush1.bf16.msra.mxu0 0
  %137 = vmatprep.subr.bf16.mxu0 0
  %138 = vmatpush1.bf16.msra.mxu0 0
  %139 = vmatprep.mubr.bf16.mxu0 0
  %140 = vmatmul.mubr.bf16.gmra.mrb[0].mxu0 %v105
  %v141 = vpop.f32.mrb[0].mxu0
  %v142 = vadd.f32 %v89, %v141
  %v143 = vpop.f32.mrb[0].mxu0
  %v144 = vpop.f32.mrb[0].mxu0
  %v145 = vadd.f32 %v89, %v144
  %v146 = vpop.f32.mrb[0].mxu0
  %147 = vdwg.mxu0
  %v148 = vpack.c.bf16 %v145, %v142
  %v150 = vunpack.c.l.b16 %v148
  %v151 = vunpack.c.h.b16 %v148
  %v152 = vpack.c.b16 %v150, %v150
  %v153 = vpack.c.b16 %v151, %v151
  %vm156 = vcmask 257024
  %157 = vst.msk [vmem:[%s5] sm:$0xf] %vm156, %v152
  %158 = vst.msk [vmem:[%s5 + $0x4] sm:$0xf] %vm156, %v153
  // Predicated region
  $region26: #{decoder_forward.22} parent=0 // pred_check
    _
  $region27: #{decoder_forward.22} parent=0 // pred_check_branch
    %160 = sbr.rel (0) target = $region29
  $region28: #{decoder_forward.22} parent=0 // pred_region
    _
  $region29: #{decoder_forward.22} parent=0 // pred_fallthru
    _
  // Predicated region
  $region30: #{decoder_forward.22} parent=0 // pred_check
    _
  $region31: #{decoder_forward.22} parent=0 // pred_check_branch
    %162 = sbr.rel (0) target = $region33
  $region32: #{decoder_forward.22} parent=0 // pred_region
    _
  $region33: #{decoder_forward.22} parent=0 // pred_fallthru
    _

// kernel: decoder_forward.20
$region0: #{decoder_forward.20}
  #allocation0 [shape = 'u32[]', space=smem, size = 0x4, offset = 0x4, fixed_abs, tag = 'smem constant byte address 0x4 - core index']
  #allocation1 [shape = 'u32[144,128]{1,0:T(1,128)}', space=vmem, size = 0x12000, scoped, tag = 'internal scratch']
  %s0 = inlined_call_operand.vmem [shape: bf16[2,8,3,32], index: 0, kind: input, shape index: {}]
  %s1 = inlined_call_operand.vmem [shape: bf16[2,8,32], index: 1, kind: output, shape index: {}]
  %s2 = sld [smem:[#allocation0]]
  $region37: #{decoder_forward.20} parent=0
    _
  %s4 = ssub.s32 1, %s2
  %s5 = scalar_select 0, %s4, %s2
  loop: start=0, step=1, limit=4
  $region2: #{decoder_forward.20} parent=0 // loop_pre_header
    _
  $region3: #{decoder_forward.20} parent=0 // loop_header
    %s7 = sphi 0, %s11
    %p8 = scmp.ge.s32.totalorder %s7, 4
    %s14 = sphi 0, %s26
    %s15 = sphi 0, %s22
    %s16 = sphi 0, %s14
    %s17 = sphi 0, %s15
    %s18 = sphi 0, %s16
    %s19 = sphi 0, %s17
    %s31 = sphi 0, %s33
    %s34 = sphi 0, %s31
    %s35 = sphi 0, %s34
    %s51 = sphi 0, %s35
    %s59 = sphi 0, %s61
    %s62 = sphi 0, %s59
    %s63 = sphi 0, %s62
    %s79 = sphi 0, %s63
  $region4: #{decoder_forward.20} parent=0 // loop_header_branch
    %10 = sbr.rel (%p8) target = $region8
  $region5: #{decoder_forward.20} parent=0 // loop_body
    %s12 = ssub.s32 %s7, 1
    %s13 = ssub.s32 %s7, 2
    %s20 = sadd.s32 1, %s15
    %p21 = scmp.ge.s32.totalorder %s20, 1
    %s22 = scalar_select %p21, 0, %s20
    %s23 = sadd.s32 1, %s14
    %s24 = scalar_select %p21, %s23, %s14
    %p25 = scmp.ge.s32.totalorder %s24, 2
    %s26 = scalar_select %p25, 0, %s24
    %s27 = ssub.s32 %s14, %s26
    %s28 = ssub.s32 %s15, %s22
    %s29 = sor.u32 %s27, %s28
    %p30 = scmp.eq.s32.totalorder %s29, 0
    %s32 = sadd.s32 %s31, 1
    %s33 = scalar_select %p30, %s31, %s32
    %p36 = pneg %p30
    %p37 = scmp.eq.s32.totalorder %s7, 1
    %p38 = por %p36, %p37
    %p39 = scmp.ne.s32.totalorder %s31, %s34
    %p40 = scmp.eq.s32.totalorder %s7, 0
    %p41 = por %p39, %p40
    %p42 = scmp.ne.s32.totalorder %s31, %s34
    %p43 = scmp.eq.s32.totalorder %s12, 1
    %p44 = por %p42, %p43
    %p45 = scmp.ne.s32.totalorder %s34, %s35
    %p46 = scmp.eq.s32.totalorder %s12, 0
    %p47 = por %p45, %p46
    %p48 = scmp.ne.s32.totalorder %s34, %s35
    %p49 = scmp.eq.s32.totalorder %s13, 1
    %p50 = por %p48, %p49
    %p52 = scmp.ne.s32.totalorder %s35, %s51
    %p53 = scmp.eq.s32.totalorder %s13, 0
    %p54 = por %p52, %p53
    %s55 = ssub.s32 %s14, %s26
    %s56 = ssub.s32 %s15, %s22
    %s57 = sor.u32 %s55, %s56
    %p58 = scmp.eq.s32.totalorder %s57, 0
    %s60 = sadd.s32 %s59, 1
    %s61 = scalar_select %p58, %s59, %s60
    %p64 = pneg %p58
    %p65 = scmp.eq.s32.totalorder %s7, 1
    %p66 = por %p64, %p65
    %p67 = scmp.ne.s32.totalorder %s59, %s62
    %p68 = scmp.eq.s32.totalorder %s7, 0
    %p69 = por %p67, %p68
    %p70 = scmp.ne.s32.totalorder %s59, %s62
    %p71 = scmp.eq.s32.totalorder %s12, 1
    %p72 = por %p70, %p71
    %p73 = scmp.ne.s32.totalorder %s62, %s63
    %p74 = scmp.eq.s32.totalorder %s12, 0
    %p75 = por %p73, %p74
    %p76 = scmp.ne.s32.totalorder %s62, %s63
    %p77 = scmp.eq.s32.totalorder %s13, 1
    %p78 = por %p76, %p77
    %p80 = scmp.ne.s32.totalorder %s63, %s79
    %p81 = scmp.eq.s32.totalorder %s13, 0
    %p82 = por %p80, %p81
    %p83 = scmp.le.s32.totalorder 1, %s7
    %p84 = scmp.lt.s32.totalorder %s7, 3
    %p85 = pnand %p83, %p84
    %p86 = pneg %p85
    // Predicated region
    $region9: #{decoder_forward.20} parent=5 // pred_check
      _
    $region10: #{decoder_forward.20} parent=5 // pred_check_branch
      %88 = sbr.rel (%p85) target = $region12
    $region11: #{decoder_forward.20} parent=5 // pred_region
      %s89 = ssub.s32 %s7, 1
    $region12: #{decoder_forward.20} parent=5 // pred_fallthru
      _
    %p90 = scmp.lt.s32.totalorder %s7, 2
    // Predicated region
    $region13: #{decoder_forward.20} parent=5 // pred_check
      %p91 = pneg %p90
    $region14: #{decoder_forward.20} parent=5 // pred_check_branch
      %93 = sbr.rel (%p91) target = $region16
    $region15: #{decoder_forward.20} parent=5 // pred_region
      // Predicated region
      $region17: #{decoder_forward.20} parent=15 // pred_check
        %p94 = pneg %p41
      $region18: #{decoder_forward.20} parent=15 // pred_check_branch
        %96 = sbr.rel (%p94) target = $region20
      $region19: #{decoder_forward.20} parent=15 // pred_region
        %p97 = scmp.lt.s32.totalorder %s14, 1
        %s98 = scalar_select %p97, %s14, 1
        %p99 = scmp.lt.s32.totalorder %s15, 0
        %s100 = scalar_select %p99, %s15, 0
        %s101 = smul.addr %s98, 8
        %s102 = sadd.s32 %s100, %s101
        %s103 = smul.addr %s102, 2
        %s104 = scalar_lea.vmem %s0, %s103
      $region20: #{decoder_forward.20} parent=15 // pred_fallthru
        _
    $region16: #{decoder_forward.20} parent=5 // pred_fallthru
      _
    %p105 = scmp.le.s32.totalorder 1, %s7
    %p106 = scmp.lt.s32.totalorder %s7, 3
    %p107 = pnand %p105, %p106
    %p108 = pneg %p107
    // Predicated region
    $region21: #{decoder_forward.20} parent=5 // pred_check
      _
    $region22: #{decoder_forward.20} parent=5 // pred_check_branch
      %110 = sbr.rel (%p107) target = $region24
    $region23: #{decoder_forward.20} parent=5 // pred_region
      %s111 = ssub.s32 %s7, 1
      %p112 = scmp.lt.s32.totalorder %s16, 1
      %s113 = scalar_select %p112, %s16, 1
      %p114 = scmp.lt.s32.totalorder %s17, 0
      %s115 = scalar_select %p114, %s17, 0
      %s116 = smul.addr %s113, 8
      %s117 = sadd.s32 %s115, %s116
      %s118 = smul.addr %s117, 2
      %s119 = scalar_lea.vmem %s0, %s118
      %p120 = pneg %p47
      %p121 = pneg %p44
      %p122 = pneg %p75
      %p123 = pneg %p72
      %p124 = scmp.lt.s32.totalorder %s16, 1
      %s125 = scalar_select %p124, %s16, 1
      %p126 = scmp.lt.s32.totalorder %s17, 0
      %s127 = scalar_select %p126, %s17, 0
      %s128 = sadd.s32 %s127, %s125
      %s129 = smul.addr %s128, 4
      %s130 = scalar_lea.vmem %s1, %s129
      %p131 = scmp.lt.s32.totalorder %s16, 1
      %s132 = scalar_select %p131, %s16, 1
      %p133 = scmp.lt.s32.totalorder %s17, 0
      %s134 = scalar_select %p133, %s17, 0
      %s135 = smul.addr %s132, 8
      %s136 = sadd.s32 %s134, %s135
      %s137 = smul.addr %s136, 2
      %s138 = scalar_lea.vmem %s0, %s137
      %p139 = scmp.lt.s32.totalorder %s16, 1
      %s140 = scalar_select %p139, %s16, 1
      %p141 = scmp.lt.s32.totalorder %s17, 0
      %s142 = scalar_select %p141, %s17, 0
      %s143 = sadd.s32 %s142, %s140
      %s144 = smul.addr %s143, 4
      %s145 = scalar_lea.vmem %s1, %s144
      %v147 = vlaneseq
      %v148 = vshrl.u32 %v147, 7
      %v149 = vlaneseq
      %v150 = vand.u32 %v149, 127
      %vm151 = vcmp.le.s32.totalorder %v150, %v148
      %v152 = vsel %vm151, 0.0, -1e+30
      %v153 = vld [vmem:[%s138] sm:$0x1]
      %v154 = vld [vmem:[%s138 + $0x2] sm:$0x1]
      %v155 = vld [vmem:[%s138 + $0x4] sm:$0x1]
      %v156 = vld [vmem:[%s138 + $0x6] sm:$0x1]
      %v157 = vld [vmem:[%s138 + $0x8] sm:$0x1]
      %v158 = vld [vmem:[%s138 + $0xa] sm:$0x1]
      %v159 = vld [vmem:[%s138 + $0xc] sm:$0x1]
      %v160 = vld [vmem:[%s138 + $0xe] sm:$0x1]
      %v161 = vld [vmem:[%s138] sm:$0x2]
      %v162 = vld [vmem:[%s138 + $0x2] sm:$0x2]
      %v163 = vld [vmem:[%s138 + $0x4] sm:$0x2]
      %v164 = vld [vmem:[%s138 + $0x6] sm:$0x2]
      %v165 = vld [vmem:[%s138 + $0x8] sm:$0x2]
      %v166 = vld [vmem:[%s138 + $0xa] sm:$0x2]
      %v167 = vld [vmem:[%s138 + $0xc] sm:$0x2]
      %v168 = vld [vmem:[%s138 + $0xe] sm:$0x2]
      %v178 = vunpack.c.l.s4 1983009808
      %v179 = vunpack.c.0.s8 %v178
      %v180 = vlaneseq
      %v181 = vshrl.u32 %v180, 7
      %v182 = vsub.s32 %v179, %v181
      %v183 = vrot.slane %v153, %v182
      %v185 = vunpack.c.l.s4 1983009808
      %v186 = vunpack.c.0.s8 %v185
      %v187 = vlaneseq
      %v188 = vshrl.u32 %v187, 7
      %v189 = vsub.s32 %v186, %v188
      %v190 = vrot.slane %v154, %v189
      %v192 = vunpack.c.l.s4 1983009808
      %v193 = vunpack.c.0.s8 %v192
      %v194 = vlaneseq
      %v195 = vshrl.u32 %v194, 7
      %v196 = vsub.s32 %v193, %v195
      %v197 = vrot.slane %v155, %v196
      %v199 = vunpack.c.l.s4 1983009808
      %v200 = vunpack.c.0.s8 %v199
      %v201 = vlaneseq
      %v202 = vshrl.u32 %v201, 7
      %v203 = vsub.s32 %v200, %v202
      %v204 = vrot.slane %v156, %v203
      %v206 = vunpack.c.l.s4 1983009808
      %v207 = vunpack.c.0.s8 %v206
      %v208 = vlaneseq
      %v209 = vshrl.u32 %v208, 7
      %v210 = vsub.s32 %v207, %v209
      %v211 = vrot.slane %v157, %v210
      %v213 = vunpack.c.l.s4 1983009808
      %v214 = vunpack.c.0.s8 %v213
      %v215 = vlaneseq
      %v216 = vshrl.u32 %v215, 7
      %v217 = vsub.s32 %v214, %v216
      %v218 = vrot.slane %v158, %v217
      %v220 = vunpack.c.l.s4 1983009808
      %v221 = vunpack.c.0.s8 %v220
      %v222 = vlaneseq
      %v223 = vshrl.u32 %v222, 7
      %v224 = vsub.s32 %v221, %v223
      %v225 = vrot.slane %v159, %v224
      %v227 = vunpack.c.l.s4 1983009808
      %v228 = vunpack.c.0.s8 %v227
      %v229 = vlaneseq
      %v230 = vshrl.u32 %v229, 7
      %v231 = vsub.s32 %v228, %v230
      %v232 = vrot.slane %v160, %v231
      %v233 = vunpack.c.l.b16 %v183
      %v234 = vunpack.c.l.b16 %v190
      %v235 = vunpack.c.l.b16 %v197
      %v236 = vunpack.c.l.b16 %v204
      %v237 = vunpack.c.l.b16 %v211
      %v238 = vunpack.c.l.b16 %v218
      %v239 = vunpack.c.l.b16 %v225
      %v240 = vunpack.c.l.b16 %v232
      %v241 = vrot.slane %v234, 7
      %vm242 = vcmask 1041409
      %v243 = vsel %vm242, %v241, %v233
      %v244 = vrot.slane %v235, 6
      %vm245 = vcmask 1042434
      %v246 = vsel %vm245, %v244, %v243
      %v247 = vrot.slane %v236, 5
      %vm248 = vcmask 1043459
      %v249 = vsel %vm248, %v247, %v246
      %v250 = vrot.slane %v237, 4
      %vm251 = vcmask 1044484
      %v252 = vsel %vm251, %v250, %v249
      %v253 = vrot.slane %v238, 3
      %vm254 = vcmask 1045509
      %v255 = vsel %vm254, %v253, %v252
      %v256 = vrot.slane %v239, 2
      %vm257 = vcmask 1046534
      %v258 = vsel %vm257, %v256, %v255
      %v259 = vrot.slane %v240, 1
      %vm260 = vcmask 1047559
      %v261 = vsel %vm260, %v259, %v258
      %v262 = vpack.c.b16 %v261, %v261
      %v263 = vrot.slane %v233, 1
      %v264 = vsel %vm242, %v234, %v263
      %v265 = vrot.slane %v235, 7
      %v266 = vsel %vm245, %v265, %v264
      %v267 = vrot.slane %v236, 6
      %v268 = vsel %vm248, %v267, %v266
      %v269 = vrot.slane %v237, 5
      %v270 = vsel %vm251, %v269, %v268
      %v271 = vrot.slane %v238, 4
      %v272 = vsel %vm254, %v271, %v270
      %v273 = vrot.slane %v239, 3
      %v274 = vsel %vm257, %v273, %v272
      %v275 = vrot.slane %v240, 2
      %v276 = vsel %vm260, %v275, %v274
      %v277 = vpack.c.b16 %v276, %v276
      %vm278 = vcmask 64512
      %v280 = vsel %vm278, %v262, 0
      %v283 = vsel %vm278, %v277, 0
      %285 = vmatprep.subr.bf16.mxu0 0
      %286 = vmatpush1.bf16.xpose.msra.mxu0 %v283
      %287 = vmatprep.subr.bf16.mxu0 0
      %288 = vmatpush1.bf16.xpose.msra.mxu0 0
      %289 = vmatprep.subr.bf16.mxu0 0
      %290 = vmatpush1.bf16.xpose.msra.mxu0 0
      %291 = vmatprep.subr.bf16.mxu0 0
      %292 = vmatpush1.bf16.xpose.msra.mxu0 0
      %293 = vmatprep.subr.bf16.mxu0 0
      %294 = vmatpush1.bf16.xpose.msra.mxu0 0
      %295 = vmatprep.subr.bf16.mxu0 0
      %296 = vmatpush1.bf16.xpose.msra.mxu0 0
      %297 = vmatprep.subr.bf16.mxu0 0
      %298 = vmatpush1.bf16.xpose.msra.mxu0 0
      %299 = vmatprep.subr.bf16.mxu0 0
      %300 = vmatpush1.bf16.xpose.msra.mxu0 0
      %301 = vmatprep.subr.bf16.mxu0 0
      %302 = vmatpush1.bf16.xpose.msra.mxu0 0
      %303 = vmatprep.subr.bf16.mxu0 0
      %304 = vmatpush1.bf16.xpose.msra.mxu0 0
      %305 = vmatprep.subr.bf16.mxu0 0
      %306 = vmatpush1.bf16.xpose.msra.mxu0 0
      %307 = vmatprep.subr.bf16.mxu0 0
      %308 = vmatpush1.bf16.xpose.msra.mxu0 0
      %309 = vmatprep.subr.bf16.mxu0 0
      %310 = vmatpush1.bf16.xpose.msra.mxu0 0
      %311 = vmatprep.subr.bf16.mxu0 0
      %312 = vmatpush1.bf16.xpose.msra.mxu0 0
      %313 = vmatprep.subr.bf16.mxu0 0
      %314 = vmatpush1.bf16.xpose.msra.mxu0 0
      %315 = vmatprep.subr.bf16.mxu0 0
      %316 = vmatpush1.bf16.xpose.msra.mxu0 0
      %317 = vmatprep.mubr.bf16.mxu0 0
      %318 = vmatmul.mubr.bf16.gmra.mrb[0].mxu0 %v280
      %v319 = vpop.f32.mrb[0].mxu0
      %v320 = vadd.f32 %v152, %v319
      %v321 = vpop.f32.mrb[0].mxu0
      %v322 = vpop.f32.mrb[0].mxu0
      %v323 = vpop.f32.mrb[0].mxu0
      %324 = vdwg.mxu0
      %v325 = vsel %vm278, %v320, -inf
      %326 = vmax.xlane.f32.xlu0 %v325
      %v327 = vpop.xlane.xlu0 %326
      %v328 = vsub.f32 %v320, %v327
      %v329 = vmul.f32 %v328, 1.442695
      %v330 = vpow.pop %v329
      %v331 = vsel %vm278, %v330, 0.0
      %332 = vadd.xlane.f32.xlu0 %v331
      %v333 = vpop.xlane.xlu0 %332
      %v334 = vpack.c.bf16 %v330, %v330
      %v344 = vunpack.c.l.s4 1983009808
      %v345 = vunpack.c.0.s8 %v344
      %v346 = vlaneseq
      %v347 = vshrl.u32 %v346, 7
      %v348 = vsub.s32 %v345, %v347
      %v349 = vrot.slane %v161, %v348
      %v351 = vunpack.c.l.s4 1983009808
      %v352 = vunpack.c.0.s8 %v351
      %v353 = vlaneseq
      %v354 = vshrl.u32 %v353, 7
      %v355 = vsub.s32 %v352, %v354
      %v356 = vrot.slane %v162, %v355
      %v358 = vunpack.c.l.s4 1983009808
      %v359 = vunpack.c.0.s8 %v358
      %v360 = vlaneseq
      %v361 = vshrl.u32 %v360, 7
      %v362 = vsub.s32 %v359, %v361
      %v363 = vrot.slane %v163, %v362
      %v365 = vunpack.c.l.s4 1983009808
      %v366 = vunpack.c.0.s8 %v365
      %v367 = vlaneseq
      %v368 = vshrl.u32 %v367, 7
      %v369 = vsub.s32 %v366, %v368
      %v370 = vrot.slane %v164, %v369
      %v372 = vunpack.c.l.s4 1983009808
      %v373 = vunpack.c.0.s8 %v372
      %v374 = vlaneseq
      %v375 = vshrl.u32 %v374, 7
      %v376 = vsub.s32 %v373, %v375
      %v377 = vrot.slane %v165, %v376
      %v379 = vunpack.c.l.s4 1983009808
      %v380 = vunpack.c.0.s8 %v379
      %v381 = vlaneseq
      %v382 = vshrl.u32 %v381, 7
      %v383 = vsub.s32 %v380, %v382
      %v384 = vrot.slane %v166, %v383
      %v386 = vunpack.c.l.s4 1983009808
      %v387 = vunpack.c.0.s8 %v386
      %v388 = vlaneseq
      %v389 = vshrl.u32 %v388, 7
      %v390 = vsub.s32 %v387, %v389
      %v391 = vrot.slane %v167, %v390
      %v393 = vunpack.c.l.s4 1983009808
      %v394 = vunpack.c.0.s8 %v393
      %v395 = vlaneseq
      %v396 = vshrl.u32 %v395, 7
      %v397 = vsub.s32 %v394, %v396
      %v398 = vrot.slane %v168, %v397
      %v399 = vunpack.c.l.b16 %v349
      %v400 = vunpack.c.l.b16 %v356
      %v401 = vunpack.c.l.b16 %v363
      %v402 = vunpack.c.l.b16 %v370
      %v403 = vunpack.c.l.b16 %v377
      %v404 = vunpack.c.l.b16 %v384
      %v405 = vunpack.c.l.b16 %v391
      %v406 = vunpack.c.l.b16 %v398
      %v407 = vrot.slane %v399, 2
      %v408 = vrot.slane %v400, 1
      %v409 = vsel %vm242, %v408, %v407
      %v410 = vsel %vm245, %v401, %v409
      %v411 = vrot.slane %v402, 7
      %v412 = vsel %vm248, %v411, %v410
      %v413 = vrot.slane %v403, 6
      %v414 = vsel %vm251, %v413, %v412
      %v415 = vrot.slane %v404, 5
      %v416 = vsel %vm254, %v415, %v414
      %v417 = vrot.slane %v405, 4
      %v418 = vsel %vm257, %v417, %v416
      %v419 = vrot.slane %v406, 3
      %v420 = vsel %vm260, %v419, %v418
      %v421 = vpack.c.b16 %v420, %v420
      %v423 = vsel %vm278, %v334, 0
      %vm425 = vcmask 1043456
      %v427 = vsel %vm425, %v421, 0
      %429 = vmatprep.subr.bf16.mxu0 0
      %430 = vmatpush1.bf16.msra.mxu0 %v427
      %431 = vmatprep.subr.bf16.mxu0 0
      %432 = vmatpush1.bf16.msra.mxu0 0
      %433 = vmatprep.subr.bf16.mxu0 0
      %434 = vmatpush1.bf16.msra.mxu0 0
      %435 = vmatprep.subr.bf16.mxu0 0
      %436 = vmatpush1.bf16.msra.mxu0 0
      %437 = vmatprep.subr.bf16.mxu0 0
      %438 = vmatpush1.bf16.msra.mxu0 0
      %439 = vmatprep.subr.bf16.mxu0 0
      %440 = vmatpush1.bf16.msra.mxu0 0
      %441 = vmatprep.subr.bf16.mxu0 0
      %442 = vmatpush1.bf16.msra.mxu0 0
      %443 = vmatprep.subr.bf16.mxu0 0
      %444 = vmatpush1.bf16.msra.mxu0 0
      %445 = vmatprep.subr.bf16.mxu0 0
      %446 = vmatpush1.bf16.msra.mxu0 0
      %447 = vmatprep.subr.bf16.mxu0 0
      %448 = vmatpush1.bf16.msra.mxu0 0
      %449 = vmatprep.subr.bf16.mxu0 0
      %450 = vmatpush1.bf16.msra.mxu0 0
      %451 = vmatprep.subr.bf16.mxu0 0
      %452 = vmatpush1.bf16.msra.mxu0 0
      %453 = vmatprep.subr.bf16.mxu0 0
      %454 = vmatpush1.bf16.msra.mxu0 0
      %455 = vmatprep.subr.bf16.mxu0 0
      %456 = vmatpush1.bf16.msra.mxu0 0
      %457 = vmatprep.subr.bf16.mxu0 0
      %458 = vmatpush1.bf16.msra.mxu0 0
      %459 = vmatprep.subr.bf16.mxu0 0
      %460 = vmatpush1.bf16.msra.mxu0 0
      %461 = vmatprep.mubr.bf16.mxu0 0
      %462 = vmatmul.mubr.bf16.gmra.mrb[0].mxu0 %v423
      %v463 = vpop.f32.mrb[0].mxu0
      %v464 = vadd.f32 0.0, %v463
      %v465 = vpop.f32.mrb[0].mxu0
      %v466 = vpop.f32.mrb[0].mxu0
      %v467 = vpop.f32.mrb[0].mxu0
      %468 = vdwg.mxu0
      %v469 = vrcp.pop %v333
      %v470 = vmul.f32 %v464, %v469
      %v471 = vpack.c.bf16 %v470, %v470
      %vm472 = vcmask 60416
      %473 = vst.msk [vmem:[%s145] sm:$0xf] %vm472, %v471
      %v474 = vld [vmem:[%s138] sm:$0x1]
      %v475 = vld [vmem:[%s138 + $0x2] sm:$0x1]
      %v476 = vld [vmem:[%s138 + $0x4] sm:$0x1]
      %v477 = vld [vmem:[%s138 + $0x6] sm:$0x1]
      %v478 = vld [vmem:[%s138 + $0x8] sm:$0x1]
      %v479 = vld [vmem:[%s138 + $0xa] sm:$0x1]
      %v480 = vld [vmem:[%s138 + $0xc] sm:$0x1]
      %v481 = vld [vmem:[%s138 + $0xe] sm:$0x1]
      %v482 = vld [vmem:[%s138] sm:$0x2]
      %v483 = vld [vmem:[%s138 + $0x2] sm:$0x2]
      %v484 = vld [vmem:[%s138 + $0x4] sm:$0x2]
      %v485 = vld [vmem:[%s138 + $0x6] sm:$0x2]
      %v486 = vld [vmem:[%s138 + $0x8] sm:$0x2]
      %v487 = vld [vmem:[%s138 + $0xa] sm:$0x2]
      %v488 = vld [vmem:[%s138 + $0xc] sm:$0x2]
      %v489 = vld [vmem:[%s138 + $0xe] sm:$0x2]
      %v499 = vunpack.c.l.s4 1983009808
      %v500 = vunpack.c.0.s8 %v499
      %v501 = vlaneseq
      %v502 = vshrl.u32 %v501, 7
      %v503 = vsub.s32 %v500, %v502
      %v504 = vrot.slane %v474, %v503
      %v506 = vunpack.c.l.s4 1983009808
      %v507 = vunpack.c.0.s8 %v506
      %v508 = vlaneseq
      %v509 = vshrl.u32 %v508, 7
      %v510 = vsub.s32 %v507, %v509
      %v511 = vrot.slane %v475, %v510
      %v513 = vunpack.c.l.s4 1983009808
      %v514 = vunpack.c.0.s8 %v513
      %v515 = vlaneseq
      %v516 = vshrl.u32 %v515, 7
      %v517 = vsub.s32 %v514, %v516
      %v518 = vrot.slane %v476, %v517
      %v520 = vunpack.c.l.s4 1983009808
      %v521 = vunpack.c.0.s8 %v520
      %v522 = vlaneseq
      %v523 = vshrl.u32 %v522, 7
      %v524 = vsub.s32 %v521, %v523
      %v525 = vrot.slane %v477, %v524
      %v527 = vunpack.c.l.s4 1983009808
      %v528 = vunpack.c.0.s8 %v527
      %v529 = vlaneseq
      %v530 = vshrl.u32 %v529, 7
      %v531 = vsub.s32 %v528, %v530
      %v532 = vrot.slane %v478, %v531
      %v534 = vunpack.c.l.s4 1983009808
      %v535 = vunpack.c.0.s8 %v534
      %v536 = vlaneseq
      %v537 = vshrl.u32 %v536, 7
      %v538 = vsub.s32 %v535, %v537
      %v539 = vrot.slane %v479, %v538
      %v541 = vunpack.c.l.s4 1983009808
      %v542 = vunpack.c.0.s8 %v541
      %v543 = vlaneseq
      %v544 = vshrl.u32 %v543, 7
      %v545 = vsub.s32 %v542, %v544
      %v546 = vrot.slane %v480, %v545
      %v548 = vunpack.c.l.s4 1983009808
      %v549 = vunpack.c.0.s8 %v548
      %v550 = vlaneseq
      %v551 = vshrl.u32 %v550, 7
      %v552 = vsub.s32 %v549, %v551
      %v553 = vrot.slane %v481, %v552
      %v554 = vunpack.c.l.b16 %v504
      %v555 = vunpack.c.l.b16 %v511
      %v556 = vunpack.c.l.b16 %v518
      %v557 = vunpack.c.l.b16 %v525
      %v558 = vunpack.c.l.b16 %v532
      %v559 = vunpack.c.l.b16 %v539
      %v560 = vunpack.c.l.b16 %v546
      %v561 = vunpack.c.l.b16 %v553
      %v562 = vrot.slane %v555, 7
      %v563 = vsel %vm242, %v562, %v554
      %v564 = vrot.slane %v556, 6
      %v565 = vsel %vm245, %v564, %v563
      %v566 = vrot.slane %v557, 5
      %v567 = vsel %vm248, %v566, %v565
      %v568 = vrot.slane %v558, 4
      %v569 = vsel %vm251, %v568, %v567
      %v570 = vrot.slane %v559, 3
      %v571 = vsel %vm254, %v570, %v569
      %v572 = vrot.slane %v560, 2
      %v573 = vsel %vm257, %v572, %v571
      %v574 = vrot.slane %v561, 1
      %v575 = vsel %vm260, %v574, %v573
      %v576 = vpack.c.b16 %v575, %v575
      %577 = vrot.lane.b32.xlu0 %v576, 120
      %v578 = vpop.permute.xlu0 %577
      %v579 = vrot.slane %v554, 1
      %v580 = vsel %vm242, %v555, %v579
      %v581 = vrot.slane %v556, 7
      %v582 = vsel %vm245, %v581, %v580
      %v583 = vrot.slane %v557, 6
      %v584 = vsel %vm248, %v583, %v582
      %v585 = vrot.slane %v558, 5
      %v586 = vsel %vm251, %v585, %v584
      %v587 = vrot.slane %v559, 4
      %v588 = vsel %vm254, %v587, %v586
      %v589 = vrot.slane %v560, 3
      %v590 = vsel %vm257, %v589, %v588
      %v591 = vrot.slane %v561, 2
      %v592 = vsel %vm260, %v591, %v590
      %v593 = vpack.c.b16 %v592, %v592
      %594 = vrot.lane.b32.xlu0 %v593, 120
      %v595 = vpop.permute.xlu0 %594
      %v597 = vsel %vm278, %v578, 0
      %v600 = vsel %vm278, %v595, 0
      %602 = vmatprep.subr.bf16.mxu0 0
      %603 = vmatpush1.bf16.xpose.msra.mxu0 %v600
      %604 = vmatprep.subr.bf16.mxu0 0
      %605 = vmatpush1.bf16.xpose.msra.mxu0 0
      %606 = vmatprep.subr.bf16.mxu0 0
      %607 = vmatpush1.bf16.xpose.msra.mxu0 0
      %608 = vmatprep.subr.bf16.mxu0 0
      %609 = vmatpush1.bf16.xpose.msra.mxu0 0
      %610 = vmatprep.subr.bf16.mxu0 0
      %611 = vmatpush1.bf16.xpose.msra.mxu0 0
      %612 = vmatprep.subr.bf16.mxu0 0
      %613 = vmatpush1.bf16.xpose.msra.mxu0 0
      %614 = vmatprep.subr.bf16.mxu0 0
      %615 = vmatpush1.bf16.xpose.msra.mxu0 0
      %616 = vmatprep.subr.bf16.mxu0 0
      %617 = vmatpush1.bf16.xpose.msra.mxu0 0
      %618 = vmatprep.subr.bf16.mxu0 0
      %619 = vmatpush1.bf16.xpose.msra.mxu0 0
      %620 = vmatprep.subr.bf16.mxu0 0
      %621 = vmatpush1.bf16.xpose.msra.mxu0 0
      %622 = vmatprep.subr.bf16.mxu0 0
      %623 = vmatpush1.bf16.xpose.msra.mxu0 0
      %624 = vmatprep.subr.bf16.mxu0 0
      %625 = vmatpush1.bf16.xpose.msra.mxu0 0
      %626 = vmatprep.subr.bf16.mxu0 0
      %627 = vmatpush1.bf16.xpose.msra.mxu0 0
      %628 = vmatprep.subr.bf16.mxu0 0
      %629 = vmatpush1.bf16.xpose.msra.mxu0 0
      %630 = vmatprep.subr.bf16.mxu0 0
      %631 = vmatpush1.bf16.xpose.msra.mxu0 0
      %632 = vmatprep.subr.bf16.mxu0 0
      %633 = vmatpush1.bf16.xpose.msra.mxu0 0
      %634 = vmatprep.mubr.bf16.mxu0 0
      %635 = vmatmul.mubr.bf16.gmra.mrb[0].mxu0 %v597
      %v636 = vpop.f32.mrb[0].mxu0
      %v637 = vadd.f32 %v152, %v636
      %v638 = vpop.f32.mrb[0].mxu0
      %v639 = vpop.f32.mrb[0].mxu0
      %v640 = vpop.f32.mrb[0].mxu0
      %641 = vdwg.mxu0
      %v642 = vsel %vm278, %v637, -inf
      %643 = vmax.xlane.f32.xlu0 %v642
      %v644 = vpop.xlane.xlu0 %643
      %v645 = vsub.f32 %v637, %v644
      %v646 = vmul.f32 %v645, 1.442695
      %v647 = vpow.pop %v646
      %v648 = vsel %vm278, %v647, 0.0
      %649 = vadd.xlane.f32.xlu0 %v648
      %v650 = vpop.xlane.xlu0 %649
      %v651 = vpack.c.bf16 %v647, %v647
      %v661 = vunpack.c.l.s4 1983009808
      %v662 = vunpack.c.0.s8 %v661
      %v663 = vlaneseq
      %v664 = vshrl.u32 %v663, 7
      %v665 = vsub.s32 %v662, %v664
      %v666 = vrot.slane %v482, %v665
      %v668 = vunpack.c.l.s4 1983009808
      %v669 = vunpack.c.0.s8 %v668
      %v670 = vlaneseq
      %v671 = vshrl.u32 %v670, 7
      %v672 = vsub.s32 %v669, %v671
      %v673 = vrot.slane %v483, %v672
      %v675 = vunpack.c.l.s4 1983009808
      %v676 = vunpack.c.0.s8 %v675
      %v677 = vlaneseq
      %v678 = vshrl.u32 %v677, 7
      %v679 = vsub.s32 %v676, %v678
      %v680 = vrot.slane %v484, %v679
      %v682 = vunpack.c.l.s4 1983009808
      %v683 = vunpack.c.0.s8 %v682
      %v684 = vlaneseq
      %v685 = vshrl.u32 %v684, 7
      %v686 = vsub.s32 %v683, %v685
      %v687 = vrot.slane %v485, %v686
      %v689 = vunpack.c.l.s4 1983009808
      %v690 = vunpack.c.0.s8 %v689
      %v691 = vlaneseq
      %v692 = vshrl.u32 %v691, 7
      %v693 = vsub.s32 %v690, %v692
      %v694 = vrot.slane %v486, %v693
      %v696 = vunpack.c.l.s4 1983009808
      %v697 = vunpack.c.0.s8 %v696
      %v698 = vlaneseq
      %v699 = vshrl.u32 %v698, 7
      %v700 = vsub.s32 %v697, %v699
      %v701 = vrot.slane %v487, %v700
      %v703 = vunpack.c.l.s4 1983009808
      %v704 = vunpack.c.0.s8 %v703
      %v705 = vlaneseq
      %v706 = vshrl.u32 %v705, 7
      %v707 = vsub.s32 %v704, %v706
      %v708 = vrot.slane %v488, %v707
      %v710 = vunpack.c.l.s4 1983009808
      %v711 = vunpack.c.0.s8 %v710
      %v712 = vlaneseq
      %v713 = vshrl.u32 %v712, 7
      %v714 = vsub.s32 %v711, %v713
      %v715 = vrot.slane %v489, %v714
      %v716 = vunpack.c.l.b16 %v666
      %v717 = vunpack.c.l.b16 %v673
      %v718 = vunpack.c.l.b16 %v680
      %v719 = vunpack.c.l.b16 %v687
      %v720 = vunpack.c.l.b16 %v694
      %v721 = vunpack.c.l.b16 %v701
      %v722 = vunpack.c.l.b16 %v708
      %v723 = vunpack.c.l.b16 %v715
      %v724 = vrot.slane %v716, 2
      %v725 = vrot.slane %v717, 1
      %v726 = vsel %vm242, %v725, %v724
      %v727 = vsel %vm245, %v718, %v726
      %v728 = vrot.slane %v719, 7
      %v729 = vsel %vm248, %v728, %v727
      %v730 = vrot.slane %v720, 6
      %v731 = vsel %vm251, %v730, %v729
      %v732 = vrot.slane %v721, 5
      %v733 = vsel %vm254, %v732, %v731
      %v734 = vrot.slane %v722, 4
      %v735 = vsel %vm257, %v734, %v733
      %v736 = vrot.slane %v723, 3
      %v737 = vsel %vm260, %v736, %v735
      %v738 = vpack.c.b16 %v737, %v737
      %739 = vrot.lane.b32.xlu0 %v738, 120
      %v740 = vpop.permute.xlu0 %739
      %v742 = vsel %vm278, %v651, 0
      %v745 = vsel %vm425, %v740, 0
      %747 = vmatprep.subr.bf16.mxu0 0
      %748 = vmatpush1.bf16.msra.mxu0 %v745
      %749 = vmatprep.subr.bf16.mxu0 0
      %750 = vmatpush1.bf16.msra.mxu0 0
      %751 = vmatprep.subr.bf16.mxu0 0
      %752 = vmatpush1.bf16.msra.mxu0 0
      %753 = vmatprep.subr.bf16.mxu0 0
      %754 = vmatpush1.bf16.msra.mxu0 0
      %755 = vmatprep.subr.bf16.mxu0 0
      %756 = vmatpush1.bf16.msra.mxu0 0
      %757 = vmatprep.subr.bf16.mxu0 0
      %758 = vmatpush1.bf16.msra.mxu0 0
      %759 = vmatprep.subr.bf16.mxu0 0
      %760 = vmatpush1.bf16.msra.mxu0 0
      %761 = vmatprep.subr.bf16.mxu0 0
      %762 = vmatpush1.bf16.msra.mxu0 0
      %763 = vmatprep.subr.bf16.mxu0 0
      %764 = vmatpush1.bf16.msra.mxu0 0
      %765 = vmatprep.subr.bf16.mxu0 0
      %766 = vmatpush1.bf16.msra.mxu0 0
      %767 = vmatprep.subr.bf16.mxu0 0
      %768 = vmatpush1.bf16.msra.mxu0 0
      %769 = vmatprep.subr.bf16.mxu0 0
      %770 = vmatpush1.bf16.msra.mxu0 0
      %771 = vmatprep.subr.bf16.mxu0 0
      %772 = vmatpush1.bf16.msra.mxu0 0
      %773 = vmatprep.subr.bf16.mxu0 0
      %774 = vmatpush1.bf16.msra.mxu0 0
      %775 = vmatprep.subr.bf16.mxu0 0
      %776 = vmatpush1.bf16.msra.mxu0 0
      %777 = vmatprep.subr.bf16.mxu0 0
      %778 = vmatpush1.bf16.msra.mxu0 0
      %779 = vmatprep.mubr.bf16.mxu0 0
      %780 = vmatmul.mubr.bf16.gmra.mrb[0].mxu0 %v742
      %v781 = vpop.f32.mrb[0].mxu0
      %v782 = vadd.f32 0.0, %v781
      %v783 = vpop.f32.mrb[0].mxu0
      %v784 = vpop.f32.mrb[0].mxu0
      %v785 = vpop.f32.mrb[0].mxu0
      %786 = vdwg.mxu0
      %v787 = vrcp.pop %v650
      %v788 = vmul.f32 %v782, %v787
      %v789 = vpack.c.bf16 %v788, %v788
      %v791 = vunpack.c.l.b16 %v789
      %v792 = vpack.c.b16 %v791, %v791
      %793 = vrot.lane.b32.xlu0 %v792, 8
      %v794 = vpop.permute.xlu0 %793
      %vm796 = vcmask 126016
      %797 = vst.msk [vmem:[%s145] sm:$0xf] %vm796, %v794
      %v798 = vld [vmem:[%s138] sm:$0x1]
      %v799 = vld [vmem:[%s138 + $0x2] sm:$0x1]
      %v800 = vld [vmem:[%s138 + $0x4] sm:$0x1]
      %v801 = vld [vmem:[%s138 + $0x6] sm:$0x1]
      %v802 = vld [vmem:[%s138 + $0x8] sm:$0x1]
      %v803 = vld [vmem:[%s138 + $0xa] sm:$0x1]
      %v804 = vld [vmem:[%s138 + $0xc] sm:$0x1]
      %v805 = vld [vmem:[%s138 + $0xe] sm:$0x1]
      %v806 = vld [vmem:[%s138] sm:$0x2]
      %v807 = vld [vmem:[%s138 + $0x2] sm:$0x2]
      %v808 = vld [vmem:[%s138 + $0x4] sm:$0x2]
      %v809 = vld [vmem:[%s138 + $0x6] sm:$0x2]
      %v810 = vld [vmem:[%s138 + $0x8] sm:$0x2]
      %v811 = vld [vmem:[%s138 + $0xa] sm:$0x2]
      %v812 = vld [vmem:[%s138 + $0xc] sm:$0x2]
      %v813 = vld [vmem:[%s138 + $0xe] sm:$0x2]
      %v823 = vunpack.c.l.s4 1983009808
      %v824 = vunpack.c.0.s8 %v823
      %v825 = vlaneseq
      %v826 = vshrl.u32 %v825, 7
      %v827 = vsub.s32 %v824, %v826
      %v828 = vrot.slane %v798, %v827
      %v830 = vunpack.c.l.s4 1983009808
      %v831 = vunpack.c.0.s8 %v830
      %v832 = vlaneseq
      %v833 = vshrl.u32 %v832, 7
      %v834 = vsub.s32 %v831, %v833
      %v835 = vrot.slane %v799, %v834
      %v837 = vunpack.c.l.s4 1983009808
      %v838 = vunpack.c.0.s8 %v837
      %v839 = vlaneseq
      %v840 = vshrl.u32 %v839, 7
      %v841 = vsub.s32 %v838, %v840
      %v842 = vrot.slane %v800, %v841
      %v844 = vunpack.c.l.s4 1983009808
      %v845 = vunpack.c.0.s8 %v844
      %v846 = vlaneseq
      %v847 = vshrl.u32 %v846, 7
      %v848 = vsub.s32 %v845, %v847
      %v849 = vrot.slane %v801, %v848
      %v851 = vunpack.c.l.s4 1983009808
      %v852 = vunpack.c.0.s8 %v851
      %v853 = vlaneseq
      %v854 = vshrl.u32 %v853, 7
      %v855 = vsub.s32 %v852, %v854
      %v856 = vrot.slane %v802, %v855
      %v858 = vunpack.c.l.s4 1983009808
      %v859 = vunpack.c.0.s8 %v858
      %v860 = vlaneseq
      %v861 = vshrl.u32 %v860, 7
      %v862 = vsub.s32 %v859, %v861
      %v863 = vrot.slane %v803, %v862
      %v865 = vunpack.c.l.s4 1983009808
      %v866 = vunpack.c.0.s8 %v865
      %v867 = vlaneseq
      %v868 = vshrl.u32 %v867, 7
      %v869 = vsub.s32 %v866, %v868
      %v870 = vrot.slane %v804, %v869
      %v872 = vunpack.c.l.s4 1983009808
      %v873 = vunpack.c.0.s8 %v872
      %v874 = vlaneseq
      %v875 = vshrl.u32 %v874, 7
      %v876 = vsub.s32 %v873, %v875
      %v877 = vrot.slane %v805, %v876
      %v878 = vunpack.c.l.b16 %v828
      %v879 = vunpack.c.l.b16 %v835
      %v880 = vunpack.c.l.b16 %v842
      %v881 = vunpack.c.l.b16 %v849
      %v882 = vunpack.c.l.b16 %v856
      %v883 = vunpack.c.l.b16 %v863
      %v884 = vunpack.c.l.b16 %v870
      %v885 = vunpack.c.l.b16 %v877
      %v886 = vrot.slane %v879, 7
      %v887 = vsel %vm242, %v886, %v878
      %v888 = vrot.slane %v880, 6
      %v889 = vsel %vm245, %v888, %v887
      %v890 = vrot.slane %v881, 5
      %v891 = vsel %vm248, %v890, %v889
      %v892 = vrot.slane %v882, 4
      %v893 = vsel %vm251, %v892, %v891
      %v894 = vrot.slane %v883, 3
      %v895 = vsel %vm254, %v894, %v893
      %v896 = vrot.slane %v884, 2
      %v897 = vsel %vm257, %v896, %v895
      %v898 = vrot.slane %v885, 1
      %v899 = vsel %vm260, %v898, %v897
      %v900 = vpack.c.b16 %v899, %v899
      %901 = vrot.lane.b32.xlu0 %v900, 112
      %v902 = vpop.permute.xlu0 %901
      %v903 = vrot.slane %v878, 1
      %v904 = vsel %vm242, %v879, %v903
      %v905 = vrot.slane %v880, 7
      %v906 = vsel %vm245, %v905, %v904
      %v907 = vrot.slane %v881, 6
      %v908 = vsel %vm248, %v907, %v906
      %v909 = vrot.slane %v882, 5
      %v910 = vsel %vm251, %v909, %v908
      %v911 = vrot.slane %v883, 4
      %v912 = vsel %vm254, %v911, %v910
      %v913 = vrot.slane %v884, 3
      %v914 = vsel %vm257, %v913, %v912
      %v915 = vrot.slane %v885, 2
      %v916 = vsel %vm260, %v915, %v914
      %v917 = vpack.c.b16 %v916, %v916
      %918 = vrot.lane.b32.xlu0 %v917, 112
      %v919 = vpop.permute.xlu0 %918
      %v921 = vsel %vm278, %v902, 0
      %v924 = vsel %vm278, %v919, 0
      %926 = vmatprep.subr.bf16.mxu0 0
      %927 = vmatpush1.bf16.xpose.msra.mxu0 %v924
      %928 = vmatprep.subr.bf16.mxu0 0
      %929 = vmatpush1.bf16.xpose.msra.mxu0 0
      %930 = vmatprep.subr.bf16.mxu0 0
      %931 = vmatpush1.bf16.xpose.msra.mxu0 0
      %932 = vmatprep.subr.bf16.mxu0 0
      %933 = vmatpush1.bf16.xpose.msra.mxu0 0
      %934 = vmatprep.subr.bf16.mxu0 0
      %935 = vmatpush1.bf16.xpose.msra.mxu0 0
      %936 = vmatprep.subr.bf16.mxu0 0
      %937 = vmatpush1.bf16.xpose.msra.mxu0 0
      %938 = vmatprep.subr.bf16.mxu0 0
      %939 = vmatpush1.bf16.xpose.msra.mxu0 0
      %940 = vmatprep.subr.bf16.mxu0 0
      %941 = vmatpush1.bf16.xpose.msra.mxu0 0
      %942 = vmatprep.subr.bf16.mxu0 0
      %943 = vmatpush1.bf16.xpose.msra.mxu0 0
      %944 = vmatprep.subr.bf16.mxu0 0
      %945 = vmatpush1.bf16.xpose.msra.mxu0 0
      %946 = vmatprep.subr.bf16.mxu0 0
      %947 = vmatpush1.bf16.xpose.msra.mxu0 0
      %948 = vmatprep.subr.bf16.mxu0 0
      %949 = vmatpush1.bf16.xpose.msra.mxu0 0
      %950 = vmatprep.subr.bf16.mxu0 0
      %951 = vmatpush1.bf16.xpose.msra.mxu0 0
      %952 = vmatprep.subr.bf16.mxu0 0
      %953 = vmatpush1.bf16.xpose.msra.mxu0 0
      %954 = vmatprep.subr.bf16.mxu0 0
      %955 = vmatpush1.bf16.xpose.msra.mxu0 0
      %956 = vmatprep.subr.bf16.mxu0 0
      %957 = vmatpush1.bf16.xpose.msra.mxu0 0
      %958 = vmatprep.mubr.bf16.mxu0 0
      %959 = vmatmul.mubr.bf16.gmra.mrb[0].mxu0 %v921
      %v960 = vpop.f32.mrb[0].mxu0
      %v961 = vadd.f32 %v152, %v960
      %v962 = vpop.f32.mrb[0].mxu0
      %v963 = vpop.f32.mrb[0].mxu0
      %v964 = vpop.f32.mrb[0].mxu0
      %965 = vdwg.mxu0
      %v966 = vsel %vm278, %v961, -inf
      %967 = vmax.xlane.f32.xlu0 %v966
      %v968 = vpop.xlane.xlu0 %967
      %v969 = vsub.f32 %v961, %v968
      %v970 = vmul.f32 %v969, 1.442695
      %v971 = vpow.pop %v970
      %v972 = vsel %vm278, %v971, 0.0
      %973 = vadd.xlane.f32.xlu0 %v972
      %v974 = vpop.xlane.xlu0 %973
      %v975 = vpack.c.bf16 %v971, %v971
      %v985 = vunpack.c.l.s4 1983009808
      %v986 = vunpack.c.0.s8 %v985
      %v987 = vlaneseq
      %v988 = vshrl.u32 %v987, 7
      %v989 = vsub.s32 %v986, %v988
      %v990 = vrot.slane %v806, %v989
      %v992 = vunpack.c.l.s4 1983009808
      %v993 = vunpack.c.0.s8 %v992
      %v994 = vlaneseq
      %v995 = vshrl.u32 %v994, 7
      %v996 = vsub.s32 %v993, %v995
      %v997 = vrot.slane %v807, %v996
      %v999 = vunpack.c.l.s4 1983009808
      %v1000 = vunpack.c.0.s8 %v999
      %v1001 = vlaneseq
      %v1002 = vshrl.u32 %v1001, 7
      %v1003 = vsub.s32 %v1000, %v1002
      %v1004 = vrot.slane %v808, %v1003
      %v1006 = vunpack.c.l.s4 1983009808
      %v1007 = vunpack.c.0.s8 %v1006
      %v1008 = vlaneseq
      %v1009 = vshrl.u32 %v1008, 7
      %v1010 = vsub.s32 %v1007, %v1009
      %v1011 = vrot.slane %v809, %v1010
      %v1013 = vunpack.c.l.s4 1983009808
      %v1014 = vunpack.c.0.s8 %v1013
      %v1015 = vlaneseq
      %v1016 = vshrl.u32 %v1015, 7
      %v1017 = vsub.s32 %v1014, %v1016
      %v1018 = vrot.slane %v810, %v1017
      %v1020 = vunpack.c.l.s4 1983009808
      %v1021 = vunpack.c.0.s8 %v1020
      %v1022 = vlaneseq
      %v1023 = vshrl.u32 %v1022, 7
      %v1024 = vsub.s32 %v1021, %v1023
      %v1025 = vrot.slane %v811, %v1024
      %v1027 = vunpack.c.l.s4 1983009808
      %v1028 = vunpack.c.0.s8 %v1027
      %v1029 = vlaneseq
      %v1030 = vshrl.u32 %v1029, 7
      %v1031 = vsub.s32 %v1028, %v1030
      %v1032 = vrot.slane %v812, %v1031
      %v1034 = vunpack.c.l.s4 1983009808
      %v1035 = vunpack.c.0.s8 %v1034
      %v1036 = vlaneseq
      %v1037 = vshrl.u32 %v1036, 7
      %v1038 = vsub.s32 %v1035, %v1037
      %v1039 = vrot.slane %v813, %v1038
      %v1040 = vunpack.c.l.b16 %v990
      %v1041 = vunpack.c.l.b16 %v997
      %v1042 = vunpack.c.l.b16 %v1004
      %v1043 = vunpack.c.l.b16 %v1011
      %v1044 = vunpack.c.l.b16 %v1018
      %v1045 = vunpack.c.l.b16 %v1025
      %v1046 = vunpack.c.l.b16 %v1032
      %v1047 = vunpack.c.l.b16 %v1039
      %v1048 = vrot.slane %v1040, 2
      %v1049 = vrot.slane %v1041, 1
      %v1050 = vsel %vm242, %v1049, %v1048
      %v1051 = vsel %vm245, %v1042, %v1050
      %v1052 = vrot.slane %v1043, 7
      %v1053 = vsel %vm248, %v1052, %v1051
      %v1054 = vrot.slane %v1044, 6
      %v1055 = vsel %vm251, %v1054, %v1053
      %v1056 = vrot.slane %v1045, 5
      %v1057 = vsel %vm254, %v1056, %v1055
      %v1058 = vrot.slane %v1046, 4
      %v1059 = vsel %vm257, %v1058, %v1057
      %v1060 = vrot.slane %v1047, 3
      %v1061 = vsel %vm260, %v1060, %v1059
      %v1062 = vpack.c.b16 %v1061, %v1061
      %1063 = vrot.lane.b32.xlu0 %v1062, 112
      %v1064 = vpop.permute.xlu0 %1063
      %v1066 = vsel %vm278, %v975, 0
      %v1069 = vsel %vm425, %v1064, 0
      %1071 = vmatprep.subr.bf16.mxu0 0
      %1072 = vmatpush1.bf16.msra.mxu0 %v1069
      %1073 = vmatprep.subr.bf16.mxu0 0
      %1074 = vmatpush1.bf16.msra.mxu0 0
      %1075 = vmatprep.subr.bf16.mxu0 0
      %1076 = vmatpush1.bf16.msra.mxu0 0
      %1077 = vmatprep.subr.bf16.mxu0 0
      %1078 = vmatpush1.bf16.msra.mxu0 0
      %1079 = vmatprep.subr.bf16.mxu0 0
      %1080 = vmatpush1.bf16.msra.mxu0 0
      %1081 = vmatprep.subr.bf16.mxu0 0
      %1082 = vmatpush1.bf16.msra.mxu0 0
      %1083 = vmatprep.subr.bf16.mxu0 0
      %1084 = vmatpush1.bf16.msra.mxu0 0
      %1085 = vmatprep.subr.bf16.mxu0 0
      %1086 = vmatpush1.bf16.msra.mxu0 0
      %1087 = vmatprep.subr.bf16.mxu0 0
      %1088 = vmatpush1.bf16.msra.mxu0 0
      %1089 = vmatprep.subr.bf16.mxu0 0
      %1090 = vmatpush1.bf16.msra.mxu0 0
      %1091 = vmatprep.subr.bf16.mxu0 0
      %1092 = vmatpush1.bf16.msra.mxu0 0
      %1093 = vmatprep.subr.bf16.mxu0 0
      %1094 = vmatpush1.bf16.msra.mxu0 0
      %1095 = vmatprep.subr.bf16.mxu0 0
      %1096 = vmatpush1.bf16.msra.mxu0 0
      %1097 = vmatprep.subr.bf16.mxu0 0
      %1098 = vmatpush1.bf16.msra.mxu0 0
      %1099 = vmatprep.subr.bf16.mxu0 0
      %1100 = vmatpush1.bf16.msra.mxu0 0
      %1101 = vmatprep.subr.bf16.mxu0 0
      %1102 = vmatpush1.bf16.msra.mxu0 0
      %1103 = vmatprep.mubr.bf16.mxu0 0
      %1104 = vmatmul.mubr.bf16.gmra.mrb[0].mxu0 %v1066
      %v1105 = vpop.f32.mrb[0].mxu0
      %v1106 = vadd.f32 0.0, %v1105
      %v1107 = vpop.f32.mrb[0].mxu0
      %v1108 = vpop.f32.mrb[0].mxu0
      %v1109 = vpop.f32.mrb[0].mxu0
      %1110 = vdwg.mxu0
      %v1111 = vrcp.pop %v974
      %v1112 = vmul.f32 %v1106, %v1111
      %v1113 = vpack.c.bf16 %v1112, %v1112
      %v1115 = vunpack.c.l.b16 %v1113
      %v1116 = vpack.c.b16 %v1115, %v1115
      %1117 = vrot.lane.b32.xlu0 %v1116, 16
      %v1118 = vpop.permute.xlu0 %1117
      %vm1120 = vcmask 191616
      %1121 = vst.msk [vmem:[%s145] sm:$0xf] %vm1120, %v1118
      %v1122 = vld [vmem:[%s138] sm:$0x1]
      %v1123 = vld [vmem:[%s138 + $0x2] sm:$0x1]
      %v1124 = vld [vmem:[%s138 + $0x4] sm:$0x1]
      %v1125 = vld [vmem:[%s138 + $0x6] sm:$0x1]
      %v1126 = vld [vmem:[%s138 + $0x8] sm:$0x1]
      %v1127 = vld [vmem:[%s138 + $0xa] sm:$0x1]
      %v1128 = vld [vmem:[%s138 + $0xc] sm:$0x1]
      %v1129 = vld [vmem:[%s138 + $0xe] sm:$0x1]
      %v1130 = vld [vmem:[%s138] sm:$0x2]
      %v1131 = vld [vmem:[%s138 + $0x2] sm:$0x2]
      %v1132 = vld [vmem:[%s138 + $0x4] sm:$0x2]
      %v1133 = vld [vmem:[%s138 + $0x6] sm:$0x2]
      %v1134 = vld [vmem:[%s138 + $0x8] sm:$0x2]
      %v1135 = vld [vmem:[%s138 + $0xa] sm:$0x2]
      %v1136 = vld [vmem:[%s138 + $0xc] sm:$0x2]
      %v1137 = vld [vmem:[%s138 + $0xe] sm:$0x2]
      %v1147 = vunpack.c.l.s4 1983009808
      %v1148 = vunpack.c.0.s8 %v1147
      %v1149 = vlaneseq
      %v1150 = vshrl.u32 %v1149, 7
      %v1151 = vsub.s32 %v1148, %v1150
      %v1152 = vrot.slane %v1122, %v1151
      %v1154 = vunpack.c.l.s4 1983009808
      %v1155 = vunpack.c.0.s8 %v1154
      %v1156 = vlaneseq
      %v1157 = vshrl.u32 %v1156, 7
      %v1158 = vsub.s32 %v1155, %v1157
      %v1159 = vrot.slane %v1123, %v1158
      %v1161 = vunpack.c.l.s4 1983009808
      %v1162 = vunpack.c.0.s8 %v1161
      %v1163 = vlaneseq
      %v1164 = vshrl.u32 %v1163, 7
      %v1165 = vsub.s32 %v1162, %v1164
      %v1166 = vrot.slane %v1124, %v1165
      %v1168 = vunpack.c.l.s4 1983009808
      %v1169 = vunpack.c.0.s8 %v1168
      %v1170 = vlaneseq
      %v1171 = vshrl.u32 %v1170, 7
      %v1172 = vsub.s32 %v1169, %v1171
      %v1173 = vrot.slane %v1125, %v1172
      %v1175 = vunpack.c.l.s4 1983009808
      %v1176 = vunpack.c.0.s8 %v1175
      %v1177 = vlaneseq
      %v1178 = vshrl.u32 %v1177, 7
      %v1179 = vsub.s32 %v1176, %v1178
      %v1180 = vrot.slane %v1126, %v1179
      %v1182 = vunpack.c.l.s4 1983009808
      %v1183 = vunpack.c.0.s8 %v1182
      %v1184 = vlaneseq
      %v1185 = vshrl.u32 %v1184, 7
      %v1186 = vsub.s32 %v1183, %v1185
      %v1187 = vrot.slane %v1127, %v1186
      %v1189 = vunpack.c.l.s4 1983009808
      %v1190 = vunpack.c.0.s8 %v1189
      %v1191 = vlaneseq
      %v1192 = vshrl.u32 %v1191, 7
      %v1193 = vsub.s32 %v1190, %v1192
      %v1194 = vrot.slane %v1128, %v1193
      %v1196 = vunpack.c.l.s4 1983009808
      %v1197 = vunpack.c.0.s8 %v1196
      %v1198 = vlaneseq
      %v1199 = vshrl.u32 %v1198, 7
      %v1200 = vsub.s32 %v1197, %v1199
      %v1201 = vrot.slane %v1129, %v1200
      %v1202 = vunpack.c.l.b16 %v1152
      %v1203 = vunpack.c.l.b16 %v1159
      %v1204 = vunpack.c.l.b16 %v1166
      %v1205 = vunpack.c.l.b16 %v1173
      %v1206 = vunpack.c.l.b16 %v1180
      %v1207 = vunpack.c.l.b16 %v1187
      %v1208 = vunpack.c.l.b16 %v1194
      %v1209 = vunpack.c.l.b16 %v1201
      %v1210 = vrot.slane %v1203, 7
      %v1211 = vsel %vm242, %v1210, %v1202
      %v1212 = vrot.slane %v1204, 6
      %v1213 = vsel %vm245, %v1212, %v1211
      %v1214 = vrot.slane %v1205, 5
      %v1215 = vsel %vm248, %v1214, %v1213
      %v1216 = vrot.slane %v1206, 4
      %v1217 = vsel %vm251, %v1216, %v1215
      %v1218 = vrot.slane %v1207, 3
      %v1219 = vsel %vm254, %v1218, %v1217
      %v1220 = vrot.slane %v1208, 2
      %v1221 = vsel %vm257, %v1220, %v1219
      %v1222 = vrot.slane %v1209, 1
      %v1223 = vsel %vm260, %v1222, %v1221
      %v1224 = vpack.c.b16 %v1223, %v1223
      %1225 = vrot.lane.b32.xlu0 %v1224, 104
      %v1226 = vpop.permute.xlu0 %1225
      %v1227 = vrot.slane %v1202, 1
      %v1228 = vsel %vm242, %v1203, %v1227
      %v1229 = vrot.slane %v1204, 7
      %v1230 = vsel %vm245, %v1229, %v1228
      %v1231 = vrot.slane %v1205, 6
      %v1232 = vsel %vm248, %v1231, %v1230
      %v1233 = vrot.slane %v1206, 5
      %v1234 = vsel %vm251, %v1233, %v1232
      %v1235 = vrot.slane %v1207, 4
      %v1236 = vsel %vm254, %v1235, %v1234
      %v1237 = vrot.slane %v1208, 3
      %v1238 = vsel %vm257, %v1237, %v1236
      %v1239 = vrot.slane %v1209, 2
      %v1240 = vsel %vm260, %v1239, %v1238
      %v1241 = vpack.c.b16 %v1240, %v1240
      %1242 = vrot.lane.b32.xlu0 %v1241, 104
      %v1243 = vpop.permute.xlu0 %1242
      %v1245 = vsel %vm278, %v1226, 0
      %v1248 = vsel %vm278, %v1243, 0
      %1250 = vmatprep.subr.bf16.mxu0 0
      %1251 = vmatpush1.bf16.xpose.msra.mxu0 %v1248
      %1252 = vmatprep.subr.bf16.mxu0 0
      %1253 = vmatpush1.bf16.xpose.msra.mxu0 0
      %1254 = vmatprep.subr.bf16.mxu0 0
      %1255 = vmatpush1.bf16.xpose.msra.mxu0 0
      %1256 = vmatprep.subr.bf16.mxu0 0
      %1257 = vmatpush1.bf16.xpose.msra.mxu0 0
      %1258 = vmatprep.subr.bf16.mxu0 0
      %1259 = vmatpush1.bf16.xpose.msra.mxu0 0
      %1260 = vmatprep.subr.bf16.mxu0 0
      %1261 = vmatpush1.bf16.xpose.msra.mxu0 0
      %1262 = vmatprep.subr.bf16.mxu0 0
      %1263 = vmatpush1.bf16.xpose.msra.mxu0 0
      %1264 = vmatprep.subr.bf16.mxu0 0
      %1265 = vmatpush1.bf16.xpose.msra.mxu0 0
      %1266 = vmatprep.subr.bf16.mxu0 0
      %1267 = vmatpush1.bf16.xpose.msra.mxu0 0
      %1268 = vmatprep.subr.bf16.mxu0 0
      %1269 = vmatpush1.bf16.xpose.msra.mxu0 0
      %1270 = vmatprep.subr.bf16.mxu0 0
      %1271 = vmatpush1.bf16.xpose.msra.mxu0 0
      %1272 = vmatprep.subr.bf16.mxu0 0
      %1273 = vmatpush1.bf16.xpose.msra.mxu0 0
      %1274 = vmatprep.subr.bf16.mxu0 0
      %1275 = vmatpush1.bf16.xpose.msra.mxu0 0
      %1276 = vmatprep.subr.bf16.mxu0 0
      %1277 = vmatpush1.bf16.xpose.msra.mxu0 0
      %1278 = vmatprep.subr.bf16.mxu0 0
      %1279 = vmatpush1.bf16.xpose.msra.mxu0 0
      %1280 = vmatprep.subr.bf16.mxu0 0
      %1281 = vmatpush1.bf16.xpose.msra.mxu0 0
      %1282 = vmatprep.mubr.bf16.mxu0 0
      %1283 = vmatmul.mubr.bf16.gmra.mrb[0].mxu0 %v1245
      %v1284 = vpop.f32.mrb[0].mxu0
      %v1285 = vadd.f32 %v152, %v1284
      %v1286 = vpop.f32.mrb[0].mxu0
      %v1287 = vpop.f32.mrb[0].mxu0
      %v1288 = vpop.f32.mrb[0].mxu0
      %1289 = vdwg.mxu0
      %v1290 = vsel %vm278, %v1285, -inf
      %1291 = vmax.xlane.f32.xlu0 %v1290
      %v1292 = vpop.xlane.xlu0 %1291
      %v1293 = vsub.f32 %v1285, %v1292
      %v1294 = vmul.f32 %v1293, 1.442695
      %v1295 = vpow.pop %v1294
      %v1296 = vsel %vm278, %v1295, 0.0
      %1297 = vadd.xlane.f32.xlu0 %v1296
      %v1298 = vpop.xlane.xlu0 %1297
      %v1299 = vpack.c.bf16 %v1295, %v1295
      %v1309 = vunpack.c.l.s4 1983009808
      %v1310 = vunpack.c.0.s8 %v1309
      %v1311 = vlaneseq
      %v1312 = vshrl.u32 %v1311, 7
      %v1313 = vsub.s32 %v1310, %v1312
      %v1314 = vrot.slane %v1130, %v1313
      %v1316 = vunpack.c.l.s4 1983009808
      %v1317 = vunpack.c.0.s8 %v1316
      %v1318 = vlaneseq
      %v1319 = vshrl.u32 %v1318, 7
      %v1320 = vsub.s32 %v1317, %v1319
      %v1321 = vrot.slane %v1131, %v1320
      %v1323 = vunpack.c.l.s4 1983009808
      %v1324 = vunpack.c.0.s8 %v1323
      %v1325 = vlaneseq
      %v1326 = vshrl.u32 %v1325, 7
      %v1327 = vsub.s32 %v1324, %v1326
      %v1328 = vrot.slane %v1132, %v1327
      %v1330 = vunpack.c.l.s4 1983009808
      %v1331 = vunpack.c.0.s8 %v1330
      %v1332 = vlaneseq
      %v1333 = vshrl.u32 %v1332, 7
      %v1334 = vsub.s32 %v1331, %v1333
      %v1335 = vrot.slane %v1133, %v1334
      %v1337 = vunpack.c.l.s4 1983009808
      %v1338 = vunpack.c.0.s8 %v1337
      %v1339 = vlaneseq
      %v1340 = vshrl.u32 %v1339, 7
      %v1341 = vsub.s32 %v1338, %v1340
      %v1342 = vrot.slane %v1134, %v1341
      %v1344 = vunpack.c.l.s4 1983009808
      %v1345 = vunpack.c.0.s8 %v1344
      %v1346 = vlaneseq
      %v1347 = vshrl.u32 %v1346, 7
      %v1348 = vsub.s32 %v1345, %v1347
      %v1349 = vrot.slane %v1135, %v1348
      %v1351 = vunpack.c.l.s4 1983009808
      %v1352 = vunpack.c.0.s8 %v1351
      %v1353 = vlaneseq
      %v1354 = vshrl.u32 %v1353, 7
      %v1355 = vsub.s32 %v1352, %v1354
      %v1356 = vrot.slane %v1136, %v1355
      %v1358 = vunpack.c.l.s4 1983009808
      %v1359 = vunpack.c.0.s8 %v1358
      %v1360 = vlaneseq
      %v1361 = vshrl.u32 %v1360, 7
      %v1362 = vsub.s32 %v1359, %v1361
      %v1363 = vrot.slane %v1137, %v1362
      %v1364 = vunpack.c.l.b16 %v1314
      %v1365 = vunpack.c.l.b16 %v1321
      %v1366 = vunpack.c.l.b16 %v1328
      %v1367 = vunpack.c.l.b16 %v1335
      %v1368 = vunpack.c.l.b16 %v1342
      %v1369 = vunpack.c.l.b16 %v1349
      %v1370 = vunpack.c.l.b16 %v1356
      %v1371 = vunpack.c.l.b16 %v1363
      %v1372 = vrot.slane %v1364, 2
      %v1373 = vrot.slane %v1365, 1
      %v1374 = vsel %vm242, %v1373, %v1372
      %v1375 = vsel %vm245, %v1366, %v1374
      %v1376 = vrot.slane %v1367, 7
      %v1377 = vsel %vm248, %v1376, %v1375
      %v1378 = vrot.slane %v1368, 6
      %v1379 = vsel %vm251, %v1378, %v1377
      %v1380 = vrot.slane %v1369, 5
      %v1381 = vsel %vm254, %v1380, %v1379
      %v1382 = vrot.slane %v1370, 4
      %v1383 = vsel %vm257, %v1382, %v1381
      %v1384 = vrot.slane %v1371, 3
      %v1385 = vsel %vm260, %v1384, %v1383
      %v1386 = vpack.c.b16 %v1385, %v1385
      %1387 = vrot.lane.b32.xlu0 %v1386, 104
      %v1388 = vpop.permute.xlu0 %1387
      %v1390 = vsel %vm278, %v1299, 0
      %v1393 = vsel %vm425, %v1388, 0
      %1395 = vmatprep.subr.bf16.mxu0 0
      %1396 = vmatpush1.bf16.msra.mxu0 %v1393
      %1397 = vmatprep.subr.bf16.mxu0 0
      %1398 = vmatpush1.bf16.msra.mxu0 0
      %1399 = vmatprep.subr.bf16.mxu0 0
      %1400 = vmatpush1.bf16.msra.mxu0 0
      %1401 = vmatprep.subr.bf16.mxu0 0
      %1402 = vmatpush1.bf16.msra.mxu0 0
      %1403 = vmatprep.subr.bf16.mxu0 0
      %1404 = vmatpush1.bf16.msra.mxu0 0
      %1405 = vmatprep.subr.bf16.mxu0 0
      %1406 = vmatpush1.bf16.msra.mxu0 0
      %1407 = vmatprep.subr.bf16.mxu0 0
      %1408 = vmatpush1.bf16.msra.mxu0 0
      %1409 = vmatprep.subr.bf16.mxu0 0
      %1410 = vmatpush1.bf16.msra.mxu0 0
      %1411 = vmatprep.subr.bf16.mxu0 0
      %1412 = vmatpush1.bf16.msra.mxu0 0
      %1413 = vmatprep.subr.bf16.mxu0 0
      %1414 = vmatpush1.bf16.msra.mxu0 0
      %1415 = vmatprep.subr.bf16.mxu0 0
      %1416 = vmatpush1.bf16.msra.mxu0 0
      %1417 = vmatprep.subr.bf16.mxu0 0
      %1418 = vmatpush1.bf16.msra.mxu0 0
      %1419 = vmatprep.subr.bf16.mxu0 0
      %1420 = vmatpush1.bf16.msra.mxu0 0
      %1421 = vmatprep.subr.bf16.mxu0 0
      %1422 = vmatpush1.bf16.msra.mxu0 0
      %1423 = vmatprep.subr.bf16.mxu0 0
      %1424 = vmatpush1.bf16.msra.mxu0 0
      %1425 = vmatprep.subr.bf16.mxu0 0
      %1426 = vmatpush1.bf16.msra.mxu0 0
      %1427 = vmatprep.mubr.bf16.mxu0 0
      %1428 = vmatmul.mubr.bf16.gmra.mrb[0].mxu0 %v1390
      %v1429 = vpop.f32.mrb[0].mxu0
      %v1430 = vadd.f32 0.0, %v1429
      %v1431 = vpop.f32.mrb[0].mxu0
      %v1432 = vpop.f32.mrb[0].mxu0
      %v1433 = vpop.f32.mrb[0].mxu0
      %1434 = vdwg.mxu0
      %v1435 = vrcp.pop %v1298
      %v1436 = vmul.f32 %v1430, %v1435
      %v1437 = vpack.c.bf16 %v1436, %v1436
      %v1439 = vunpack.c.l.b16 %v1437
      %v1440 = vpack.c.b16 %v1439, %v1439
      %1441 = vrot.lane.b32.xlu0 %v1440, 24
      %v1442 = vpop.permute.xlu0 %1441
      %vm1444 = vcmask 257216
      %1445 = vst.msk [vmem:[%s145] sm:$0xf] %vm1444, %v1442
      %p1446 = scmp.lt.s32.totalorder %s16, 1
      %s1447 = scalar_select %p1446, %s16, 1
      %p1448 = scmp.lt.s32.totalorder %s17, 0
      %s1449 = scalar_select %p1448, %s17, 0
      %s1450 = sadd.s32 %s1449, %s1447
      %s1451 = smul.addr %s1450, 4
      %s1452 = scalar_lea.vmem %s1, %s1451
      // Predicated region
      $region25: #{decoder_forward.20} parent=23 // pred_check
        %p1453 = pneg %p72
      $region26: #{decoder_forward.20} parent=23 // pred_check_branch
        %1455 = sbr.rel (%p1453) target = $region28
      $region27: #{decoder_forward.20} parent=23 // pred_region
        _
      $region28: #{decoder_forward.20} parent=23 // pred_fallthru
        _
    $region24: #{decoder_forward.20} parent=5 // pred_fallthru
      _
    %p1456 = scmp.le.s32.totalorder 2, %s7
    // Predicated region
    $region29: #{decoder_forward.20} parent=5 // pred_check
      %p1457 = pneg %p1456
    $region30: #{decoder_forward.20} parent=5 // pred_check_branch
      %1459 = sbr.rel (%p1457) target = $region32
    $region31: #{decoder_forward.20} parent=5 // pred_region
      %s1460 = ssub.s32 %s7, 2
      // Predicated region
      $region33: #{decoder_forward.20} parent=31 // pred_check
        %p1461 = pneg %p78
      $region34: #{decoder_forward.20} parent=31 // pred_check_branch
        %1463 = sbr.rel (%p1461) target = $region36
      $region35: #{decoder_forward.20} parent=31 // pred_region
        %p1464 = scmp.lt.s32.totalorder %s18, 1
        %s1465 = scalar_select %p1464, %s18, 1
        %p1466 = scmp.lt.s32.totalorder %s19, 0
        %s1467 = scalar_select %p1466, %s19, 0
        %s1468 = sadd.s32 %s1467, %s1465
        %s1469 = smul.addr %s1468, 4
        %s1470 = scalar_lea.vmem %s1, %s1469
      $region36: #{decoder_forward.20} parent=31 // pred_fallthru
        _
    $region32: #{decoder_forward.20} parent=5 // pred_fallthru
      _
  $region6: #{decoder_forward.20} parent=0 // loop_footer
    %s11 = sadd.s32 1, %s7
  $region7: #{decoder_forward.20} parent=0 // loop_footer_branch
    %6 = sbr.rel target = $region3
  $region8: #{decoder_forward.20} parent=0 // loop_exit
    _

// kernel: decoder_forward.23
$region0: #{decoder_forward.23}
  #allocation0 [shape = 'u32[]', space=smem, size = 0x4, offset = 0x4, fixed_abs, tag = 'smem constant byte address 0x4 - core index']
  #allocation1 [shape = 'u32[144,128]{1,0:T(1,128)}', space=vmem, size = 0x12000, scoped, tag = 'internal scratch']
  %s0 = inlined_call_operand.vmem [shape: bf16[16,32], index: 0, kind: input, shape index: {}]
  %s1 = inlined_call_operand.vmem [shape: bf16[32,64], index: 1, kind: input, shape index: {}]
  %s2 = inlined_call_operand.vmem [shape: f32[1,64], index: 2, kind: input, shape index: {}]
  %s3 = inlined_call_operand.vmem [shape: bf16[16,64], index: 3, kind: output, shape index: {}]
  %s4 = sld [smem:[#allocation0]]
  $region22: #{decoder_forward.23} parent=0
    _
  %s6 = ssub.s32 1, %s4
  %s7 = scalar_select 0, %s6, %s4
  // Predicated region
  $region2: #{decoder_forward.23} parent=0 // pred_check
    _
  $region3: #{decoder_forward.23} parent=0 // pred_check_branch
    %9 = sbr.rel (0) target = $region5
  $region4: #{decoder_forward.23} parent=0 // pred_region
    _
  $region5: #{decoder_forward.23} parent=0 // pred_fallthru
    _
  // Predicated region
  $region6: #{decoder_forward.23} parent=0 // pred_check
    _
  $region7: #{decoder_forward.23} parent=0 // pred_check_branch
    %11 = sbr.rel (0) target = $region9
  $region8: #{decoder_forward.23} parent=0 // pred_region
    _
  $region9: #{decoder_forward.23} parent=0 // pred_fallthru
    _
  // Predicated region
  $region10: #{decoder_forward.23} parent=0 // pred_check
    _
  $region11: #{decoder_forward.23} parent=0 // pred_check_branch
    %13 = sbr.rel (0) target = $region13
  $region12: #{decoder_forward.23} parent=0 // pred_region
    _
  $region13: #{decoder_forward.23} parent=0 // pred_fallthru
    _
  %v15 = vld [vmem:[%s0] sm:$0xf]
  %v16 = vld [vmem:[%s0 + $0x4] sm:$0xf]
  %v17 = vld [vmem:[%s1] sm:$0xf]
  %v18 = vld [vmem:[%s1 + $0x4] sm:$0xf]
  %v19 = vld [vmem:[%s1 + $0x8] sm:$0xf]
  %v20 = vld [vmem:[%s1 + $0xc] sm:$0xf]
  %v21 = vld [vmem:[%s2] sm:$0x1]
  %v23 = vlaneseq
  %v24 = vshrl.u32 %v23, 7
  %v25 = vsub.s32 0, %v24
  %v26 = vrot.slane %v21, %v25
  %v30 = vunpack.c.l.b16 %v15
  %v31 = vunpack.c.l.b16 %v16
  %v32 = vpack.c.b16 %v31, %v30
  %v37 = vunpack.c.l.b16 %v17
  %v38 = vunpack.c.l.b16 %v18
  %v39 = vunpack.c.l.b16 %v19
  %v40 = vunpack.c.l.b16 %v20
  %v41 = vpack.c.b16 %v38, %v37
  %v42 = vpack.c.b16 %v40, %v39
  %vm45 = vcmask 261120
  %v47 = vsel %vm45, %v32, 0
  %49 = vmatprep.subr.bf16.mxu0 0
  %50 = vmatpush1.bf16.msra.mxu0 %v41
  %51 = vmatprep.subr.bf16.mxu0 0
  %52 = vmatpush1.bf16.msra.mxu0 %v42
  %53 = vmatprep.subr.bf16.mxu0 0
  %54 = vmatpush1.bf16.msra.mxu0 0
  %55 = vmatprep.subr.bf16.mxu0 0
  %56 = vmatpush1.bf16.msra.mxu0 0
  %57 = vmatprep.subr.bf16.mxu0 0
  %58 = vmatpush1.bf16.msra.mxu0 0
  %59 = vmatprep.subr.bf16.mxu0 0
  %60 = vmatpush1.bf16.msra.mxu0 0
  %61 = vmatprep.subr.bf16.mxu0 0
  %62 = vmatpush1.bf16.msra.mxu0 0
  %63 = vmatprep.subr.bf16.mxu0 0
  %64 = vmatpush1.bf16.msra.mxu0 0
  %65 = vmatprep.subr.bf16.mxu0 0
  %66 = vmatpush1.bf16.msra.mxu0 0
  %67 = vmatprep.subr.bf16.mxu0 0
  %68 = vmatpush1.bf16.msra.mxu0 0
  %69 = vmatprep.subr.bf16.mxu0 0
  %70 = vmatpush1.bf16.msra.mxu0 0
  %71 = vmatprep.subr.bf16.mxu0 0
  %72 = vmatpush1.bf16.msra.mxu0 0
  %73 = vmatprep.subr.bf16.mxu0 0
  %74 = vmatpush1.bf16.msra.mxu0 0
  %75 = vmatprep.subr.bf16.mxu0 0
  %76 = vmatpush1.bf16.msra.mxu0 0
  %77 = vmatprep.subr.bf16.mxu0 0
  %78 = vmatpush1.bf16.msra.mxu0 0
  %79 = vmatprep.subr.bf16.mxu0 0
  %80 = vmatpush1.bf16.msra.mxu0 0
  %81 = vmatprep.mubr.bf16.mxu0 0
  %82 = vmatmul.mubr.bf16.gmra.mrb[0].mxu0 %v47
  %v83 = vpop.f32.mrb[0].mxu0
  %v84 = vadd.f32 %v26, %v83
  %v85 = vpop.f32.mrb[0].mxu0
  %v86 = vpop.f32.mrb[0].mxu0
  %v87 = vadd.f32 %v26, %v86
  %v88 = vpop.f32.mrb[0].mxu0
  %89 = vdwg.mxu0
  %v90 = vpack.c.bf16 %v87, %v84
  %v92 = vunpack.c.l.b16 %v90
  %v93 = vunpack.c.h.b16 %v90
  %v94 = vpack.c.b16 %v92, %v92
  %v95 = vpack.c.b16 %v93, %v93
  %vm98 = vcmask 519168
  %99 = vst.msk [vmem:[%s3] sm:$0xf] %vm98, %v94
  %100 = vst.msk [vmem:[%s3 + $0x4] sm:$0xf] %vm98, %v95
  // Predicated region
  $region14: #{decoder_forward.23} parent=0 // pred_check
    _
  $region15: #{decoder_forward.23} parent=0 // pred_check_branch
    %102 = sbr.rel (0) target = $region17
  $region16: #{decoder_forward.23} parent=0 // pred_region
    _
  $region17: #{decoder_forward.23} parent=0 // pred_fallthru
    _
  // Predicated region
  $region18: #{decoder_forward.23} parent=0 // pred_check
    _
  $region19: #{decoder_forward.23} parent=0 // pred_check_branch
    %104 = sbr.rel (0) target = $region21
  $region20: #{decoder_forward.23} parent=0 // pred_region
    _
  $region21: #{decoder_forward.23} parent=0 // pred_fallthru
    _

// kernel: decoder_forward.26
$region0: #{decoder_forward.26}
  #allocation0 [shape = 'u32[]', space=smem, size = 0x4, offset = 0x4, fixed_abs, tag = 'smem constant byte address 0x4 - core index']
  #allocation1 [shape = 'u32[144,128]{1,0:T(1,128)}', space=vmem, size = 0x12000, scoped, tag = 'internal scratch']
  #allocation2 [shape = 'bf16[16,32]{1,0:T(16,128)(2,1)}', space=vmem, size = 0x1000, scoped, tag = 'scratch operand']
  %s0 = inlined_call_operand.vmem [shape: f32[16,32], index: 0, kind: input, shape index: {}]
  %s1 = inlined_call_operand.vmem [shape: f32[1,32], index: 1, kind: input, shape index: {}]
  %s2 = inlined_call_operand.vmem [shape: f32[1,32], index: 2, kind: input, shape index: {}]
  %s3 = inlined_call_operand.vmem [shape: bf16[32,128], index: 3, kind: input, shape index: {}]
  %s4 = inlined_call_operand.vmem [shape: f32[1,128], index: 4, kind: input, shape index: {}]
  %s5 = inlined_call_operand.vmem [shape: bf16[16,128], index: 5, kind: output, shape index: {}]
  %s6 = sld [smem:[#allocation0]]
  $region34: #{decoder_forward.26} parent=0
    _
  %s8 = ssub.s32 1, %s6
  %s9 = scalar_select 0, %s8, %s6
  // Predicated region
  $region2: #{decoder_forward.26} parent=0 // pred_check
    _
  $region3: #{decoder_forward.26} parent=0 // pred_check_branch
    %11 = sbr.rel (0) target = $region5
  $region4: #{decoder_forward.26} parent=0 // pred_region
    _
  $region5: #{decoder_forward.26} parent=0 // pred_fallthru
    _
  // Predicated region
  $region6: #{decoder_forward.26} parent=0 // pred_check
    _
  $region7: #{decoder_forward.26} parent=0 // pred_check_branch
    %13 = sbr.rel (0) target = $region9
  $region8: #{decoder_forward.26} parent=0 // pred_region
    _
  $region9: #{decoder_forward.26} parent=0 // pred_fallthru
    _
  // Predicated region
  $region10: #{decoder_forward.26} parent=0 // pred_check
    _
  $region11: #{decoder_forward.26} parent=0 // pred_check_branch
    %15 = sbr.rel (0) target = $region13
  $region12: #{decoder_forward.26} parent=0 // pred_region
    _
  $region13: #{decoder_forward.26} parent=0 // pred_fallthru
    _
  // Predicated region
  $region14: #{decoder_forward.26} parent=0 // pred_check
    _
  $region15: #{decoder_forward.26} parent=0 // pred_check_branch
    %17 = sbr.rel (0) target = $region17
  $region16: #{decoder_forward.26} parent=0 // pred_region
    _
  $region17: #{decoder_forward.26} parent=0 // pred_fallthru
    _
  // Predicated region
  $region18: #{decoder_forward.26} parent=0 // pred_check
    _
  $region19: #{decoder_forward.26} parent=0 // pred_check_branch
    %19 = sbr.rel (0) target = $region21
  $region20: #{decoder_forward.26} parent=0 // pred_region
    _
  $region21: #{decoder_forward.26} parent=0 // pred_fallthru
    _
  %p21 = scmp.eq.s32.totalorder 0, 0
  // Predicated region
  $region22: #{decoder_forward.26} parent=0 // pred_check
    %p22 = pneg %p21
  $region23: #{decoder_forward.26} parent=0 // pred_check_branch
    %24 = sbr.rel (%p22) target = $region25
  $region24: #{decoder_forward.26} parent=0 // pred_region
    %v25 = vld [vmem:[%s0] sm:$0xff]
    %v26 = vld [vmem:[%s0 + $0x8] sm:$0xff]
    %v27 = vld [vmem:[%s1] sm:$0x1]
    %v28 = vld [vmem:[%s2] sm:$0x1]
    %vm29 = vcmask 261120
    %v30 = vsel %vm29, %v25, 0.0
    %31 = vadd.xlane.f32.xlu0 %v30
    %v32 = vpop.xlane.xlu0 %31
    %v33 = vsel %vm29, %v26, 0.0
    %34 = vadd.xlane.f32.xlu0 %v33
    %v35 = vpop.xlane.xlu0 %34
    %v36 = vrcp.pop 32.0
    %v37 = vmul.f32 %v32, %v36
    %v38 = vmul.f32 %v35, %v36
    %v39 = vmul.f32 %v25, %v25
    %v40 = vmul.f32 %v26, %v26
    %v41 = vsel %vm29, %v39, 0.0
    %42 = vadd.xlane.f32.xlu0 %v41
    %v43 = vpop.xlane.xlu0 %42
    %v44 = vsel %vm29, %v40, 0.0
    %45 = vadd.xlane.f32.xlu0 %v44
    %v46 = vpop.xlane.xlu0 %45
    %v47 = vmul.f32 %v43, %v36
    %v48 = vmul.f32 %v46, %v36
    %v49 = vmul.f32 %v37, %v37
    %v50 = vmul.f32 %v38, %v38
    %v51 = vsub.f32 %v47, %v49
    %v52 = vsub.f32 %v48, %v50
    %v53 = vsub.f32 %v25, %v37
    %v54 = vsub.f32 %v26, %v38
    %v55 = vadd.f32 %v51, 1e-05
    %v56 = vadd.f32 %v52, 1e-05
    %v57 = vrsqrt.pop %v55
    %v58 = vrsqrt.pop %v56
    %v59 = vmul.f32 %v53, %v57
    %v60 = vmul.f32 %v54, %v58
    %v62 = vlaneseq
    %v63 = vshrl.u32 %v62, 7
    %v64 = vsub.s32 0, %v63
    %v65 = vrot.slane %v27, %v64
    %v67 = vmul.f32 %v59, %v65
    %v68 = vmul.f32 %v60, %v65
    %v70 = vlaneseq
    %v71 = vshrl.u32 %v70, 7
    %v72 = vsub.s32 0, %v71
    %v73 = vrot.slane %v28, %v72
    %v75 = vadd.f32 %v67, %v73
    %v76 = vadd.f32 %v68, %v73
    %v77 = vpack.c.bf16 %v76, %v75
    %78 = vst.msk [vmem:[#allocation2] sm:$0xff] %vm29, %v77
  $region25: #{decoder_forward.26} parent=0 // pred_fallthru
    _
  %v79 = vld [vmem:[#allocation2] sm:$0xff]
  %v80 = vld [vmem:[%s3] sm:$0xf]
  %v81 = vld [vmem:[%s3 + $0x4] sm:$0xf]
  %v82 = vld [vmem:[%s3 + $0x8] sm:$0xf]
  %v83 = vld [vmem:[%s3 + $0xc] sm:$0xf]
  %v84 = vld [vmem:[%s4] sm:$0x1]
  %v86 = vlaneseq
  %v87 = vshrl.u32 %v86, 7
  %v88 = vsub.s32 0, %v87
  %v89 = vrot.slane %v84, %v88
  %v95 = vunpack.c.l.b16 %v80
  %v96 = vunpack.c.l.b16 %v81
  %v97 = vunpack.c.l.b16 %v82
  %v98 = vunpack.c.l.b16 %v83
  %v99 = vpack.c.b16 %v96, %v95
  %v100 = vpack.c.b16 %v98, %v97
  %vm103 = vcmask 261120
  %v105 = vsel %vm103, %v79, 0
  %107 = vmatprep.subr.bf16.mxu0 0
  %108 = vmatpush1.bf16.msra.mxu0 %v99
  %109 = vmatprep.subr.bf16.mxu0 0
  %110 = vmatpush1.bf16.msra.mxu0 %v100
  %111 = vmatprep.subr.bf16.mxu0 0
  %112 = vmatpush1.bf16.msra.mxu0 0
  %113 = vmatprep.subr.bf16.mxu0 0
  %114 = vmatpush1.bf16.msra.mxu0 0
  %115 = vmatprep.subr.bf16.mxu0 0
  %116 = vmatpush1.bf16.msra.mxu0 0
  %117 = vmatprep.subr.bf16.mxu0 0
  %118 = vmatpush1.bf16.msra.mxu0 0
  %119 = vmatprep.subr.bf16.mxu0 0
  %120 = vmatpush1.bf16.msra.mxu0 0
  %121 = vmatprep.subr.bf16.mxu0 0
  %122 = vmatpush1.bf16.msra.mxu0 0
  %123 = vmatprep.subr.bf16.mxu0 0
  %124 = vmatpush1.bf16.msra.mxu0 0
  %125 = vmatprep.subr.bf16.mxu0 0
  %126 = vmatpush1.bf16.msra.mxu0 0
  %127 = vmatprep.subr.bf16.mxu0 0
  %128 = vmatpush1.bf16.msra.mxu0 0
  %129 = vmatprep.subr.bf16.mxu0 0
  %130 = vmatpush1.bf16.msra.mxu0 0
  %131 = vmatprep.subr.bf16.mxu0 0
  %132 = vmatpush1.bf16.msra.mxu0 0
  %133 = vmatprep.subr.bf16.mxu0 0
  %134 = vmatpush1.bf16.msra.mxu0 0
  %135 = vmatprep.subr.bf16.mxu0 0
  %136 = vmatpush1.bf16.msra.mxu0 0
  %137 = vmatprep.subr.bf16.mxu0 0
  %138 = vmatpush1.bf16.msra.mxu0 0
  %139 = vmatprep.mubr.bf16.mxu0 0
  %140 = vmatmul.mubr.bf16.gmra.mrb[0].mxu0 %v105
  %v141 = vpop.f32.mrb[0].mxu0
  %v142 = vadd.f32 %v89, %v141
  %v143 = vpop.f32.mrb[0].mxu0
  %v144 = vpop.f32.mrb[0].mxu0
  %v145 = vadd.f32 %v89, %v144
  %v146 = vpop.f32.mrb[0].mxu0
  %147 = vdwg.mxu0
  %v148 = vmul.f32 %v142, 0.5
  %v149 = vmul.f32 %v145, 0.5
  %v150 = vmul.f32 %v142, 0.70710677
  %v151 = vmul.f32 %v145, 0.70710677
  %v152 = verf.f32.pop %v150
  %v153 = verf.f32.pop %v151
  %v154 = vadd.f32 %v152, 1.0
  %v155 = vadd.f32 %v153, 1.0
  %v156 = vmul.f32 %v148, %v154
  %v157 = vmul.f32 %v149, %v155
  %v158 = vpack.c.bf16 %v157, %v156
  %v160 = vunpack.c.l.b16 %v158
  %v161 = vunpack.c.h.b16 %v158
  %v162 = vpack.c.b16 %v160, %v160
  %v163 = vpack.c.b16 %v161, %v161
  %166 = vst [vmem:[%s5] sm:$0xf] %v162
  %167 = vst [vmem:[%s5 + $0x4] sm:$0xf] %v163
  // Predicated region
  $region26: #{decoder_forward.26} parent=0 // pred_check
    _
  $region27: #{decoder_forward.26} parent=0 // pred_check_branch
    %169 = sbr.rel (0) target = $region29
  $region28: #{decoder_forward.26} parent=0 // pred_region
    _
  $region29: #{decoder_forward.26} parent=0 // pred_fallthru
    _
  // Predicated region
  $region30: #{decoder_forward.26} parent=0 // pred_check
    _
  $region31: #{decoder_forward.26} parent=0 // pred_check_branch
    %171 = sbr.rel (0) target = $region33
  $region32: #{decoder_forward.26} parent=0 // pred_region
    _
  $region33: #{decoder_forward.26} parent=0 // pred_fallthru
    _

// kernel: decoder_forward.27
$region0: #{decoder_forward.27}
  #allocation0 [shape = 'u32[]', space=smem, size = 0x4, offset = 0x4, fixed_abs, tag = 'smem constant byte address 0x4 - core index']
  #allocation1 [shape = 'u32[144,128]{1,0:T(1,128)}', space=vmem, size = 0x12000, scoped, tag = 'internal scratch']
  %s0 = inlined_call_operand.vmem [shape: bf16[16,128], index: 0, kind: input, shape index: {}]
  %s1 = inlined_call_operand.vmem [shape: bf16[128,32], index: 1, kind: input, shape index: {}]
  %s2 = inlined_call_operand.vmem [shape: f32[1,32], index: 2, kind: input, shape index: {}]
  %s3 = inlined_call_operand.vmem [shape: f32[16,32], index: 3, kind: input, shape index: {}]
  %s4 = inlined_call_operand.vmem [shape: f32[16,32], index: 4, kind: output, shape index: {}]
  %s5 = sld [smem:[#allocation0]]
  $region26: #{decoder_forward.27} parent=0
    _
  %s7 = ssub.s32 1, %s5
  %s8 = scalar_select 0, %s7, %s5
  // Predicated region
  $region2: #{decoder_forward.27} parent=0 // pred_check
    _
  $region3: #{decoder_forward.27} parent=0 // pred_check_branch
    %10 = sbr.rel (0) target = $region5
  $region4: #{decoder_forward.27} parent=0 // pred_region
    _
  $region5: #{decoder_forward.27} parent=0 // pred_fallthru
    _
  // Predicated region
  $region6: #{decoder_forward.27} parent=0 // pred_check
    _
  $region7: #{decoder_forward.27} parent=0 // pred_check_branch
    %12 = sbr.rel (0) target = $region9
  $region8: #{decoder_forward.27} parent=0 // pred_region
    _
  $region9: #{decoder_forward.27} parent=0 // pred_fallthru
    _
  // Predicated region
  $region10: #{decoder_forward.27} parent=0 // pred_check
    _
  $region11: #{decoder_forward.27} parent=0 // pred_check_branch
    %14 = sbr.rel (0) target = $region13
  $region12: #{decoder_forward.27} parent=0 // pred_region
    _
  $region13: #{decoder_forward.27} parent=0 // pred_fallthru
    _
  // Predicated region
  $region14: #{decoder_forward.27} parent=0 // pred_check
    _
  $region15: #{decoder_forward.27} parent=0 // pred_check_branch
    %16 = sbr.rel (0) target = $region17
  $region16: #{decoder_forward.27} parent=0 // pred_region
    _
  $region17: #{decoder_forward.27} parent=0 // pred_fallthru
    _
  %v18 = vld [vmem:[%s0] sm:$0xf]
  %v19 = vld [vmem:[%s0 + $0x4] sm:$0xf]
  %v20 = vld [vmem:[%s1] sm:$0xf]
  %v21 = vld [vmem:[%s1 + $0x4] sm:$0xf]
  %v22 = vld [vmem:[%s1 + $0x8] sm:$0xf]
  %v23 = vld [vmem:[%s1 + $0xc] sm:$0xf]
  %v24 = vld [vmem:[%s1 + $0x10] sm:$0xf]
  %v25 = vld [vmem:[%s1 + $0x14] sm:$0xf]
  %v26 = vld [vmem:[%s1 + $0x18] sm:$0xf]
  %v27 = vld [vmem:[%s1 + $0x1c] sm:$0xf]
  %v28 = vld [vmem:[%s1 + $0x20] sm:$0xf]
  %v29 = vld [vmem:[%s1 + $0x24] sm:$0xf]
  %v30 = vld [vmem:[%s1 + $0x28] sm:$0xf]
  %v31 = vld [vmem:[%s1 + $0x2c] sm:$0xf]
  %v32 = vld [vmem:[%s1 + $0x30] sm:$0xf]
  %v33 = vld [vmem:[%s1 + $0x34] sm:$0xf]
  %v34 = vld [vmem:[%s1 + $0x38] sm:$0xf]
  %v35 = vld [vmem:[%s1 + $0x3c] sm:$0xf]
  %v36 = vld [vmem:[%s2] sm:$0x1]
  %v38 = vlaneseq
  %v39 = vshrl.u32 %v38, 7
  %v40 = vsub.s32 0, %v39
  %v41 = vrot.slane %v36, %v40
  %v45 = vunpack.c.l.b16 %v18
  %v46 = vunpack.c.l.b16 %v19
  %v47 = vpack.c.b16 %v46, %v45
  %v65 = vunpack.c.l.b16 %v20
  %v66 = vunpack.c.l.b16 %v21
  %v67 = vunpack.c.l.b16 %v22
  %v68 = vunpack.c.l.b16 %v23
  %v69 = vunpack.c.l.b16 %v24
  %v70 = vunpack.c.l.b16 %v25
  %v71 = vunpack.c.l.b16 %v26
  %v72 = vunpack.c.l.b16 %v27
  %v73 = vunpack.c.l.b16 %v28
  %v74 = vunpack.c.l.b16 %v29
  %v75 = vunpack.c.l.b16 %v30
  %v76 = vunpack.c.l.b16 %v31
  %v77 = vunpack.c.l.b16 %v32
  %v78 = vunpack.c.l.b16 %v33
  %v79 = vunpack.c.l.b16 %v34
  %v80 = vunpack.c.l.b16 %v35
  %v81 = vpack.c.b16 %v66, %v65
  %v82 = vpack.c.b16 %v68, %v67
  %v83 = vpack.c.b16 %v70, %v69
  %v84 = vpack.c.b16 %v72, %v71
  %v85 = vpack.c.b16 %v74, %v73
  %v86 = vpack.c.b16 %v76, %v75
  %v87 = vpack.c.b16 %v78, %v77
  %v88 = vpack.c.b16 %v80, %v79
  %97 = vmatprep.subr.bf16.mxu0 0
  %98 = vmatpush1.bf16.msra.mxu0 %v81
  %99 = vmatprep.subr.bf16.mxu0 0
  %100 = vmatpush1.bf16.msra.mxu0 %v82
  %101 = vmatprep.subr.bf16.mxu0 0
  %102 = vmatpush1.bf16.msra.mxu0 %v83
  %103 = vmatprep.subr.bf16.mxu0 0
  %104 = vmatpush1.bf16.msra.mxu0 %v84
  %105 = vmatprep.subr.bf16.mxu0 0
  %106 = vmatpush1.bf16.msra.mxu0 %v85
  %107 = vmatprep.subr.bf16.mxu0 0
  %108 = vmatpush1.bf16.msra.mxu0 %v86
  %109 = vmatprep.subr.bf16.mxu0 0
  %110 = vmatpush1.bf16.msra.mxu0 %v87
  %111 = vmatprep.subr.bf16.mxu0 0
  %112 = vmatpush1.bf16.msra.mxu0 %v88
  %113 = vmatprep.subr.bf16.mxu0 0
  %114 = vmatpush1.bf16.msra.mxu0 0
  %115 = vmatprep.subr.bf16.mxu0 0
  %116 = vmatpush1.bf16.msra.mxu0 0
  %117 = vmatprep.subr.bf16.mxu0 0
  %118 = vmatpush1.bf16.msra.mxu0 0
  %119 = vmatprep.subr.bf16.mxu0 0
  %120 = vmatpush1.bf16.msra.mxu0 0
  %121 = vmatprep.subr.bf16.mxu0 0
  %122 = vmatpush1.bf16.msra.mxu0 0
  %123 = vmatprep.subr.bf16.mxu0 0
  %124 = vmatpush1.bf16.msra.mxu0 0
  %125 = vmatprep.subr.bf16.mxu0 0
  %126 = vmatpush1.bf16.msra.mxu0 0
  %127 = vmatprep.subr.bf16.mxu0 0
  %128 = vmatpush1.bf16.msra.mxu0 0
  %129 = vmatprep.mubr.bf16.mxu0 0
  %130 = vmatmul.mubr.bf16.gmra.mrb[0].mxu0 %v47
  %v131 = vpop.f32.mrb[0].mxu0
  %v132 = vadd.f32 %v41, %v131
  %v133 = vpop.f32.mrb[0].mxu0
  %v134 = vpop.f32.mrb[0].mxu0
  %v135 = vadd.f32 %v41, %v134
  %v136 = vpop.f32.mrb[0].mxu0
  %137 = vdwg.mxu0
  %v138 = vld [vmem:[%s3] sm:$0xff]
  %v139 = vld [vmem:[%s3 + $0x8] sm:$0xff]
  %v140 = vadd.f32 %v132, %v138
  %v141 = vadd.f32 %v135, %v139
  %vm142 = vcmask 261120
  %143 = vst.msk [vmem:[%s4] sm:$0xff] %vm142, %v140
  %144 = vst.msk [vmem:[%s4 + $0x8] sm:$0xff] %vm142, %v141
  // Predicated region
  $region18: #{decoder_forward.27} parent=0 // pred_check
    _
  $region19: #{decoder_forward.27} parent=0 // pred_check_branch
    %146 = sbr.rel (0) target = $region21
  $region20: #{decoder_forward.27} parent=0 // pred_region
    _
  $region21: #{decoder_forward.27} parent=0 // pred_fallthru
    _
  // Predicated region
  $region22: #{decoder_forward.27} parent=0 // pred_check
    _
  $region23: #{decoder_forward.27} parent=0 // pred_check_branch
    %148 = sbr.rel (0) target = $region25
  $region24: #{decoder_forward.27} parent=0 // pred_region
    _
  $region25: #{decoder_forward.27} parent=0 // pred_fallthru
    _

// kernel: decoder_forward.37
$region0: #{decoder_forward.37}
  #allocation0 [shape = 'u32[]', space=smem, size = 0x4, offset = 0x4, fixed_abs, tag = 'smem constant byte address 0x4 - core index']
  #allocation1 [shape = 'u32[144,128]{1,0:T(1,128)}', space=vmem, size = 0x12000, scoped, tag = 'internal scratch']
  #allocation2 [shape = 'bf16[16,32]{1,0:T(16,128)(2,1)}', space=vmem, size = 0x1000, scoped, tag = 'scratch operand']
  %s0 = inlined_call_operand.vmem [shape: f32[16,32], index: 0, kind: input, shape index: {}]
  %s1 = inlined_call_operand.vmem [shape: f32[1,32], index: 1, kind: input, shape index: {}]
  %s2 = inlined_call_operand.vmem [shape: f32[1,32], index: 2, kind: input, shape index: {}]
  %s3 = inlined_call_operand.vmem [shape: bf16[256,32], index: 3, kind: input, shape index: {}]
  %s4 = inlined_call_operand.hbm [shape: f32[16,256], index: 4, kind: output, shape index: {}]
  %s5 = sld [smem:[#allocation0]]
  $region30: #{decoder_forward.37} parent=0
    _
  %s7 = ssub.s32 1, %s5
  %s8 = scalar_select 0, %s7, %s5
  $region1: #{decoder_forward.37} parent=0
    #allocation3 [shape = 'u8[16384]{0}', space=vmem, size = 0x4000, scoped, tag = 'output window, operand 0, single buffered']
    #allocation4 [shape = 's32[1]{0}', space=sflag, size = 0x4, scoped, tag = 'scoped memory for decoder_forward.37']
    %9 = vsyncpa [#allocation4], 0
    // Predicated region
    $region2: #{decoder_forward.37} parent=1 // pred_check
      _
    $region3: #{decoder_forward.37} parent=1 // pred_check_branch
      %11 = sbr.rel (0) target = $region5
    $region4: #{decoder_forward.37} parent=1 // pred_region
      _
    $region5: #{decoder_forward.37} parent=1 // pred_fallthru
      _
    // Predicated region
    $region6: #{decoder_forward.37} parent=1 // pred_check
      _
    $region7: #{decoder_forward.37} parent=1 // pred_check_branch
      %13 = sbr.rel (0) target = $region9
    $region8: #{decoder_forward.37} parent=1 // pred_region
      _
    $region9: #{decoder_forward.37} parent=1 // pred_fallthru
      _
    // Predicated region
    $region10: #{decoder_forward.37} parent=1 // pred_check
      _
    $region11: #{decoder_forward.37} parent=1 // pred_check_branch
      %15 = sbr.rel (0) target = $region13
    $region12: #{decoder_forward.37} parent=1 // pred_region
      _
    $region13: #{decoder_forward.37} parent=1 // pred_fallthru
      _
    // Predicated region
    $region14: #{decoder_forward.37} parent=1 // pred_check
      _
    $region15: #{decoder_forward.37} parent=1 // pred_check_branch
      %17 = sbr.rel (0) target = $region17
    $region16: #{decoder_forward.37} parent=1 // pred_region
      _
    $region17: #{decoder_forward.37} parent=1 // pred_fallthru
      _
    %p19 = scmp.eq.s32.totalorder 0, 0
    // Predicated region
    $region18: #{decoder_forward.37} parent=1 // pred_check
      %p20 = pneg %p19
    $region19: #{decoder_forward.37} parent=1 // pred_check_branch
      %22 = sbr.rel (%p20) target = $region21
    $region20: #{decoder_forward.37} parent=1 // pred_region
      %v23 = vld [vmem:[%s0] sm:$0xff]
      %v24 = vld [vmem:[%s0 + $0x8] sm:$0xff]
      %v25 = vld [vmem:[%s1] sm:$0x1]
      %v26 = vld [vmem:[%s2] sm:$0x1]
      %vm27 = vcmask 261120
      %v28 = vsel %vm27, %v23, 0.0
      %29 = vadd.xlane.f32.xlu0 %v28
      %v30 = vpop.xlane.xlu0 %29
      %v31 = vsel %vm27, %v24, 0.0
      %32 = vadd.xlane.f32.xlu0 %v31
      %v33 = vpop.xlane.xlu0 %32
      %v34 = vrcp.pop 32.0
      %v35 = vmul.f32 %v30, %v34
      %v36 = vmul.f32 %v33, %v34
      %v37 = vmul.f32 %v23, %v23
      %v38 = vmul.f32 %v24, %v24
      %v39 = vsel %vm27, %v37, 0.0
      %40 = vadd.xlane.f32.xlu0 %v39
      %v41 = vpop.xlane.xlu0 %40
      %v42 = vsel %vm27, %v38, 0.0
      %43 = vadd.xlane.f32.xlu0 %v42
      %v44 = vpop.xlane.xlu0 %43
      %v45 = vmul.f32 %v41, %v34
      %v46 = vmul.f32 %v44, %v34
      %v47 = vmul.f32 %v35, %v35
      %v48 = vmul.f32 %v36, %v36
      %v49 = vsub.f32 %v45, %v47
      %v50 = vsub.f32 %v46, %v48
      %v51 = vsub.f32 %v23, %v35
      %v52 = vsub.f32 %v24, %v36
      %v53 = vadd.f32 %v49, 1e-05
      %v54 = vadd.f32 %v50, 1e-05
      %v55 = vrsqrt.pop %v53
      %v56 = vrsqrt.pop %v54
      %v57 = vmul.f32 %v51, %v55
      %v58 = vmul.f32 %v52, %v56
      %v60 = vlaneseq
      %v61 = vshrl.u32 %v60, 7
      %v62 = vsub.s32 0, %v61
      %v63 = vrot.slane %v25, %v62
      %v65 = vmul.f32 %v57, %v63
      %v66 = vmul.f32 %v58, %v63
      %v68 = vlaneseq
      %v69 = vshrl.u32 %v68, 7
      %v70 = vsub.s32 0, %v69
      %v71 = vrot.slane %v26, %v70
      %v73 = vadd.f32 %v65, %v71
      %v74 = vadd.f32 %v66, %v71
      %v75 = vpack.c.bf16 %v74, %v73
      %76 = vst.msk [vmem:[#allocation2] sm:$0xff] %vm27, %v75
    $region21: #{decoder_forward.37} parent=1 // pred_fallthru
      _
    %v77 = vld [vmem:[#allocation2] sm:$0xff]
    %v78 = vld [vmem:[%s3] sm:$0xf]
    %v79 = vld [vmem:[%s3 + $0x4] sm:$0xf]
    %v80 = vld [vmem:[%s3 + $0x8] sm:$0xf]
    %v81 = vld [vmem:[%s3 + $0xc] sm:$0xf]
    %v82 = vld [vmem:[%s3 + $0x10] sm:$0xf]
    %v83 = vld [vmem:[%s3 + $0x14] sm:$0xf]
    %v84 = vld [vmem:[%s3 + $0x18] sm:$0xf]
    %v85 = vld [vmem:[%s3 + $0x1c] sm:$0xf]
    %v86 = vld [vmem:[%s3 + $0x20] sm:$0xf]
    %v87 = vld [vmem:[%s3 + $0x24] sm:$0xf]
    %v88 = vld [vmem:[%s3 + $0x28] sm:$0xf]
    %v89 = vld [vmem:[%s3 + $0x2c] sm:$0xf]
    %v90 = vld [vmem:[%s3 + $0x30] sm:$0xf]
    %v91 = vld [vmem:[%s3 + $0x34] sm:$0xf]
    %v92 = vld [vmem:[%s3 + $0x38] sm:$0xf]
    %v93 = vld [vmem:[%s3 + $0x3c] sm:$0xf]
    %v94 = vld [vmem:[%s3 + $0x40] sm:$0xf]
    %v95 = vld [vmem:[%s3 + $0x44] sm:$0xf]
    %v96 = vld [vmem:[%s3 + $0x48] sm:$0xf]
    %v97 = vld [vmem:[%s3 + $0x4c] sm:$0xf]
    %v98 = vld [vmem:[%s3 + $0x50] sm:$0xf]
    %v99 = vld [vmem:[%s3 + $0x54] sm:$0xf]
    %v100 = vld [vmem:[%s3 + $0x58] sm:$0xf]
    %v101 = vld [vmem:[%s3 + $0x5c] sm:$0xf]
    %v102 = vld [vmem:[%s3 + $0x60] sm:$0xf]
    %v103 = vld [vmem:[%s3 + $0x64] sm:$0xf]
    %v104 = vld [vmem:[%s3 + $0x68] sm:$0xf]
    %v105 = vld [vmem:[%s3 + $0x6c] sm:$0xf]
    %v106 = vld [vmem:[%s3 + $0x70] sm:$0xf]
    %v107 = vld [vmem:[%s3 + $0x74] sm:$0xf]
    %v108 = vld [vmem:[%s3 + $0x78] sm:$0xf]
    %v109 = vld [vmem:[%s3 + $0x7c] sm:$0xf]
    %v142 = vunpack.c.l.b16 %v78
    %v143 = vunpack.c.l.b16 %v79
    %v144 = vunpack.c.l.b16 %v80
    %v145 = vunpack.c.l.b16 %v81
    %v146 = vunpack.c.l.b16 %v82
    %v147 = vunpack.c.l.b16 %v83
    %v148 = vunpack.c.l.b16 %v84
    %v149 = vunpack.c.l.b16 %v85
    %v150 = vunpack.c.l.b16 %v86
    %v151 = vunpack.c.l.b16 %v87
    %v152 = vunpack.c.l.b16 %v88
    %v153 = vunpack.c.l.b16 %v89
    %v154 = vunpack.c.l.b16 %v90
    %v155 = vunpack.c.l.b16 %v91
    %v156 = vunpack.c.l.b16 %v92
    %v157 = vunpack.c.l.b16 %v93
    %v158 = vunpack.c.l.b16 %v94
    %v159 = vunpack.c.l.b16 %v95
    %v160 = vunpack.c.l.b16 %v96
    %v161 = vunpack.c.l.b16 %v97
    %v162 = vunpack.c.l.b16 %v98
    %v163 = vunpack.c.l.b16 %v99
    %v164 = vunpack.c.l.b16 %v100
    %v165 = vunpack.c.l.b16 %v101
    %v166 = vunpack.c.l.b16 %v102
    %v167 = vunpack.c.l.b16 %v103
    %v168 = vunpack.c.l.b16 %v104
    %v169 = vunpack.c.l.b16 %v105
    %v170 = vunpack.c.l.b16 %v106
    %v171 = vunpack.c.l.b16 %v107
    %v172 = vunpack.c.l.b16 %v108
    %v173 = vunpack.c.l.b16 %v109
    %v174 = vpack.c.b16 %v143, %v142
    %v175 = vpack.c.b16 %v145, %v144
    %v176 = vpack.c.b16 %v147, %v146
    %v177 = vpack.c.b16 %v149, %v148
    %v178 = vpack.c.b16 %v151, %v150
    %v179 = vpack.c.b16 %v153, %v152
    %v180 = vpack.c.b16 %v155, %v154
    %v181 = vpack.c.b16 %v157, %v156
    %v182 = vpack.c.b16 %v159, %v158
    %v183 = vpack.c.b16 %v161, %v160
    %v184 = vpack.c.b16 %v163, %v162
    %v185 = vpack.c.b16 %v165, %v164
    %v186 = vpack.c.b16 %v167, %v166
    %v187 = vpack.c.b16 %v169, %v168
    %v188 = vpack.c.b16 %v171, %v170
    %v189 = vpack.c.b16 %v173, %v172
    %vm190 = vcmask 261120
    %v192 = vsel %vm190, %v77, 0
    %v195 = vsel %vm190, %v174, 0
    %v198 = vsel %vm190, %v175, 0
    %v201 = vsel %vm190, %v176, 0
    %v204 = vsel %vm190, %v177, 0
    %v207 = vsel %vm190, %v178, 0
    %v210 = vsel %vm190, %v179, 0
    %v213 = vsel %vm190, %v180, 0
    %v216 = vsel %vm190, %v181, 0
    %v219 = vsel %vm190, %v182, 0
    %v222 = vsel %vm190, %v183, 0
    %v225 = vsel %vm190, %v184, 0
    %v228 = vsel %vm190, %v185, 0
    %v231 = vsel %vm190, %v186, 0
    %v234 = vsel %vm190, %v187, 0
    %v237 = vsel %vm190, %v188, 0
    %v240 = vsel %vm190, %v189, 0
    %242 = vmatprep.subr.bf16.mxu0 0
    %243 = vmatpush1.bf16.xpose.msra.mxu0 %v195
    %244 = vmatprep.subr.bf16.mxu0 0
    %245 = vmatpush1.bf16.xpose.msra.mxu0 %v198
    %246 = vmatprep.subr.bf16.mxu0 0
    %247 = vmatpush1.bf16.xpose.msra.mxu0 %v201
    %248 = vmatprep.subr.bf16.mxu0 0
    %249 = vmatpush1.bf16.xpose.msra.mxu0 %v204
    %250 = vmatprep.subr.bf16.mxu0 0
    %251 = vmatpush1.bf16.xpose.msra.mxu0 %v207
    %252 = vmatprep.subr.bf16.mxu0 0
    %253 = vmatpush1.bf16.xpose.msra.mxu0 %v210
    %254 = vmatprep.subr.bf16.mxu0 0
    %255 = vmatpush1.bf16.xpose.msra.mxu0 %v213
    %256 = vmatprep.subr.bf16.mxu0 0
    %257 = vmatpush1.bf16.xpose.msra.mxu0 %v216
    %258 = vmatprep.subr.bf16.mxu0 0
    %259 = vmatpush1.bf16.xpose.msra.mxu0 %v219
    %260 = vmatprep.subr.bf16.mxu0 0
    %261 = vmatpush1.bf16.xpose.msra.mxu0 %v222
    %262 = vmatprep.subr.bf16.mxu0 0
    %263 = vmatpush1.bf16.xpose.msra.mxu0 %v225
    %264 = vmatprep.subr.bf16.mxu0 0
    %265 = vmatpush1.bf16.xpose.msra.mxu0 %v228
    %266 = vmatprep.subr.bf16.mxu0 0
    %267 = vmatpush1.bf16.xpose.msra.mxu0 %v231
    %268 = vmatprep.subr.bf16.mxu0 0
    %269 = vmatpush1.bf16.xpose.msra.mxu0 %v234
    %270 = vmatprep.subr.bf16.mxu0 0
    %271 = vmatpush1.bf16.xpose.msra.mxu0 %v237
    %272 = vmatprep.subr.bf16.mxu0 0
    %273 = vmatpush1.bf16.xpose.msra.mxu0 %v240
    %274 = vmatprep.mubr.bf16.mxu0 0
    %275 = vmatmul.mubr.bf16.gmra.mrb[0].mxu0 %v192
    %v276 = vpop.f32.mrb[0].mxu0
    %v277 = vadd.f32 0.0, %v276
    %v278 = vpop.f32.mrb[0].mxu0
    %v279 = vadd.f32 0.0, %v278
    %v280 = vpop.f32.mrb[0].mxu0
    %v281 = vadd.f32 0.0, %v280
    %v282 = vpop.f32.mrb[0].mxu0
    %v283 = vadd.f32 0.0, %v282
    %284 = vdwg.mxu0
    %285 = vst [vmem:[#allocation3] sm:$0xff] %v277
    %286 = vst [vmem:[#allocation3 + $0x8] sm:$0xff] %v279
    %287 = vst [vmem:[#allocation3 + $0x10] sm:$0xff] %v281
    %288 = vst [vmem:[#allocation3 + $0x18] sm:$0xff] %v283
    // Predicated region
    $region22: #{decoder_forward.37} parent=1 // pred_check
      _
    $region23: #{decoder_forward.37} parent=1 // pred_check_branch
      %290 = sbr.rel (0) target = $region25
    $region24: #{decoder_forward.37} parent=1 // pred_region
      %s292 = ssub.s32 512, 512
      %293 = vsyncadd [#allocation4], %s292
      %s294 = sshll.u32 [#allocation3], 4
      %s295 = int_to_ptr.vmem [resolvable:$true] %s294
      %300 = dma.vmem_to_hbm [thread:$0]  %s295, 512, %s4, [#allocation4], 256, 256, 16
    $region25: #{decoder_forward.37} parent=1 // pred_fallthru
      _
    // Predicated region
    $region26: #{decoder_forward.37} parent=1 // pred_check
      _
    $region27: #{decoder_forward.37} parent=1 // pred_check_branch
      %302 = sbr.rel (0) target = $region29
    $region28: #{decoder_forward.37} parent=1 // pred_region
      %303 = dma.done [#allocation4], 512
    $region29: #{decoder_forward.37} parent=1 // pred_fallthru
      _
    %304 = vsyncpa [#allocation4], 1

// kernel: decoder_forward.24
$region0: #{decoder_forward.24}
  #allocation0 [shape = 'u32[]', space=smem, size = 0x4, offset = 0x4, fixed_abs, tag = 'smem constant byte address 0x4 - core index']
  #allocation1 [shape = 'u32[144,128]{1,0:T(1,128)}', space=vmem, size = 0x12000, scoped, tag = 'internal scratch']
  %s0 = inlined_call_operand.vmem [shape: bf16[2,8,32], index: 0, kind: input, shape index: {}]
  %s1 = inlined_call_operand.vmem [shape: bf16[2,8,2,32], index: 1, kind: input, shape index: {}]
  %s2 = inlined_call_operand.vmem [shape: bf16[2,8,32], index: 2, kind: output, shape index: {}]
  %s3 = sld [smem:[#allocation0]]
  $region41: #{decoder_forward.24} parent=0
    _
  %s5 = ssub.s32 1, %s3
  %s6 = scalar_select 0, %s5, %s3
  loop: start=0, step=1, limit=4
  $region2: #{decoder_forward.24} parent=0 // loop_pre_header
    _
  $region3: #{decoder_forward.24} parent=0 // loop_header
    %s8 = sphi 0, %s12
    %p9 = scmp.ge.s32.totalorder %s8, 4
    %s15 = sphi 0, %s27
    %s16 = sphi 0, %s23
    %s17 = sphi 0, %s15
    %s18 = sphi 0, %s16
    %s19 = sphi 0, %s17
    %s20 = sphi 0, %s18
    %s32 = sphi 0, %s34
    %s35 = sphi 0, %s32
    %s36 = sphi 0, %s35
    %s52 = sphi 0, %s36
    %s60 = sphi 0, %s62
    %s63 = sphi 0, %s60
    %s64 = sphi 0, %s63
    %s80 = sphi 0, %s64
    %s88 = sphi 0, %s90
    %s91 = sphi 0, %s88
    %s92 = sphi 0, %s91
    %s108 = sphi 0, %s92
  $region4: #{decoder_forward.24} parent=0 // loop_header_branch
    %11 = sbr.rel (%p9) target = $region8
  $region5: #{decoder_forward.24} parent=0 // loop_body
    %s13 = ssub.s32 %s8, 1
    %s14 = ssub.s32 %s8, 2
    %s21 = sadd.s32 1, %s16
    %p22 = scmp.ge.s32.totalorder %s21, 1
    %s23 = scalar_select %p22, 0, %s21
    %s24 = sadd.s32 1, %s15
    %s25 = scalar_select %p22, %s24, %s15
    %p26 = scmp.ge.s32.totalorder %s25, 2
    %s27 = scalar_select %p26, 0, %s25
    %s28 = ssub.s32 %s15, %s27
    %s29 = ssub.s32 %s16, %s23
    %s30 = sor.u32 %s28, %s29
    %p31 = scmp.eq.s32.totalorder %s30, 0
    %s33 = sadd.s32 %s32, 1
    %s34 = scalar_select %p31, %s32, %s33
    %p37 = pneg %p31
    %p38 = scmp.eq.s32.totalorder %s8, 1
    %p39 = por %p37, %p38
    %p40 = scmp.ne.s32.totalorder %s32, %s35
    %p41 = scmp.eq.s32.totalorder %s8, 0
    %p42 = por %p40, %p41
    %p43 = scmp.ne.s32.totalorder %s32, %s35
    %p44 = scmp.eq.s32.totalorder %s13, 1
    %p45 = por %p43, %p44
    %p46 = scmp.ne.s32.totalorder %s35, %s36
    %p47 = scmp.eq.s32.totalorder %s13, 0
    %p48 = por %p46, %p47
    %p49 = scmp.ne.s32.totalorder %s35, %s36
    %p50 = scmp.eq.s32.totalorder %s14, 1
    %p51 = por %p49, %p50
    %p53 = scmp.ne.s32.totalorder %s36, %s52
    %p54 = scmp.eq.s32.totalorder %s14, 0
    %p55 = por %p53, %p54
    %s56 = ssub.s32 %s15, %s27
    %s57 = ssub.s32 %s16, %s23
    %s58 = sor.u32 %s56, %s57
    %p59 = scmp.eq.s32.totalorder %s58, 0
    %s61 = sadd.s32 %s60, 1
    %s62 = scalar_select %p59, %s60, %s61
    %p65 = pneg %p59
    %p66 = scmp.eq.s32.totalorder %s8, 1
    %p67 = por %p65, %p66
    %p68 = scmp.ne.s32.totalorder %s60, %s63
    %p69 = scmp.eq.s32.totalorder %s8, 0
    %p70 = por %p68, %p69
    %p71 = scmp.ne.s32.totalorder %s60, %s63
    %p72 = scmp.eq.s32.totalorder %s13, 1
    %p73 = por %p71, %p72
    %p74 = scmp.ne.s32.totalorder %s63, %s64
    %p75 = scmp.eq.s32.totalorder %s13, 0
    %p76 = por %p74, %p75
    %p77 = scmp.ne.s32.totalorder %s63, %s64
    %p78 = scmp.eq.s32.totalorder %s14, 1
    %p79 = por %p77, %p78
    %p81 = scmp.ne.s32.totalorder %s64, %s80
    %p82 = scmp.eq.s32.totalorder %s14, 0
    %p83 = por %p81, %p82
    %s84 = ssub.s32 %s15, %s27
    %s85 = ssub.s32 %s16, %s23
    %s86 = sor.u32 %s84, %s85
    %p87 = scmp.eq.s32.totalorder %s86, 0
    %s89 = sadd.s32 %s88, 1
    %s90 = scalar_select %p87, %s88, %s89
    %p93 = pneg %p87
    %p94 = scmp.eq.s32.totalorder %s8, 1
    %p95 = por %p93, %p94
    %p96 = scmp.ne.s32.totalorder %s88, %s91
    %p97 = scmp.eq.s32.totalorder %s8, 0
    %p98 = por %p96, %p97
    %p99 = scmp.ne.s32.totalorder %s88, %s91
    %p100 = scmp.eq.s32.totalorder %s13, 1
    %p101 = por %p99, %p100
    %p102 = scmp.ne.s32.totalorder %s91, %s92
    %p103 = scmp.eq.s32.totalorder %s13, 0
    %p104 = por %p102, %p103
    %p105 = scmp.ne.s32.totalorder %s91, %s92
    %p106 = scmp.eq.s32.totalorder %s14, 1
    %p107 = por %p105, %p106
    %p109 = scmp.ne.s32.totalorder %s92, %s108
    %p110 = scmp.eq.s32.totalorder %s14, 0
    %p111 = por %p109, %p110
    %p112 = scmp.le.s32.totalorder 1, %s8
    %p113 = scmp.lt.s32.totalorder %s8, 3
    %p114 = pnand %p112, %p113
    %p115 = pneg %p114
    // Predicated region
    $region9: #{decoder_forward.24} parent=5 // pred_check
      _
    $region10: #{decoder_forward.24} parent=5 // pred_check_branch
      %117 = sbr.rel (%p114) target = $region12
    $region11: #{decoder_forward.24} parent=5 // pred_region
      %s118 = ssub.s32 %s8, 1
    $region12: #{decoder_forward.24} parent=5 // pred_fallthru
      _
    %p119 = scmp.lt.s32.totalorder %s8, 2
    // Predicated region
    $region13: #{decoder_forward.24} parent=5 // pred_check
      %p120 = pneg %p119
    $region14: #{decoder_forward.24} parent=5 // pred_check_branch
      %122 = sbr.rel (%p120) target = $region16
    $region15: #{decoder_forward.24} parent=5 // pred_region
      // Predicated region
      $region17: #{decoder_forward.24} parent=15 // pred_check
        %p123 = pneg %p42
      $region18: #{decoder_forward.24} parent=15 // pred_check_branch
        %125 = sbr.rel (%p123) target = $region20
      $region19: #{decoder_forward.24} parent=15 // pred_region
        %p126 = scmp.lt.s32.totalorder %s15, 1
        %s127 = scalar_select %p126, %s15, 1
        %p128 = scmp.lt.s32.totalorder %s16, 0
        %s129 = scalar_select %p128, %s16, 0
        %s130 = sadd.s32 %s129, %s127
        %s131 = smul.addr %s130, 4
        %s132 = scalar_lea.vmem %s0, %s131
      $region20: #{decoder_forward.24} parent=15 // pred_fallthru
        _
      // Predicated region
      $region21: #{decoder_forward.24} parent=15 // pred_check
        %p133 = pneg %p70
      $region22: #{decoder_forward.24} parent=15 // pred_check_branch
        %135 = sbr.rel (%p133) target = $region24
      $region23: #{decoder_forward.24} parent=15 // pred_region
        %p136 = scmp.lt.s32.totalorder %s15, 1
        %s137 = scalar_select %p136, %s15, 1
        %p138 = scmp.lt.s32.totalorder %s16, 0
        %s139 = scalar_select %p138, %s16, 0
        %s140 = smul.addr %s137, 8
        %s141 = sadd.s32 %s139, %s140
        %s142 = scalar_lea.vmem %s1, %s141
      $region24: #{decoder_forward.24} parent=15 // pred_fallthru
        _
    $region16: #{decoder_forward.24} parent=5 // pred_fallthru
      _
    %p143 = scmp.le.s32.totalorder 1, %s8
    %p144 = scmp.lt.s32.totalorder %s8, 3
    %p145 = pnand %p143, %p144
    %p146 = pneg %p145
    // Predicated region
    $region25: #{decoder_forward.24} parent=5 // pred_check
      _
    $region26: #{decoder_forward.24} parent=5 // pred_check_branch
      %148 = sbr.rel (%p145) target = $region28
    $region27: #{decoder_forward.24} parent=5 // pred_region
      %s149 = ssub.s32 %s8, 1
      %p150 = scmp.lt.s32.totalorder %s17, 1
      %s151 = scalar_select %p150, %s17, 1
      %p152 = scmp.lt.s32.totalorder %s18, 0
      %s153 = scalar_select %p152, %s18, 0
      %s154 = sadd.s32 %s153, %s151
      %s155 = smul.addr %s154, 4
      %s156 = scalar_lea.vmem %s0, %s155
      %p157 = pneg %p48
      %p158 = pneg %p45
      %p159 = scmp.lt.s32.totalorder %s17, 1
      %s160 = scalar_select %p159, %s17, 1
      %p161 = scmp.lt.s32.totalorder %s18, 0
      %s162 = scalar_select %p161, %s18, 0
      %s163 = smul.addr %s160, 8
      %s164 = sadd.s32 %s162, %s163
      %s165 = scalar_lea.vmem %s1, %s164
      %p166 = pneg %p76
      %p167 = pneg %p73
      %p168 = pneg %p104
      %p169 = pneg %p101
      %p170 = scmp.lt.s32.totalorder %s17, 1
      %s171 = scalar_select %p170, %s17, 1
      %p172 = scmp.lt.s32.totalorder %s18, 0
      %s173 = scalar_select %p172, %s18, 0
      %s174 = sadd.s32 %s173, %s171
      %s175 = smul.addr %s174, 4
      %s176 = scalar_lea.vmem %s2, %s175
      %p177 = scmp.lt.s32.totalorder %s17, 1
      %s178 = scalar_select %p177, %s17, 1
      %p179 = scmp.lt.s32.totalorder %s18, 0
      %s180 = scalar_select %p179, %s18, 0
      %s181 = sadd.s32 %s180, %s178
      %s182 = smul.addr %s181, 4
      %s183 = scalar_lea.vmem %s0, %s182
      %p184 = scmp.lt.s32.totalorder %s17, 1
      %s185 = scalar_select %p184, %s17, 1
      %p186 = scmp.lt.s32.totalorder %s18, 0
      %s187 = scalar_select %p186, %s18, 0
      %s188 = smul.addr %s185, 8
      %s189 = sadd.s32 %s187, %s188
      %s190 = scalar_lea.vmem %s1, %s189
      %p191 = scmp.lt.s32.totalorder %s17, 1
      %s192 = scalar_select %p191, %s17, 1
      %p193 = scmp.lt.s32.totalorder %s18, 0
      %s194 = scalar_select %p193, %s18, 0
      %s195 = sadd.s32 %s194, %s192
      %s196 = smul.addr %s195, 4
      %s197 = scalar_lea.vmem %s2, %s196
      %v199 = vld [vmem:[%s183] sm:$0xf]
      %v200 = vld [vmem:[%s190] sm:$0x1]
      %v201 = vld [vmem:[%s190 + $0x1] sm:$0x1]
      %v202 = vld [vmem:[%s190 + $0x2] sm:$0x1]
      %v203 = vld [vmem:[%s190 + $0x3] sm:$0x1]
      %v204 = vld [vmem:[%s190 + $0x4] sm:$0x1]
      %v205 = vld [vmem:[%s190 + $0x5] sm:$0x1]
      %v206 = vld [vmem:[%s190 + $0x6] sm:$0x1]
      %v207 = vld [vmem:[%s190 + $0x7] sm:$0x1]
      %v217 = vunpack.c.l.s4 1966171168
      %v218 = vunpack.c.0.s8 %v217
      %v219 = vlaneseq
      %v220 = vshrl.u32 %v219, 7
      %v221 = vsub.s32 %v218, %v220
      %v222 = vrot.slane %v200, %v221
      %v224 = vunpack.c.l.s4 1966171168
      %v225 = vunpack.c.0.s8 %v224
      %v226 = vlaneseq
      %v227 = vshrl.u32 %v226, 7
      %v228 = vsub.s32 %v225, %v227
      %v229 = vrot.slane %v222, %v228
      %v231 = vunpack.c.l.s4 1966171168
      %v232 = vunpack.c.0.s8 %v231
      %v233 = vlaneseq
      %v234 = vshrl.u32 %v233, 7
      %v235 = vsub.s32 %v232, %v234
      %v236 = vrot.slane %v201, %v235
      %v238 = vunpack.c.l.s4 1966171168
      %v239 = vunpack.c.0.s8 %v238
      %v240 = vlaneseq
      %v241 = vshrl.u32 %v240, 7
      %v242 = vsub.s32 %v239, %v241
      %v243 = vrot.slane %v236, %v242
      %v245 = vunpack.c.l.s4 1966171168
      %v246 = vunpack.c.0.s8 %v245
      %v247 = vlaneseq
      %v248 = vshrl.u32 %v247, 7
      %v249 = vsub.s32 %v246, %v248
      %v250 = vrot.slane %v202, %v249
      %v252 = vunpack.c.l.s4 1966171168
      %v253 = vunpack.c.0.s8 %v252
      %v254 = vlaneseq
      %v255 = vshrl.u32 %v254, 7
      %v256 = vsub.s32 %v253, %v255
      %v257 = vrot.slane %v250, %v256
      %v259 = vunpack.c.l.s4 1966171168
      %v260 = vunpack.c.0.s8 %v259
      %v261 = vlaneseq
      %v262 = vshrl.u32 %v261, 7
      %v263 = vsub.s32 %v260, %v262
      %v264 = vrot.slane %v203, %v263
      %v266 = vunpack.c.l.s4 1966171168
      %v267 = vunpack.c.0.s8 %v266
      %v268 = vlaneseq
      %v269 = vshrl.u32 %v268, 7
      %v270 = vsub.s32 %v267, %v269
      %v271 = vrot.slane %v264, %v270
      %v273 = vunpack.c.l.s4 1966171168
      %v274 = vunpack.c.0.s8 %v273
      %v275 = vlaneseq
      %v276 = vshrl.u32 %v275, 7
      %v277 = vsub.s32 %v274, %v276
      %v278 = vrot.slane %v204, %v277
      %v280 = vunpack.c.l.s4 1966171168
      %v281 = vunpack.c.0.s8 %v280
      %v282 = vlaneseq
      %v283 = vshrl.u32 %v282, 7
      %v284 = vsub.s32 %v281, %v283
      %v285 = vrot.slane %v278, %v284
      %v287 = vunpack.c.l.s4 1966171168
      %v288 = vunpack.c.0.s8 %v287
      %v289 = vlaneseq
      %v290 = vshrl.u32 %v289, 7
      %v291 = vsub.s32 %v288, %v290
      %v292 = vrot.slane %v205, %v291
      %v294 = vunpack.c.l.s4 1966171168
      %v295 = vunpack.c.0.s8 %v294
      %v296 = vlaneseq
      %v297 = vshrl.u32 %v296, 7
      %v298 = vsub.s32 %v295, %v297
      %v299 = vrot.slane %v292, %v298
      %v301 = vunpack.c.l.s4 1966171168
      %v302 = vunpack.c.0.s8 %v301
      %v303 = vlaneseq
      %v304 = vshrl.u32 %v303, 7
      %v305 = vsub.s32 %v302, %v304
      %v306 = vrot.slane %v206, %v305
      %v308 = vunpack.c.l.s4 1966171168
      %v309 = vunpack.c.0.s8 %v308
      %v310 = vlaneseq
      %v311 = vshrl.u32 %v310, 7
      %v312 = vsub.s32 %v309, %v311
      %v313 = vrot.slane %v306, %v312
      %v315 = vunpack.c.l.s4 1966171168
      %v316 = vunpack.c.0.s8 %v315
      %v317 = vlaneseq
      %v318 = vshrl.u32 %v317, 7
      %v319 = vsub.s32 %v316, %v318
      %v320 = vrot.slane %v207, %v319
      %v322 = vunpack.c.l.s4 1966171168
      %v323 = vunpack.c.0.s8 %v322
      %v324 = vlaneseq
      %v325 = vshrl.u32 %v324, 7
      %v326 = vsub.s32 %v323, %v325
      %v327 = vrot.slane %v320, %v326
      %v328 = vunpack.c.l.b16 %v229
      %v329 = vunpack.c.l.b16 %v243
      %v330 = vunpack.c.l.b16 %v257
      %v331 = vunpack.c.l.b16 %v271
      %v332 = vunpack.c.l.b16 %v285
      %v333 = vunpack.c.l.b16 %v299
      %v334 = vunpack.c.l.b16 %v313
      %v335 = vunpack.c.l.b16 %v327
      %v336 = vrot.slane %v329, 7
      %vm337 = vcmask 1041409
      %v338 = vsel %vm337, %v336, %v328
      %v339 = vrot.slane %v330, 6
      %vm340 = vcmask 1042434
      %v341 = vsel %vm340, %v339, %v338
      %v342 = vrot.slane %v331, 5
      %vm343 = vcmask 1043459
      %v344 = vsel %vm343, %v342, %v341
      %v345 = vrot.slane %v332, 4
      %vm346 = vcmask 1044484
      %v347 = vsel %vm346, %v345, %v344
      %v348 = vrot.slane %v333, 3
      %vm349 = vcmask 1045509
      %v350 = vsel %vm349, %v348, %v347
      %v351 = vrot.slane %v334, 2
      %vm352 = vcmask 1046534
      %v353 = vsel %vm352, %v351, %v350
      %v354 = vrot.slane %v335, 1
      %vm355 = vcmask 1047559
      %v356 = vsel %vm355, %v354, %v353
      %v357 = vpack.c.b16 %v356, %v356
      %vm358 = vcmask 64512
      %v360 = vsel %vm358, %v199, 0
      %v363 = vsel %vm358, %v357, 0
      %365 = vmatprep.subr.bf16.mxu0 0
      %366 = vmatpush1.bf16.xpose.msra.mxu0 %v363
      %367 = vmatprep.subr.bf16.mxu0 0
      %368 = vmatpush1.bf16.xpose.msra.mxu0 0
      %369 = vmatprep.subr.bf16.mxu0 0
      %370 = vmatpush1.bf16.xpose.msra.mxu0 0
      %371 = vmatprep.subr.bf16.mxu0 0
      %372 = vmatpush1.bf16.xpose.msra.mxu0 0
      %373 = vmatprep.subr.bf16.mxu0 0
      %374 = vmatpush1.bf16.xpose.msra.mxu0 0
      %375 = vmatprep.subr.bf16.mxu0 0
      %376 = vmatpush1.bf16.xpose.msra.mxu0 0
      %377 = vmatprep.subr.bf16.mxu0 0
      %378 = vmatpush1.bf16.xpose.msra.mxu0 0
      %379 = vmatprep.subr.bf16.mxu0 0
      %380 = vmatpush1.bf16.xpose.msra.mxu0 0
      %381 = vmatprep.subr.bf16.mxu0 0
      %382 = vmatpush1.bf16.xpose.msra.mxu0 0
      %383 = vmatprep.subr.bf16.mxu0 0
      %384 = vmatpush1.bf16.xpose.msra.mxu0 0
      %385 = vmatprep.subr.bf16.mxu0 0
      %386 = vmatpush1.bf16.xpose.msra.mxu0 0
      %387 = vmatprep.subr.bf16.mxu0 0
      %388 = vmatpush1.bf16.xpose.msra.mxu0 0
      %389 = vmatprep.subr.bf16.mxu0 0
      %390 = vmatpush1.bf16.xpose.msra.mxu0 0
      %391 = vmatprep.subr.bf16.mxu0 0
      %392 = vmatpush1.bf16.xpose.msra.mxu0 0
      %393 = vmatprep.subr.bf16.mxu0 0
      %394 = vmatpush1.bf16.xpose.msra.mxu0 0
      %395 = vmatprep.subr.bf16.mxu0 0
      %396 = vmatpush1.bf16.xpose.msra.mxu0 0
      %397 = vmatprep.mubr.bf16.mxu0 0
      %398 = vmatmul.mubr.bf16.gmra.mrb[0].mxu0 %v360
      %v399 = vpop.f32.mrb[0].mxu0
      %v400 = vadd.f32 0.0, %v399
      %v401 = vpop.f32.mrb[0].mxu0
      %v402 = vpop.f32.mrb[0].mxu0
      %v403 = vpop.f32.mrb[0].mxu0
      %404 = vdwg.mxu0
      %v405 = vsel %vm358, %v400, -inf
      %406 = vmax.xlane.f32.xlu0 %v405
      %v407 = vpop.xlane.xlu0 %406
      %v408 = vsub.f32 %v400, %v407
      %v409 = vmul.f32 %v408, 1.442695
      %v410 = vpow.pop %v409
      %v411 = vsel %vm358, %v410, 0.0
      %412 = vadd.xlane.f32.xlu0 %v411
      %v413 = vpop.xlane.xlu0 %412
      %v414 = vpack.c.bf16 %v410, %v410
      %v415 = vrot.slane %v328, 1
      %v416 = vsel %vm337, %v329, %v415
      %v417 = vrot.slane %v330, 7
      %v418 = vsel %vm340, %v417, %v416
      %v419 = vrot.slane %v331, 6
      %v420 = vsel %vm343, %v419, %v418
      %v421 = vrot.slane %v332, 5
      %v422 = vsel %vm346, %v421, %v420
      %v423 = vrot.slane %v333, 4
      %v424 = vsel %vm349, %v423, %v422
      %v425 = vrot.slane %v334, 3
      %v426 = vsel %vm352, %v425, %v424
      %v427 = vrot.slane %v335, 2
      %v428 = vsel %vm355, %v427, %v426
      %v429 = vpack.c.b16 %v428, %v428
      %v431 = vsel %vm358, %v414, 0
      %vm433 = vcmask 1043456
      %v435 = vsel %vm433, %v429, 0
      %437 = vmatprep.subr.bf16.mxu0 0
      %438 = vmatpush1.bf16.msra.mxu0 %v435
      %439 = vmatprep.subr.bf16.mxu0 0
      %440 = vmatpush1.bf16.msra.mxu0 0
      %441 = vmatprep.subr.bf16.mxu0 0
      %442 = vmatpush1.bf16.msra.mxu0 0
      %443 = vmatprep.subr.bf16.mxu0 0
      %444 = vmatpush1.bf16.msra.mxu0 0
      %445 = vmatprep.subr.bf16.mxu0 0
      %446 = vmatpush1.bf16.msra.mxu0 0
      %447 = vmatprep.subr.bf16.mxu0 0
      %448 = vmatpush1.bf16.msra.mxu0 0
      %449 = vmatprep.subr.bf16.mxu0 0
      %450 = vmatpush1.bf16.msra.mxu0 0
      %451 = vmatprep.subr.bf16.mxu0 0
      %452 = vmatpush1.bf16.msra.mxu0 0
      %453 = vmatprep.subr.bf16.mxu0 0
      %454 = vmatpush1.bf16.msra.mxu0 0
      %455 = vmatprep.subr.bf16.mxu0 0
      %456 = vmatpush1.bf16.msra.mxu0 0
      %457 = vmatprep.subr.bf16.mxu0 0
      %458 = vmatpush1.bf16.msra.mxu0 0
      %459 = vmatprep.subr.bf16.mxu0 0
      %460 = vmatpush1.bf16.msra.mxu0 0
      %461 = vmatprep.subr.bf16.mxu0 0
      %462 = vmatpush1.bf16.msra.mxu0 0
      %463 = vmatprep.subr.bf16.mxu0 0
      %464 = vmatpush1.bf16.msra.mxu0 0
      %465 = vmatprep.subr.bf16.mxu0 0
      %466 = vmatpush1.bf16.msra.mxu0 0
      %467 = vmatprep.subr.bf16.mxu0 0
      %468 = vmatpush1.bf16.msra.mxu0 0
      %469 = vmatprep.mubr.bf16.mxu0 0
      %470 = vmatmul.mubr.bf16.gmra.mrb[0].mxu0 %v431
      %v471 = vpop.f32.mrb[0].mxu0
      %v472 = vadd.f32 0.0, %v471
      %v473 = vpop.f32.mrb[0].mxu0
      %v474 = vpop.f32.mrb[0].mxu0
      %v475 = vpop.f32.mrb[0].mxu0
      %476 = vdwg.mxu0
      %v477 = vrcp.pop %v413
      %v478 = vmul.f32 %v472, %v477
      %v479 = vpack.c.bf16 %v478, %v478
      %vm480 = vcmask 60416
      %481 = vst.msk [vmem:[%s197] sm:$0xf] %vm480, %v479
      %v482 = vld [vmem:[%s183] sm:$0xf]
      %v483 = vld [vmem:[%s190] sm:$0x1]
      %v484 = vld [vmem:[%s190 + $0x1] sm:$0x1]
      %v485 = vld [vmem:[%s190 + $0x2] sm:$0x1]
      %v486 = vld [vmem:[%s190 + $0x3] sm:$0x1]
      %v487 = vld [vmem:[%s190 + $0x4] sm:$0x1]
      %v488 = vld [vmem:[%s190 + $0x5] sm:$0x1]
      %v489 = vld [vmem:[%s190 + $0x6] sm:$0x1]
      %v490 = vld [vmem:[%s190 + $0x7] sm:$0x1]
      %v492 = vunpack.c.l.b16 %v482
      %v493 = vpack.c.b16 %v492, %v492
      %494 = vrot.lane.b32.xlu0 %v493, 120
      %v495 = vpop.permute.xlu0 %494
      %v505 = vunpack.c.l.s4 1966171168
      %v506 = vunpack.c.0.s8 %v505
      %v507 = vlaneseq
      %v508 = vshrl.u32 %v507, 7
      %v509 = vsub.s32 %v506, %v508
      %v510 = vrot.slane %v483, %v509
      %v512 = vunpack.c.l.s4 1966171168
      %v513 = vunpack.c.0.s8 %v512
      %v514 = vlaneseq
      %v515 = vshrl.u32 %v514, 7
      %v516 = vsub.s32 %v513, %v515
      %v517 = vrot.slane %v510, %v516
      %v519 = vunpack.c.l.s4 1966171168
      %v520 = vunpack.c.0.s8 %v519
      %v521 = vlaneseq
      %v522 = vshrl.u32 %v521, 7
      %v523 = vsub.s32 %v520, %v522
      %v524 = vrot.slane %v484, %v523
      %v526 = vunpack.c.l.s4 1966171168
      %v527 = vunpack.c.0.s8 %v526
      %v528 = vlaneseq
      %v529 = vshrl.u32 %v528, 7
      %v530 = vsub.s32 %v527, %v529
      %v531 = vrot.slane %v524, %v530
      %v533 = vunpack.c.l.s4 1966171168
      %v534 = vunpack.c.0.s8 %v533
      %v535 = vlaneseq
      %v536 = vshrl.u32 %v535, 7
      %v537 = vsub.s32 %v534, %v536
      %v538 = vrot.slane %v485, %v537
      %v540 = vunpack.c.l.s4 1966171168
      %v541 = vunpack.c.0.s8 %v540
      %v542 = vlaneseq
      %v543 = vshrl.u32 %v542, 7
      %v544 = vsub.s32 %v541, %v543
      %v545 = vrot.slane %v538, %v544
      %v547 = vunpack.c.l.s4 1966171168
      %v548 = vunpack.c.0.s8 %v547
      %v549 = vlaneseq
      %v550 = vshrl.u32 %v549, 7
      %v551 = vsub.s32 %v548, %v550
      %v552 = vrot.slane %v486, %v551
      %v554 = vunpack.c.l.s4 1966171168
      %v555 = vunpack.c.0.s8 %v554
      %v556 = vlaneseq
      %v557 = vshrl.u32 %v556, 7
      %v558 = vsub.s32 %v555, %v557
      %v559 = vrot.slane %v552, %v558
      %v561 = vunpack.c.l.s4 1966171168
      %v562 = vunpack.c.0.s8 %v561
      %v563 = vlaneseq
      %v564 = vshrl.u32 %v563, 7
      %v565 = vsub.s32 %v562, %v564
      %v566 = vrot.slane %v487, %v565
      %v568 = vunpack.c.l.s4 1966171168
      %v569 = vunpack.c.0.s8 %v568
      %v570 = vlaneseq
      %v571 = vshrl.u32 %v570, 7
      %v572 = vsub.s32 %v569, %v571
      %v573 = vrot.slane %v566, %v572
      %v575 = vunpack.c.l.s4 1966171168
      %v576 = vunpack.c.0.s8 %v575
      %v577 = vlaneseq
      %v578 = vshrl.u32 %v577, 7
      %v579 = vsub.s32 %v576, %v578
      %v580 = vrot.slane %v488, %v579
      %v582 = vunpack.c.l.s4 1966171168
      %v583 = vunpack.c.0.s8 %v582
      %v584 = vlaneseq
      %v585 = vshrl.u32 %v584, 7
      %v586 = vsub.s32 %v583, %v585
      %v587 = vrot.slane %v580, %v586
      %v589 = vunpack.c.l.s4 1966171168
      %v590 = vunpack.c.0.s8 %v589
      %v591 = vlaneseq
      %v592 = vshrl.u32 %v591, 7
      %v593 = vsub.s32 %v590, %v592
      %v594 = vrot.slane %v489, %v593
      %v596 = vunpack.c.l.s4 1966171168
      %v597 = vunpack.c.0.s8 %v596
      %v598 = vlaneseq
      %v599 = vshrl.u32 %v598, 7
      %v600 = vsub.s32 %v597, %v599
      %v601 = vrot.slane %v594, %v600
      %v603 = vunpack.c.l.s4 1966171168
      %v604 = vunpack.c.0.s8 %v603
      %v605 = vlaneseq
      %v606 = vshrl.u32 %v605, 7
      %v607 = vsub.s32 %v604, %v606
      %v608 = vrot.slane %v490, %v607
      %v610 = vunpack.c.l.s4 1966171168
      %v611 = vunpack.c.0.s8 %v610
      %v612 = vlaneseq
      %v613 = vshrl.u32 %v612, 7
      %v614 = vsub.s32 %v611, %v613
      %v615 = vrot.slane %v608, %v614
      %v616 = vunpack.c.l.b16 %v517
      %v617 = vunpack.c.l.b16 %v531
      %v618 = vunpack.c.l.b16 %v545
      %v619 = vunpack.c.l.b16 %v559
      %v620 = vunpack.c.l.b16 %v573
      %v621 = vunpack.c.l.b16 %v587
      %v622 = vunpack.c.l.b16 %v601
      %v623 = vunpack.c.l.b16 %v615
      %v624 = vrot.slane %v617, 7
      %v625 = vsel %vm337, %v624, %v616
      %v626 = vrot.slane %v618, 6
      %v627 = vsel %vm340, %v626, %v625
      %v628 = vrot.slane %v619, 5
      %v629 = vsel %vm343, %v628, %v627
      %v630 = vrot.slane %v620, 4
      %v631 = vsel %vm346, %v630, %v629
      %v632 = vrot.slane %v621, 3
      %v633 = vsel %vm349, %v632, %v631
      %v634 = vrot.slane %v622, 2
      %v635 = vsel %vm352, %v634, %v633
      %v636 = vrot.slane %v623, 1
      %v637 = vsel %vm355, %v636, %v635
      %v638 = vpack.c.b16 %v637, %v637
      %639 = vrot.lane.b32.xlu0 %v638, 120
      %v640 = vpop.permute.xlu0 %639
      %v642 = vsel %vm358, %v495, 0
      %v645 = vsel %vm358, %v640, 0
      %647 = vmatprep.subr.bf16.mxu0 0
      %648 = vmatpush1.bf16.xpose.msra.mxu0 %v645
      %649 = vmatprep.subr.bf16.mxu0 0
      %650 = vmatpush1.bf16.xpose.msra.mxu0 0
      %651 = vmatprep.subr.bf16.mxu0 0
      %652 = vmatpush1.bf16.xpose.msra.mxu0 0
      %653 = vmatprep.subr.bf16.mxu0 0
      %654 = vmatpush1.bf16.xpose.msra.mxu0 0
      %655 = vmatprep.subr.bf16.mxu0 0
      %656 = vmatpush1.bf16.xpose.msra.mxu0 0
      %657 = vmatprep.subr.bf16.mxu0 0
      %658 = vmatpush1.bf16.xpose.msra.mxu0 0
      %659 = vmatprep.subr.bf16.mxu0 0
      %660 = vmatpush1.bf16.xpose.msra.mxu0 0
      %661 = vmatprep.subr.bf16.mxu0 0
      %662 = vmatpush1.bf16.xpose.msra.mxu0 0
      %663 = vmatprep.subr.bf16.mxu0 0
      %664 = vmatpush1.bf16.xpose.msra.mxu0 0
      %665 = vmatprep.subr.bf16.mxu0 0
      %666 = vmatpush1.bf16.xpose.msra.mxu0 0
      %667 = vmatprep.subr.bf16.mxu0 0
      %668 = vmatpush1.bf16.xpose.msra.mxu0 0
      %669 = vmatprep.subr.bf16.mxu0 0
      %670 = vmatpush1.bf16.xpose.msra.mxu0 0
      %671 = vmatprep.subr.bf16.mxu0 0
      %672 = vmatpush1.bf16.xpose.msra.mxu0 0
      %673 = vmatprep.subr.bf16.mxu0 0
      %674 = vmatpush1.bf16.xpose.msra.mxu0 0
      %675 = vmatprep.subr.bf16.mxu0 0
      %676 = vmatpush1.bf16.xpose.msra.mxu0 0
      %677 = vmatprep.subr.bf16.mxu0 0
      %678 = vmatpush1.bf16.xpose.msra.mxu0 0
      %679 = vmatprep.mubr.bf16.mxu0 0
      %680 = vmatmul.mubr.bf16.gmra.mrb[0].mxu0 %v642
      %v681 = vpop.f32.mrb[0].mxu0
      %v682 = vadd.f32 0.0, %v681
      %v683 = vpop.f32.mrb[0].mxu0
      %v684 = vpop.f32.mrb[0].mxu0
      %v685 = vpop.f32.mrb[0].mxu0
      %686 = vdwg.mxu0
      %v687 = vsel %vm358, %v682, -inf
      %688 = vmax.xlane.f32.xlu0 %v687
      %v689 = vpop.xlane.xlu0 %688
      %v690 = vsub.f32 %v682, %v689
      %v691 = vmul.f32 %v690, 1.442695
      %v692 = vpow.pop %v691
      %v693 = vsel %vm358, %v692, 0.0
      %694 = vadd.xlane.f32.xlu0 %v693
      %v695 = vpop.xlane.xlu0 %694
      %v696 = vpack.c.bf16 %v692, %v692
      %v697 = vrot.slane %v616, 1
      %v698 = vsel %vm337, %v617, %v697
      %v699 = vrot.slane %v618, 7
      %v700 = vsel %vm340, %v699, %v698
      %v701 = vrot.slane %v619, 6
      %v702 = vsel %vm343, %v701, %v700
      %v703 = vrot.slane %v620, 5
      %v704 = vsel %vm346, %v703, %v702
      %v705 = vrot.slane %v621, 4
      %v706 = vsel %vm349, %v705, %v704
      %v707 = vrot.slane %v622, 3
      %v708 = vsel %vm352, %v707, %v706
      %v709 = vrot.slane %v623, 2
      %v710 = vsel %vm355, %v709, %v708
      %v711 = vpack.c.b16 %v710, %v710
      %712 = vrot.lane.b32.xlu0 %v711, 120
      %v713 = vpop.permute.xlu0 %712
      %v715 = vsel %vm358, %v696, 0
      %v718 = vsel %vm433, %v713, 0
      %720 = vmatprep.subr.bf16.mxu0 0
      %721 = vmatpush1.bf16.msra.mxu0 %v718
      %722 = vmatprep.subr.bf16.mxu0 0
      %723 = vmatpush1.bf16.msra.mxu0 0
      %724 = vmatprep.subr.bf16.mxu0 0
      %725 = vmatpush1.bf16.msra.mxu0 0
      %726 = vmatprep.subr.bf16.mxu0 0
      %727 = vmatpush1.bf16.msra.mxu0 0
      %728 = vmatprep.subr.bf16.mxu0 0
      %729 = vmatpush1.bf16.msra.mxu0 0
      %730 = vmatprep.subr.bf16.mxu0 0
      %731 = vmatpush1.bf16.msra.mxu0 0
      %732 = vmatprep.subr.bf16.mxu0 0
      %733 = vmatpush1.bf16.msra.mxu0 0
      %734 = vmatprep.subr.bf16.mxu0 0
      %735 = vmatpush1.bf16.msra.mxu0 0
      %736 = vmatprep.subr.bf16.mxu0 0
      %737 = vmatpush1.bf16.msra.mxu0 0
      %738 = vmatprep.subr.bf16.mxu0 0
      %739 = vmatpush1.bf16.msra.mxu0 0
      %740 = vmatprep.subr.bf16.mxu0 0
      %741 = vmatpush1.bf16.msra.mxu0 0
      %742 = vmatprep.subr.bf16.mxu0 0
      %743 = vmatpush1.bf16.msra.mxu0 0
      %744 = vmatprep.subr.bf16.mxu0 0
      %745 = vmatpush1.bf16.msra.mxu0 0
      %746 = vmatprep.subr.bf16.mxu0 0
      %747 = vmatpush1.bf16.msra.mxu0 0
      %748 = vmatprep.subr.bf16.mxu0 0
      %749 = vmatpush1.bf16.msra.mxu0 0
      %750 = vmatprep.subr.bf16.mxu0 0
      %751 = vmatpush1.bf16.msra.mxu0 0
      %752 = vmatprep.mubr.bf16.mxu0 0
      %753 = vmatmul.mubr.bf16.gmra.mrb[0].mxu0 %v715
      %v754 = vpop.f32.mrb[0].mxu0
      %v755 = vadd.f32 0.0, %v754
      %v756 = vpop.f32.mrb[0].mxu0
      %v757 = vpop.f32.mrb[0].mxu0
      %v758 = vpop.f32.mrb[0].mxu0
      %759 = vdwg.mxu0
      %v760 = vrcp.pop %v695
      %v761 = vmul.f32 %v755, %v760
      %v762 = vpack.c.bf16 %v761, %v761
      %v764 = vunpack.c.l.b16 %v762
      %v765 = vpack.c.b16 %v764, %v764
      %766 = vrot.lane.b32.xlu0 %v765, 8
      %v767 = vpop.permute.xlu0 %766
      %vm769 = vcmask 126016
      %770 = vst.msk [vmem:[%s197] sm:$0xf] %vm769, %v767
      %v771 = vld [vmem:[%s183] sm:$0xf]
      %v772 = vld [vmem:[%s190] sm:$0x1]
      %v773 = vld [vmem:[%s190 + $0x1] sm:$0x1]
      %v774 = vld [vmem:[%s190 + $0x2] sm:$0x1]
      %v775 = vld [vmem:[%s190 + $0x3] sm:$0x1]
      %v776 = vld [vmem:[%s190 + $0x4] sm:$0x1]
      %v777 = vld [vmem:[%s190 + $0x5] sm:$0x1]
      %v778 = vld [vmem:[%s190 + $0x6] sm:$0x1]
      %v779 = vld [vmem:[%s190 + $0x7] sm:$0x1]
      %v781 = vunpack.c.l.b16 %v771
      %v782 = vpack.c.b16 %v781, %v781
      %783 = vrot.lane.b32.xlu0 %v782, 112
      %v784 = vpop.permute.xlu0 %783
      %v794 = vunpack.c.l.s4 1966171168
      %v795 = vunpack.c.0.s8 %v794
      %v796 = vlaneseq
      %v797 = vshrl.u32 %v796, 7
      %v798 = vsub.s32 %v795, %v797
      %v799 = vrot.slane %v772, %v798
      %v801 = vunpack.c.l.s4 1966171168
      %v802 = vunpack.c.0.s8 %v801
      %v803 = vlaneseq
      %v804 = vshrl.u32 %v803, 7
      %v805 = vsub.s32 %v802, %v804
      %v806 = vrot.slane %v799, %v805
      %v808 = vunpack.c.l.s4 1966171168
      %v809 = vunpack.c.0.s8 %v808
      %v810 = vlaneseq
      %v811 = vshrl.u32 %v810, 7
      %v812 = vsub.s32 %v809, %v811
      %v813 = vrot.slane %v773, %v812
      %v815 = vunpack.c.l.s4 1966171168
      %v816 = vunpack.c.0.s8 %v815
      %v817 = vlaneseq
      %v818 = vshrl.u32 %v817, 7
      %v819 = vsub.s32 %v816, %v818
      %v820 = vrot.slane %v813, %v819
      %v822 = vunpack.c.l.s4 1966171168
      %v823 = vunpack.c.0.s8 %v822
      %v824 = vlaneseq
      %v825 = vshrl.u32 %v824, 7
      %v826 = vsub.s32 %v823, %v825
      %v827 = vrot.slane %v774, %v826
      %v829 = vunpack.c.l.s4 1966171168
      %v830 = vunpack.c.0.s8 %v829
      %v831 = vlaneseq
      %v832 = vshrl.u32 %v831, 7
      %v833 = vsub.s32 %v830, %v832
      %v834 = vrot.slane %v827, %v833
      %v836 = vunpack.c.l.s4 1966171168
      %v837 = vunpack.c.0.s8 %v836
      %v838 = vlaneseq
      %v839 = vshrl.u32 %v838, 7
      %v840 = vsub.s32 %v837, %v839
      %v841 = vrot.slane %v775, %v840
      %v843 = vunpack.c.l.s4 1966171168
      %v844 = vunpack.c.0.s8 %v843
      %v845 = vlaneseq
      %v846 = vshrl.u32 %v845, 7
      %v847 = vsub.s32 %v844, %v846
      %v848 = vrot.slane %v841, %v847
      %v850 = vunpack.c.l.s4 1966171168
      %v851 = vunpack.c.0.s8 %v850
      %v852 = vlaneseq
      %v853 = vshrl.u32 %v852, 7
      %v854 = vsub.s32 %v851, %v853
      %v855 = vrot.slane %v776, %v854
      %v857 = vunpack.c.l.s4 1966171168
      %v858 = vunpack.c.0.s8 %v857
      %v859 = vlaneseq
      %v860 = vshrl.u32 %v859, 7
      %v861 = vsub.s32 %v858, %v860
      %v862 = vrot.slane %v855, %v861
      %v864 = vunpack.c.l.s4 1966171168
      %v865 = vunpack.c.0.s8 %v864
      %v866 = vlaneseq
      %v867 = vshrl.u32 %v866, 7
      %v868 = vsub.s32 %v865, %v867
      %v869 = vrot.slane %v777, %v868
      %v871 = vunpack.c.l.s4 1966171168
      %v872 = vunpack.c.0.s8 %v871
      %v873 = vlaneseq
      %v874 = vshrl.u32 %v873, 7
      %v875 = vsub.s32 %v872, %v874
      %v876 = vrot.slane %v869, %v875
      %v878 = vunpack.c.l.s4 1966171168
      %v879 = vunpack.c.0.s8 %v878
      %v880 = vlaneseq
      %v881 = vshrl.u32 %v880, 7
      %v882 = vsub.s32 %v879, %v881
      %v883 = vrot.slane %v778, %v882
      %v885 = vunpack.c.l.s4 1966171168
      %v886 = vunpack.c.0.s8 %v885
      %v887 = vlaneseq
      %v888 = vshrl.u32 %v887, 7
      %v889 = vsub.s32 %v886, %v888
      %v890 = vrot.slane %v883, %v889
      %v892 = vunpack.c.l.s4 1966171168
      %v893 = vunpack.c.0.s8 %v892
      %v894 = vlaneseq
      %v895 = vshrl.u32 %v894, 7
      %v896 = vsub.s32 %v893, %v895
      %v897 = vrot.slane %v779, %v896
      %v899 = vunpack.c.l.s4 1966171168
      %v900 = vunpack.c.0.s8 %v899
      %v901 = vlaneseq
      %v902 = vshrl.u32 %v901, 7
      %v903 = vsub.s32 %v900, %v902
      %v904 = vrot.slane %v897, %v903
      %v905 = vunpack.c.l.b16 %v806
      %v906 = vunpack.c.l.b16 %v820
      %v907 = vunpack.c.l.b16 %v834
      %v908 = vunpack.c.l.b16 %v848
      %v909 = vunpack.c.l.b16 %v862
      %v910 = vunpack.c.l.b16 %v876
      %v911 = vunpack.c.l.b16 %v890
      %v912 = vunpack.c.l.b16 %v904
      %v913 = vrot.slane %v906, 7
      %v914 = vsel %vm337, %v913, %v905
      %v915 = vrot.slane %v907, 6
      %v916 = vsel %vm340, %v915, %v914
      %v917 = vrot.slane %v908, 5
      %v918 = vsel %vm343, %v917, %v916
      %v919 = vrot.slane %v909, 4
      %v920 = vsel %vm346, %v919, %v918
      %v921 = vrot.slane %v910, 3
      %v922 = vsel %vm349, %v921, %v920
      %v923 = vrot.slane %v911, 2
      %v924 = vsel %vm352, %v923, %v922
      %v925 = vrot.slane %v912, 1
      %v926 = vsel %vm355, %v925, %v924
      %v927 = vpack.c.b16 %v926, %v926
      %928 = vrot.lane.b32.xlu0 %v927, 112
      %v929 = vpop.permute.xlu0 %928
      %v931 = vsel %vm358, %v784, 0
      %v934 = vsel %vm358, %v929, 0
      %936 = vmatprep.subr.bf16.mxu0 0
      %937 = vmatpush1.bf16.xpose.msra.mxu0 %v934
      %938 = vmatprep.subr.bf16.mxu0 0
      %939 = vmatpush1.bf16.xpose.msra.mxu0 0
      %940 = vmatprep.subr.bf16.mxu0 0
      %941 = vmatpush1.bf16.xpose.msra.mxu0 0
      %942 = vmatprep.subr.bf16.mxu0 0
      %943 = vmatpush1.bf16.xpose.msra.mxu0 0
      %944 = vmatprep.subr.bf16.mxu0 0
      %945 = vmatpush1.bf16.xpose.msra.mxu0 0
      %946 = vmatprep.subr.bf16.mxu0 0
      %947 = vmatpush1.bf16.xpose.msra.mxu0 0
      %948 = vmatprep.subr.bf16.mxu0 0
      %949 = vmatpush1.bf16.xpose.msra.mxu0 0
      %950 = vmatprep.subr.bf16.mxu0 0
      %951 = vmatpush1.bf16.xpose.msra.mxu0 0
      %952 = vmatprep.subr.bf16.mxu0 0
      %953 = vmatpush1.bf16.xpose.msra.mxu0 0
      %954 = vmatprep.subr.bf16.mxu0 0
      %955 = vmatpush1.bf16.xpose.msra.mxu0 0
      %956 = vmatprep.subr.bf16.mxu0 0
      %957 = vmatpush1.bf16.xpose.msra.mxu0 0
      %958 = vmatprep.subr.bf16.mxu0 0
      %959 = vmatpush1.bf16.xpose.msra.mxu0 0
      %960 = vmatprep.subr.bf16.mxu0 0
      %961 = vmatpush1.bf16.xpose.msra.mxu0 0
      %962 = vmatprep.subr.bf16.mxu0 0
      %963 = vmatpush1.bf16.xpose.msra.mxu0 0
      %964 = vmatprep.subr.bf16.mxu0 0
      %965 = vmatpush1.bf16.xpose.msra.mxu0 0
      %966 = vmatprep.subr.bf16.mxu0 0
      %967 = vmatpush1.bf16.xpose.msra.mxu0 0
      %968 = vmatprep.mubr.bf16.mxu0 0
      %969 = vmatmul.mubr.bf16.gmra.mrb[0].mxu0 %v931
      %v970 = vpop.f32.mrb[0].mxu0
      %v971 = vadd.f32 0.0, %v970
      %v972 = vpop.f32.mrb[0].mxu0
      %v973 = vpop.f32.mrb[0].mxu0
      %v974 = vpop.f32.mrb[0].mxu0
      %975 = vdwg.mxu0
      %v976 = vsel %vm358, %v971, -inf
      %977 = vmax.xlane.f32.xlu0 %v976
      %v978 = vpop.xlane.xlu0 %977
      %v979 = vsub.f32 %v971, %v978
      %v980 = vmul.f32 %v979, 1.442695
      %v981 = vpow.pop %v980
      %v982 = vsel %vm358, %v981, 0.0
      %983 = vadd.xlane.f32.xlu0 %v982
      %v984 = vpop.xlane.xlu0 %983
      %v985 = vpack.c.bf16 %v981, %v981
      %v986 = vrot.slane %v905, 1
      %v987 = vsel %vm337, %v906, %v986
      %v988 = vrot.slane %v907, 7
      %v989 = vsel %vm340, %v988, %v987
      %v990 = vrot.slane %v908, 6
      %v991 = vsel %vm343, %v990, %v989
      %v992 = vrot.slane %v909, 5
      %v993 = vsel %vm346, %v992, %v991
      %v994 = vrot.slane %v910, 4
      %v995 = vsel %vm349, %v994, %v993
      %v996 = vrot.slane %v911, 3
      %v997 = vsel %vm352, %v996, %v995
      %v998 = vrot.slane %v912, 2
      %v999 = vsel %vm355, %v998, %v997
      %v1000 = vpack.c.b16 %v999, %v999
      %1001 = vrot.lane.b32.xlu0 %v1000, 112
      %v1002 = vpop.permute.xlu0 %1001
      %v1004 = vsel %vm358, %v985, 0
      %v1007 = vsel %vm433, %v1002, 0
      %1009 = vmatprep.subr.bf16.mxu0 0
      %1010 = vmatpush1.bf16.msra.mxu0 %v1007
      %1011 = vmatprep.subr.bf16.mxu0 0
      %1012 = vmatpush1.bf16.msra.mxu0 0
      %1013 = vmatprep.subr.bf16.mxu0 0
      %1014 = vmatpush1.bf16.msra.mxu0 0
      %1015 = vmatprep.subr.bf16.mxu0 0
      %1016 = vmatpush1.bf16.msra.mxu0 0
      %1017 = vmatprep.subr.bf16.mxu0 0
      %1018 = vmatpush1.bf16.msra.mxu0 0
      %1019 = vmatprep.subr.bf16.mxu0 0
      %1020 = vmatpush1.bf16.msra.mxu0 0
      %1021 = vmatprep.subr.bf16.mxu0 0
      %1022 = vmatpush1.bf16.msra.mxu0 0
      %1023 = vmatprep.subr.bf16.mxu0 0
      %1024 = vmatpush1.bf16.msra.mxu0 0
      %1025 = vmatprep.subr.bf16.mxu0 0
      %1026 = vmatpush1.bf16.msra.mxu0 0
      %1027 = vmatprep.subr.bf16.mxu0 0
      %1028 = vmatpush1.bf16.msra.mxu0 0
      %1029 = vmatprep.subr.bf16.mxu0 0
      %1030 = vmatpush1.bf16.msra.mxu0 0
      %1031 = vmatprep.subr.bf16.mxu0 0
      %1032 = vmatpush1.bf16.msra.mxu0 0
      %1033 = vmatprep.subr.bf16.mxu0 0
      %1034 = vmatpush1.bf16.msra.mxu0 0
      %1035 = vmatprep.subr.bf16.mxu0 0
      %1036 = vmatpush1.bf16.msra.mxu0 0
      %1037 = vmatprep.subr.bf16.mxu0 0
      %1038 = vmatpush1.bf16.msra.mxu0 0
      %1039 = vmatprep.subr.bf16.mxu0 0
      %1040 = vmatpush1.bf16.msra.mxu0 0
      %1041 = vmatprep.mubr.bf16.mxu0 0
      %1042 = vmatmul.mubr.bf16.gmra.mrb[0].mxu0 %v1004
      %v1043 = vpop.f32.mrb[0].mxu0
      %v1044 = vadd.f32 0.0, %v1043
      %v1045 = vpop.f32.mrb[0].mxu0
      %v1046 = vpop.f32.mrb[0].mxu0
      %v1047 = vpop.f32.mrb[0].mxu0
      %1048 = vdwg.mxu0
      %v1049 = vrcp.pop %v984
      %v1050 = vmul.f32 %v1044, %v1049
      %v1051 = vpack.c.bf16 %v1050, %v1050
      %v1053 = vunpack.c.l.b16 %v1051
      %v1054 = vpack.c.b16 %v1053, %v1053
      %1055 = vrot.lane.b32.xlu0 %v1054, 16
      %v1056 = vpop.permute.xlu0 %1055
      %vm1058 = vcmask 191616
      %1059 = vst.msk [vmem:[%s197] sm:$0xf] %vm1058, %v1056
      %v1060 = vld [vmem:[%s183] sm:$0xf]
      %v1061 = vld [vmem:[%s190] sm:$0x1]
      %v1062 = vld [vmem:[%s190 + $0x1] sm:$0x1]
      %v1063 = vld [vmem:[%s190 + $0x2] sm:$0x1]
      %v1064 = vld [vmem:[%s190 + $0x3] sm:$0x1]
      %v1065 = vld [vmem:[%s190 + $0x4] sm:$0x1]
      %v1066 = vld [vmem:[%s190 + $0x5] sm:$0x1]
      %v1067 = vld [vmem:[%s190 + $0x6] sm:$0x1]
      %v1068 = vld [vmem:[%s190 + $0x7] sm:$0x1]
      %v1070 = vunpack.c.l.b16 %v1060
      %v1071 = vpack.c.b16 %v1070, %v1070
      %1072 = vrot.lane.b32.xlu0 %v1071, 104
      %v1073 = vpop.permute.xlu0 %1072
      %v1083 = vunpack.c.l.s4 1966171168
      %v1084 = vunpack.c.0.s8 %v1083
      %v1085 = vlaneseq
      %v1086 = vshrl.u32 %v1085, 7
      %v1087 = vsub.s32 %v1084, %v1086
      %v1088 = vrot.slane %v1061, %v1087
      %v1090 = vunpack.c.l.s4 1966171168
      %v1091 = vunpack.c.0.s8 %v1090
      %v1092 = vlaneseq
      %v1093 = vshrl.u32 %v1092, 7
      %v1094 = vsub.s32 %v1091, %v1093
      %v1095 = vrot.slane %v1088, %v1094
      %v1097 = vunpack.c.l.s4 1966171168
      %v1098 = vunpack.c.0.s8 %v1097
      %v1099 = vlaneseq
      %v1100 = vshrl.u32 %v1099, 7
      %v1101 = vsub.s32 %v1098, %v1100
      %v1102 = vrot.slane %v1062, %v1101
      %v1104 = vunpack.c.l.s4 1966171168
      %v1105 = vunpack.c.0.s8 %v1104
      %v1106 = vlaneseq
      %v1107 = vshrl.u32 %v1106, 7
      %v1108 = vsub.s32 %v1105, %v1107
      %v1109 = vrot.slane %v1102, %v1108
      %v1111 = vunpack.c.l.s4 1966171168
      %v1112 = vunpack.c.0.s8 %v1111
      %v1113 = vlaneseq
      %v1114 = vshrl.u32 %v1113, 7
      %v1115 = vsub.s32 %v1112, %v1114
      %v1116 = vrot.slane %v1063, %v1115
      %v1118 = vunpack.c.l.s4 1966171168
      %v1119 = vunpack.c.0.s8 %v1118
      %v1120 = vlaneseq
      %v1121 = vshrl.u32 %v1120, 7
      %v1122 = vsub.s32 %v1119, %v1121
      %v1123 = vrot.slane %v1116, %v1122
      %v1125 = vunpack.c.l.s4 1966171168
      %v1126 = vunpack.c.0.s8 %v1125
      %v1127 = vlaneseq
      %v1128 = vshrl.u32 %v1127, 7
      %v1129 = vsub.s32 %v1126, %v1128
      %v1130 = vrot.slane %v1064, %v1129
      %v1132 = vunpack.c.l.s4 1966171168
      %v1133 = vunpack.c.0.s8 %v1132
      %v1134 = vlaneseq
      %v1135 = vshrl.u32 %v1134, 7
      %v1136 = vsub.s32 %v1133, %v1135
      %v1137 = vrot.slane %v1130, %v1136
      %v1139 = vunpack.c.l.s4 1966171168
      %v1140 = vunpack.c.0.s8 %v1139
      %v1141 = vlaneseq
      %v1142 = vshrl.u32 %v1141, 7
      %v1143 = vsub.s32 %v1140, %v1142
      %v1144 = vrot.slane %v1065, %v1143
      %v1146 = vunpack.c.l.s4 1966171168
      %v1147 = vunpack.c.0.s8 %v1146
      %v1148 = vlaneseq
      %v1149 = vshrl.u32 %v1148, 7
      %v1150 = vsub.s32 %v1147, %v1149
      %v1151 = vrot.slane %v1144, %v1150
      %v1153 = vunpack.c.l.s4 1966171168
      %v1154 = vunpack.c.0.s8 %v1153
      %v1155 = vlaneseq
      %v1156 = vshrl.u32 %v1155, 7
      %v1157 = vsub.s32 %v1154, %v1156
      %v1158 = vrot.slane %v1066, %v1157
      %v1160 = vunpack.c.l.s4 1966171168
      %v1161 = vunpack.c.0.s8 %v1160
      %v1162 = vlaneseq
      %v1163 = vshrl.u32 %v1162, 7
      %v1164 = vsub.s32 %v1161, %v1163
      %v1165 = vrot.slane %v1158, %v1164
      %v1167 = vunpack.c.l.s4 1966171168
      %v1168 = vunpack.c.0.s8 %v1167
      %v1169 = vlaneseq
      %v1170 = vshrl.u32 %v1169, 7
      %v1171 = vsub.s32 %v1168, %v1170
      %v1172 = vrot.slane %v1067, %v1171
      %v1174 = vunpack.c.l.s4 1966171168
      %v1175 = vunpack.c.0.s8 %v1174
      %v1176 = vlaneseq
      %v1177 = vshrl.u32 %v1176, 7
      %v1178 = vsub.s32 %v1175, %v1177
      %v1179 = vrot.slane %v1172, %v1178
      %v1181 = vunpack.c.l.s4 1966171168
      %v1182 = vunpack.c.0.s8 %v1181
      %v1183 = vlaneseq
      %v1184 = vshrl.u32 %v1183, 7
      %v1185 = vsub.s32 %v1182, %v1184
      %v1186 = vrot.slane %v1068, %v1185
      %v1188 = vunpack.c.l.s4 1966171168
      %v1189 = vunpack.c.0.s8 %v1188
      %v1190 = vlaneseq
      %v1191 = vshrl.u32 %v1190, 7
      %v1192 = vsub.s32 %v1189, %v1191
      %v1193 = vrot.slane %v1186, %v1192
      %v1194 = vunpack.c.l.b16 %v1095
      %v1195 = vunpack.c.l.b16 %v1109
      %v1196 = vunpack.c.l.b16 %v1123
      %v1197 = vunpack.c.l.b16 %v1137
      %v1198 = vunpack.c.l.b16 %v1151
      %v1199 = vunpack.c.l.b16 %v1165
      %v1200 = vunpack.c.l.b16 %v1179
      %v1201 = vunpack.c.l.b16 %v1193
      %v1202 = vrot.slane %v1195, 7
      %v1203 = vsel %vm337, %v1202, %v1194
      %v1204 = vrot.slane %v1196, 6
      %v1205 = vsel %vm340, %v1204, %v1203
      %v1206 = vrot.slane %v1197, 5
      %v1207 = vsel %vm343, %v1206, %v1205
      %v1208 = vrot.slane %v1198, 4
      %v1209 = vsel %vm346, %v1208, %v1207
      %v1210 = vrot.slane %v1199, 3
      %v1211 = vsel %vm349, %v1210, %v1209
      %v1212 = vrot.slane %v1200, 2
      %v1213 = vsel %vm352, %v1212, %v1211
      %v1214 = vrot.slane %v1201, 1
      %v1215 = vsel %vm355, %v1214, %v1213
      %v1216 = vpack.c.b16 %v1215, %v1215
      %1217 = vrot.lane.b32.xlu0 %v1216, 104
      %v1218 = vpop.permute.xlu0 %1217
      %v1220 = vsel %vm358, %v1073, 0
      %v1223 = vsel %vm358, %v1218, 0
      %1225 = vmatprep.subr.bf16.mxu0 0
      %1226 = vmatpush1.bf16.xpose.msra.mxu0 %v1223
      %1227 = vmatprep.subr.bf16.mxu0 0
      %1228 = vmatpush1.bf16.xpose.msra.mxu0 0
      %1229 = vmatprep.subr.bf16.mxu0 0
      %1230 = vmatpush1.bf16.xpose.msra.mxu0 0
      %1231 = vmatprep.subr.bf16.mxu0 0
      %1232 = vmatpush1.bf16.xpose.msra.mxu0 0
      %1233 = vmatprep.subr.bf16.mxu0 0
      %1234 = vmatpush1.bf16.xpose.msra.mxu0 0
      %1235 = vmatprep.subr.bf16.mxu0 0
      %1236 = vmatpush1.bf16.xpose.msra.mxu0 0
      %1237 = vmatprep.subr.bf16.mxu0 0
      %1238 = vmatpush1.bf16.xpose.msra.mxu0 0
      %1239 = vmatprep.subr.bf16.mxu0 0
      %1240 = vmatpush1.bf16.xpose.msra.mxu0 0
      %1241 = vmatprep.subr.bf16.mxu0 0
      %1242 = vmatpush1.bf16.xpose.msra.mxu0 0
      %1243 = vmatprep.subr.bf16.mxu0 0
      %1244 = vmatpush1.bf16.xpose.msra.mxu0 0
      %1245 = vmatprep.subr.bf16.mxu0 0
      %1246 = vmatpush1.bf16.xpose.msra.mxu0 0
      %1247 = vmatprep.subr.bf16.mxu0 0
      %1248 = vmatpush1.bf16.xpose.msra.mxu0 0
      %1249 = vmatprep.subr.bf16.mxu0 0
      %1250 = vmatpush1.bf16.xpose.msra.mxu0 0
      %1251 = vmatprep.subr.bf16.mxu0 0
      %1252 = vmatpush1.bf16.xpose.msra.mxu0 0
      %1253 = vmatprep.subr.bf16.mxu0 0
      %1254 = vmatpush1.bf16.xpose.msra.mxu0 0
      %1255 = vmatprep.subr.bf16.mxu0 0
      %1256 = vmatpush1.bf16.xpose.msra.mxu0 0
      %1257 = vmatprep.mubr.bf16.mxu0 0
      %1258 = vmatmul.mubr.bf16.gmra.mrb[0].mxu0 %v1220
      %v1259 = vpop.f32.mrb[0].mxu0
      %v1260 = vadd.f32 0.0, %v1259
      %v1261 = vpop.f32.mrb[0].mxu0
      %v1262 = vpop.f32.mrb[0].mxu0
      %v1263 = vpop.f32.mrb[0].mxu0
      %1264 = vdwg.mxu0
      %v1265 = vsel %vm358, %v1260, -inf
      %1266 = vmax.xlane.f32.xlu0 %v1265
      %v1267 = vpop.xlane.xlu0 %1266
      %v1268 = vsub.f32 %v1260, %v1267
      %v1269 = vmul.f32 %v1268, 1.442695
      %v1270 = vpow.pop %v1269
      %v1271 = vsel %vm358, %v1270, 0.0
      %1272 = vadd.xlane.f32.xlu0 %v1271
      %v1273 = vpop.xlane.xlu0 %1272
      %v1274 = vpack.c.bf16 %v1270, %v1270
      %v1275 = vrot.slane %v1194, 1
      %v1276 = vsel %vm337, %v1195, %v1275
      %v1277 = vrot.slane %v1196, 7
      %v1278 = vsel %vm340, %v1277, %v1276
      %v1279 = vrot.slane %v1197, 6
      %v1280 = vsel %vm343, %v1279, %v1278
      %v1281 = vrot.slane %v1198, 5
      %v1282 = vsel %vm346, %v1281, %v1280
      %v1283 = vrot.slane %v1199, 4
      %v1284 = vsel %vm349, %v1283, %v1282
      %v1285 = vrot.slane %v1200, 3
      %v1286 = vsel %vm352, %v1285, %v1284
      %v1287 = vrot.slane %v1201, 2
      %v1288 = vsel %vm355, %v1287, %v1286
      %v1289 = vpack.c.b16 %v1288, %v1288
      %1290 = vrot.lane.b32.xlu0 %v1289, 104
      %v1291 = vpop.permute.xlu0 %1290
      %v1293 = vsel %vm358, %v1274, 0
      %v1296 = vsel %vm433, %v1291, 0
      %1298 = vmatprep.subr.bf16.mxu0 0
      %1299 = vmatpush1.bf16.msra.mxu0 %v1296
      %1300 = vmatprep.subr.bf16.mxu0 0
      %1301 = vmatpush1.bf16.msra.mxu0 0
      %1302 = vmatprep.subr.bf16.mxu0 0
      %1303 = vmatpush1.bf16.msra.mxu0 0
      %1304 = vmatprep.subr.bf16.mxu0 0
      %1305 = vmatpush1.bf16.msra.mxu0 0
      %1306 = vmatprep.subr.bf16.mxu0 0
      %1307 = vmatpush1.bf16.msra.mxu0 0
      %1308 = vmatprep.subr.bf16.mxu0 0
      %1309 = vmatpush1.bf16.msra.mxu0 0
      %1310 = vmatprep.subr.bf16.mxu0 0
      %1311 = vmatpush1.bf16.msra.mxu0 0
      %1312 = vmatprep.subr.bf16.mxu0 0
      %1313 = vmatpush1.bf16.msra.mxu0 0
      %1314 = vmatprep.subr.bf16.mxu0 0
      %1315 = vmatpush1.bf16.msra.mxu0 0
      %1316 = vmatprep.subr.bf16.mxu0 0
      %1317 = vmatpush1.bf16.msra.mxu0 0
      %1318 = vmatprep.subr.bf16.mxu0 0
      %1319 = vmatpush1.bf16.msra.mxu0 0
      %1320 = vmatprep.subr.bf16.mxu0 0
      %1321 = vmatpush1.bf16.msra.mxu0 0
      %1322 = vmatprep.subr.bf16.mxu0 0
      %1323 = vmatpush1.bf16.msra.mxu0 0
      %1324 = vmatprep.subr.bf16.mxu0 0
      %1325 = vmatpush1.bf16.msra.mxu0 0
      %1326 = vmatprep.subr.bf16.mxu0 0
      %1327 = vmatpush1.bf16.msra.mxu0 0
      %1328 = vmatprep.subr.bf16.mxu0 0
      %1329 = vmatpush1.bf16.msra.mxu0 0
      %1330 = vmatprep.mubr.bf16.mxu0 0
      %1331 = vmatmul.mubr.bf16.gmra.mrb[0].mxu0 %v1293
      %v1332 = vpop.f32.mrb[0].mxu0
      %v1333 = vadd.f32 0.0, %v1332
      %v1334 = vpop.f32.mrb[0].mxu0
      %v1335 = vpop.f32.mrb[0].mxu0
      %v1336 = vpop.f32.mrb[0].mxu0
      %1337 = vdwg.mxu0
      %v1338 = vrcp.pop %v1273
      %v1339 = vmul.f32 %v1333, %v1338
      %v1340 = vpack.c.bf16 %v1339, %v1339
      %v1342 = vunpack.c.l.b16 %v1340
      %v1343 = vpack.c.b16 %v1342, %v1342
      %1344 = vrot.lane.b32.xlu0 %v1343, 24
      %v1345 = vpop.permute.xlu0 %1344
      %vm1347 = vcmask 257216
      %1348 = vst.msk [vmem:[%s197] sm:$0xf] %vm1347, %v1345
      %p1349 = scmp.lt.s32.totalorder %s17, 1
      %s1350 = scalar_select %p1349, %s17, 1
      %p1351 = scmp.lt.s32.totalorder %s18, 0
      %s1352 = scalar_select %p1351, %s18, 0
      %s1353 = sadd.s32 %s1352, %s1350
      %s1354 = smul.addr %s1353, 4
      %s1355 = scalar_lea.vmem %s2, %s1354
      // Predicated region
      $region29: #{decoder_forward.24} parent=27 // pred_check
        %p1356 = pneg %p101
      $region30: #{decoder_forward.24} parent=27 // pred_check_branch
        %1358 = sbr.rel (%p1356) target = $region32
      $region31: #{decoder_forward.24} parent=27 // pred_region
        _
      $region32: #{decoder_forward.24} parent=27 // pred_fallthru
        _
    $region28: #{decoder_forward.24} parent=5 // pred_fallthru
      _
    %p1359 = scmp.le.s32.totalorder 2, %s8
    // Predicated region
    $region33: #{decoder_forward.24} parent=5 // pred_check
      %p1360 = pneg %p1359
    $region34: #{decoder_forward.24} parent=5 // pred_check_branch
      %1362 = sbr.rel (%p1360) target = $region36
    $region35: #{decoder_forward.24} parent=5 // pred_region
      %s1363 = ssub.s32 %s8, 2
      // Predicated region
      $region37: #{decoder_forward.24} parent=35 // pred_check
        %p1364 = pneg %p107
      $region38: #{decoder_forward.24} parent=35 // pred_check_branch
        %1366 = sbr.rel (%p1364) target = $region40
      $region39: #{decoder_forward.24} parent=35 // pred_region
        %p1367 = scmp.lt.s32.totalorder %s19, 1
        %s1368 = scalar_select %p1367, %s19, 1
        %p1369 = scmp.lt.s32.totalorder %s20, 0
        %s1370 = scalar_select %p1369, %s20, 0
        %s1371 = sadd.s32 %s1370, %s1368
        %s1372 = smul.addr %s1371, 4
        %s1373 = scalar_lea.vmem %s2, %s1372
      $region40: #{decoder_forward.24} parent=35 // pred_fallthru
        _
    $region36: #{decoder_forward.24} parent=5 // pred_fallthru
      _
  $region6: #{decoder_forward.24} parent=0 // loop_footer
    %s12 = sadd.s32 1, %s8
  $region7: #{decoder_forward.24} parent=0 // loop_footer_branch
    %7 = sbr.rel target = $region3
  $region8: #{decoder_forward.24} parent=0 // loop_exit
    _

</llo_original>
